<compile_context>
chip_gen: v6e
topology: v6e:2x2x1
jax: 0.10.0
libtpu: 0.0.40
codegen_flags: <defaults>
</compile_context>

<pallas_src>
import jax
import jax.numpy as jnp
from jax.experimental import pallas as pl
from jax.experimental.pallas import tpu as pltpu

RNN_DIM = 32          # hidden size H
CNN_KS = 5
CNN_STRIDE = 3
LANE = 128            # TPU lane width; each GRU gate block starts on a 128-lane boundary
GATES = 3             # r | z | n (PyTorch GRU gate order)
UNROLL_T_MAX = 32     # fully unroll the time loop for T <= this


# ----------------------------------------------------------------------------
# Fused forward kernel (built per static (T, B, BP))
# ----------------------------------------------------------------------------
def _build_kernel(T, B, BP):
    H, P, GP = RNN_DIM, LANE, GATES * LANE
    f32 = jnp.float32

    def kernel(patches_ref,
               w0f_ref, w0b_ref, b0f_ref, b0b_ref,
               whh0f_ref, whh0b_ref, bhn0f_ref, bhn0b_ref,
               w1f_ref, w1b_ref, b1f_ref, b1b_ref,
               whh1f_ref, whh1b_ref, bhn1f_ref, bhn1b_ref,
               woutf_ref, woutb_ref, bout_ref,
               o_ref, gi_scr, out0f_scr, out0b_scr):

        # ---- Layer-0 input projection, conv folded in (cnn_act_func is None) -------------
        p = patches_ref[...]                                               # (T*BP, Cin*ks)
        gi_scr[:, 0:GP] = (jnp.dot(p, w0f_ref[...], preferred_element_type=f32)
                           + b0f_ref[...])
        gi_scr[:, GP:2 * GP] = (jnp.dot(p, w0b_ref[...], preferred_element_type=f32)
                                + b0b_ref[...])

        # Zero layer-0 output scratch once (padding rows stay well-defined, off critical path).
        out0f_scr[...] = jnp.zeros_like(out0f_scr)
        out0b_scr[...] = jnp.zeros_like(out0b_scr)

        def gru_update(gi, gh, bhn_b, h):
            # gi/gh: (B, 3*LANE) with gate g valid at lanes [g*LANE, g*LANE + H); h: (B, H).
            r = jax.nn.sigmoid(gi[:, 0:H] + gh[:, 0:H])
            z = jax.nn.sigmoid(gi[:, P:P + H] + gh[:, P:P + H])
            n = jnp.tanh(gi[:, 2 * P:2 * P + H] + r * (gh[:, 2 * P:2 * P + H] + bhn_b))
            return (1.0 - z) * n + z * h

        def make_step(whh_f, whh_b, bhn_f, bhn_b, write_out):
            def step(t, carry):
                h_f, h_b = carry
                if isinstance(t, int):               # fully-unrolled path: static offsets
                    rf = t * BP
                    rb = (T - 1 - t) * BP
                else:                                # rolled path: hint 8-aligned starts
                    rf = pl.multiple_of(t * BP, BP)
                    rb = pl.multiple_of((T - 1 - t) * BP, BP)
                gi_f = gi_scr[pl.ds(rf, B), 0:GP]
                gi_b = gi_scr[pl.ds(rb, B), GP:2 * GP]
                # Two dense per-direction recurrent dots; K = H = 32 (no padded rows).
                gh_f = jnp.dot(h_f, whh_f, preferred_element_type=f32)
                gh_b = jnp.dot(h_b, whh_b, preferred_element_type=f32)
                h_f = gru_update(gi_f, gh_f, bhn_f, h_f)
                h_b = gru_update(gi_b, gh_b, bhn_b, h_b)
                if write_out:
                    out0f_scr[pl.ds(rf, B), :] = h_f
                    out0b_scr[pl.ds(rb, B), :] = h_b
                return (h_f, h_b)
            return step

        def run_layer(whhf_ref, whhb_ref, bhnf_ref, bhnb_ref, write_out):
            # Hoist loop-invariant weights and the n-gate bias broadcast out of the time loop.
            whh_f = whhf_ref[...]
            whh_b = whhb_ref[...]
            bhn_f = jnp.broadcast_to(bhnf_ref[...], (B, H))
            bhn_b = jnp.broadcast_to(bhnb_ref[...], (B, H))
            step = make_step(whh_f, whh_b, bhn_f, bhn_b, write_out)
            h0 = (jnp.zeros((B, H), f32), jnp.zeros((B, H), f32))
            if T <= UNROLL_T_MAX:
                carry = h0
                for t in range(T):
                    carry = step(t, carry)
                return carry
            return jax.lax.fori_loop(0, T, step, h0, unroll=2)

        # ---- biGRU layer 0 (writes per-time outputs) --------------------------------------
        run_layer(whh0f_ref, whh0b_ref, bhn0f_ref, bhn0b_ref, True)

        # ---- Layer-1 input projection: split dots over [out_fwd || out_bwd] ---------------
        of = out0f_scr[...]                                                # (T*BP, H)
        ob = out0b_scr[...]                                                # (T*BP, H)
        gi_scr[:, 0:GP] = (jnp.dot(of, w1f_ref[0:H, :], preferred_element_type=f32)
                           + jnp.dot(ob, w1f_ref[H:2 * H, :], preferred_element_type=f32)
                           + b1f_ref[...])
        gi_scr[:, GP:2 * GP] = (jnp.dot(of, w1b_ref[0:H, :], preferred_element_type=f32)
                                + jnp.dot(ob, w1b_ref[H:2 * H, :], preferred_element_type=f32)
                                + b1b_ref[...])

        # ---- biGRU layer 1 (only final hidden states needed) ------------------------------
        h_f1, h_b1 = run_layer(whh1f_ref, whh1b_ref, bhn1f_ref, bhn1b_ref, False)

        # ---- Final linear on [h_fwd || h_bwd] (two dots, no lane concat) ------------------
        o_ref[...] = (jnp.dot(h_f1, woutf_ref[...], preferred_element_type=f32)
                      + jnp.dot(h_b1, woutb_ref[...], preferred_element_type=f32)
                      + bout_ref[...])

    return kernel


# ----------------------------------------------------------------------------
# Forward wrapper (one pallas_call; only the tiny im2col gather stays in XLA)
# ----------------------------------------------------------------------------
def torch_rnn_model_forward(x, prepped):
    """x: (B, n_input, L) -> (B, n_class). `prepped` comes from prepare_params()."""
    B, Cin, L = x.shape
    T = (L - CNN_KS) // CNN_STRIDE + 1
    BP = ((B + 7) // 8) * 8                 # per-timestep row count padded to sublane tile
    K = Cin * CNN_KS
    n_class = prepped["bout"].shape[1]

    # im2col gather (tiny at these sizes); everything else runs inside the fused kernel.
    idx = (jnp.arange(T) * CNN_STRIDE)[:, None] + jnp.arange(CNN_KS)[None, :]   # (T, ks)
    patches = x[:, :, idx].astype(jnp.float32)              # (B, Cin, T, ks)
    patches = patches.transpose(2, 0, 1, 3).reshape(T, B, K)
    if BP != B:
        patches = jnp.pad(patches, ((0, 0), (0, BP - B), (0, 0)))
    patches = patches.reshape(T * BP, K)

    arg_order = ["w0f", "w0b", "b0f", "b0b", "whh0f", "whh0b", "bhn0f", "bhn0b",
                 "w1f", "w1b", "b1f", "b1b", "whh1f", "whh1b", "bhn1f", "bhn1b",
                 "woutf", "woutb", "bout"]
    args = [patches] + [prepped[k] for k in arg_order]

    # Explicit VMEM budget (scratch + inputs + headroom), clamped to stay v7x-safe.
    scratch_bytes = T * BP * (2 * GATES * LANE + 2 * RNN_DIM) * 4
    in_bytes = sum(int(a.size) * a.dtype.itemsize for a in args)
    need = 2 * in_bytes + scratch_bytes + B * n_class * 4 + (4 << 20)
    vmem_limit = int(min(max(need, 32 << 20), 64 << 20))

    vmem = pl.BlockSpec(memory_space=pltpu.MemorySpace.VMEM)
    return pl.pallas_call(
        _build_kernel(T, B, BP),
        out_shape=jax.ShapeDtypeStruct((B, n_class), jnp.float32),
        in_specs=[vmem] * len(args),
        out_specs=vmem,
        scratch_shapes=[
            pltpu.VMEM((T * BP, 2 * GATES * LANE), jnp.float32),  # gi both dirs (reused by L1)
            pltpu.VMEM((T * BP, RNN_DIM), jnp.float32),           # layer-0 fwd outputs
            pltpu.VMEM((T * BP, RNN_DIM), jnp.float32),           # layer-0 bwd outputs
        ],
        compiler_params=pltpu.CompilerParams(vmem_limit_bytes=vmem_limit),
    )(*args)


# ----------------------------------------------------------------------------
# One-time weight packing (runs at init, NOT in the jitted hot path)
# ----------------------------------------------------------------------------
def _pack_gate_cols(w_t):
    """(K, 3H) -> (K, 3*LANE): gate g placed at lanes [g*LANE, g*LANE+H), zeros elsewhere."""
    K = w_t.shape[0]
    out = jnp.zeros((K, GATES * LANE), jnp.float32)
    for g in range(GATES):
        out = out.at[:, g * LANE:g * LANE + RNN_DIM].set(
            w_t[:, g * RNN_DIM:(g + 1) * RNN_DIM])
    return out


def prepare_params(params):
    H = RNN_DIM

    def pack_dir(w_ih, w_hh, b_ih, b_hh):
        wih = _pack_gate_cols(jnp.asarray(w_ih, jnp.float32).T)       # (Din, 3*LANE)
        whh = _pack_gate_cols(jnp.asarray(w_hh, jnp.float32).T)       # (H,   3*LANE) dense rows
        # Fold r/z recurrent biases into the hoisted input-projection bias;
        # the n-gate recurrent bias must stay inside the r*(...) term.
        b_gi = jnp.asarray(b_ih, jnp.float32)
        b_gi = b_gi.at[:2 * H].add(jnp.asarray(b_hh, jnp.float32)[:2 * H])
        b_gi = _pack_gate_cols(b_gi.reshape(1, GATES * H))            # (1, 3*LANE)
        bhn = jnp.asarray(b_hh, jnp.float32)[2 * H:].reshape(1, H)    # (1, H)
        return wih, whh, b_gi, bhn

    conv_w = jnp.asarray(params["conv_w"], jnp.float32).reshape(H, -1).T   # (Cin*ks, H)
    conv_b = jnp.asarray(params["conv_b"], jnp.float32).reshape(1, H)

    out = {}
    # Layer 0: conv folded into the input projection (exact: no conv activation, eval dropout).
    for d, tag in (("fwd", "f"), ("bwd", "b")):
        wih, whh, b_gi, bhn = pack_dir(*params["gru0"][d])
        out["w0" + tag] = conv_w @ wih                   # (Cin*ks, 3*LANE)
        out["b0" + tag] = conv_b @ wih + b_gi            # (1, 3*LANE)
        out["whh0" + tag] = whh
        out["bhn0" + tag] = bhn
    # Layer 1: input is [h_fwd || h_bwd]; rows 0:H multiply fwd half, H:2H the bwd half.
    for d, tag in (("fwd", "f"), ("bwd", "b")):
        wih, whh, b_gi, bhn = pack_dir(*params["gru1"][d])
        out["w1" + tag] = wih                            # (2H, 3*LANE)
        out["b1" + tag] = b_gi
        out["whh1" + tag] = whh
        out["bhn1" + tag] = bhn
    out_w = jnp.asarray(params["out_w"], jnp.float32).T  # (2H, n_class)
    out["woutf"] = out_w[:H, :]
    out["woutb"] = out_w[H:, :]
    out["bout"] = jnp.asarray(params["out_b"], jnp.float32).reshape(1, -1)
    return out


# ----------------------------------------------------------------------------
# Deterministic parameter construction + pure-JAX reference
# ----------------------------------------------------------------------------
def init_params(key, n_input, n_class):
    def uni(key, shape, fan):
        bound = 1.0 / jnp.sqrt(fan)
        return jax.random.uniform(key, shape, jnp.float32, -bound, bound)

    keys = iter(jax.random.split(key, 64))
    params = {}
    params["conv_w"] = uni(next(keys), (RNN_DIM, n_input, CNN_KS), n_input * CNN_KS)
    params["conv_b"] = uni(next(keys), (RNN_DIM,), n_input * CNN_KS)

    def gru_dir(din):
        return (uni(next(keys), (3 * RNN_DIM, din), RNN_DIM),
                uni(next(keys), (3 * RNN_DIM, RNN_DIM), RNN_DIM),
                uni(next(keys), (3 * RNN_DIM,), RNN_DIM),
                uni(next(keys), (3 * RNN_DIM,), RNN_DIM))

    params["gru0"] = {"fwd": gru_dir(RNN_DIM), "bwd": gru_dir(RNN_DIM)}
    params["gru1"] = {"fwd": gru_dir(2 * RNN_DIM), "bwd": gru_dir(2 * RNN_DIM)}
    params["out_w"] = uni(next(keys), (n_class, 2 * RNN_DIM), 2 * RNN_DIM)
    params["out_b"] = uni(next(keys), (n_class,), 2 * RNN_DIM)
    return params


def _reference_forward(x, params):
    B, Cin, L = x.shape
    T = (L - CNN_KS) // CNN_STRIDE + 1
    idx = (jnp.arange(T) * CNN_STRIDE)[:, None] + jnp.arange(CNN_KS)[None, :]
    patches = x[:, :, idx].transpose(2, 0, 1, 3).reshape(T * B, Cin * CNN_KS)
    conv = patches @ params["conv_w"].reshape(RNN_DIM, -1).T + params["conv_b"]
    seq = conv.reshape(T, B, RNN_DIM)

    def gru_dir(seq_in, w_ih, w_hh, b_ih, b_hh):
        H = RNN_DIM
        def step(h, x_t):
            gi = x_t @ w_ih.T + b_ih
            gh = h @ w_hh.T + b_hh
            r = jax.nn.sigmoid(gi[:, :H] + gh[:, :H])
            z = jax.nn.sigmoid(gi[:, H:2 * H] + gh[:, H:2 * H])
            n = jnp.tanh(gi[:, 2 * H:] + r * gh[:, 2 * H:])
            h_new = (1.0 - z) * n + z * h
            return h_new, h_new
        h0 = jnp.zeros((seq_in.shape[1], H), jnp.float32)
        hT, outs = jax.lax.scan(step, h0, seq_in)
        return outs, hT

    def bigru(seq_in, layer):
        out_f, hT_f = gru_dir(seq_in, *layer["fwd"])
        out_b_rev, hT_b = gru_dir(seq_in[::-1], *layer["bwd"])
        return jnp.concatenate([out_f, out_b_rev[::-1]], axis=-1), hT_f, hT_b

    l0, _, _ = bigru(seq, params["gru0"])
    _, hT_f1, hT_b1 = bigru(l0, params["gru1"])
    feat = jnp.concatenate([hT_f1, hT_b1], axis=-1)
    return feat @ params["out_w"].T + params["out_b"]


if __name__ == "__main__":
    B, n_input, L, n_class = 2, 4, 16, 3
    key = jax.random.PRNGKey(0)
    kx, kp = jax.random.split(key)
    x = jax.random.normal(kx, (B, n_input, L), jnp.float32)
    params = init_params(kp, n_input, n_class)
    prepped = prepare_params(params)            # one-time weight packing (outside jit)

    out = jax.block_until_ready(jax.jit(torch_rnn_model_forward)(x, prepped))
    ref = jax.block_until_ready(jax.jit(_reference_forward)(x, params))

    assert out.shape == (B, n_class) and out.dtype == jnp.float32
    assert jnp.allclose(out, ref, atol=1e-3, rtol=1e-3)
    print("KERNEL_OK")
</pallas_src>

<mosaic_0001>
module attributes {stable_mosaic.version = 11 : i64} {
  func.func @kernel(%arg0: memref<32x20xf32, #tpu.memory_space<vmem>>, %arg1: memref<20x384xf32, #tpu.memory_space<vmem>>, %arg2: memref<20x384xf32, #tpu.memory_space<vmem>>, %arg3: memref<1x384xf32, #tpu.memory_space<vmem>>, %arg4: memref<1x384xf32, #tpu.memory_space<vmem>>, %arg5: memref<32x384xf32, #tpu.memory_space<vmem>>, %arg6: memref<32x384xf32, #tpu.memory_space<vmem>>, %arg7: memref<1x32xf32, #tpu.memory_space<vmem>>, %arg8: memref<1x32xf32, #tpu.memory_space<vmem>>, %arg9: memref<64x384xf32, #tpu.memory_space<vmem>>, %arg10: memref<64x384xf32, #tpu.memory_space<vmem>>, %arg11: memref<1x384xf32, #tpu.memory_space<vmem>>, %arg12: memref<1x384xf32, #tpu.memory_space<vmem>>, %arg13: memref<32x384xf32, #tpu.memory_space<vmem>>, %arg14: memref<32x384xf32, #tpu.memory_space<vmem>>, %arg15: memref<1x32xf32, #tpu.memory_space<vmem>>, %arg16: memref<1x32xf32, #tpu.memory_space<vmem>>, %arg17: memref<32x3xf32, #tpu.memory_space<vmem>>, %arg18: memref<32x3xf32, #tpu.memory_space<vmem>>, %arg19: memref<1x3xf32, #tpu.memory_space<vmem>>, %arg20: memref<2x3xf32, #tpu.memory_space<vmem>>, %arg21: memref<32x768xf32, #tpu.memory_space<vmem>>, %arg22: memref<32x32xf32, #tpu.memory_space<vmem>>, %arg23: memref<32x32xf32, #tpu.memory_space<vmem>>) attributes {dimension_semantics = [], scalar_prefetch = 0 : i64, scratch_operands = 3 : i64, tpu.core_type = #tpu.core_type<tc>} {
    %c0 = arith.constant 0 : index
    %c0_0 = arith.constant 0 : index
    %0 = vector.load %arg0[%c0, %c0_0] : memref<32x20xf32, #tpu.memory_space<vmem>>, vector<32x20xf32>
    %c0_1 = arith.constant 0 : index
    %c0_2 = arith.constant 0 : index
    %1 = vector.load %arg1[%c0_1, %c0_2] : memref<20x384xf32, #tpu.memory_space<vmem>>, vector<20x384xf32>
    %cst = arith.constant dense<0.000000e+00> : vector<32x384xf32>
    %2 = tpu.matmul %0, %1, %cst {dimension_numbers = #tpu.dot_dimension_numbers<[1], [0], [0], [1], [0, 0, 1, 1], [], []>} : vector<32x20xf32>, vector<20x384xf32>, vector<32x384xf32> -> vector<32x384xf32>
    %c0_3 = arith.constant 0 : index
    %c0_4 = arith.constant 0 : index
    %3 = vector.load %arg3[%c0_3, %c0_4] : memref<1x384xf32, #tpu.memory_space<vmem>>, vector<1x384xf32>
    %4 = vector.broadcast %3 : vector<1x384xf32> to vector<32x384xf32>
    %5 = arith.addf %2, %4 : vector<32x384xf32>
    %c0_5 = arith.constant 0 : index
    %c0_6 = arith.constant 0 : index
    %6 = vector.load %arg21[%c0_5, %c0_6] : memref<32x768xf32, #tpu.memory_space<vmem>>, vector<32x384xf32>
    tpu.vector_store %arg21[%c0_5, %c0_6], %5 {strides = array<i32>} : memref<32x768xf32, #tpu.memory_space<vmem>>, vector<32x384xf32>,
    %c0_7 = arith.constant 0 : index
    %c0_8 = arith.constant 0 : index
    %7 = vector.load %arg2[%c0_7, %c0_8] : memref<20x384xf32, #tpu.memory_space<vmem>>, vector<20x384xf32>
    %cst_9 = arith.constant dense<0.000000e+00> : vector<32x384xf32>
    %8 = tpu.matmul %0, %7, %cst_9 {dimension_numbers = #tpu.dot_dimension_numbers<[1], [0], [0], [1], [0, 0, 1, 1], [], []>} : vector<32x20xf32>, vector<20x384xf32>, vector<32x384xf32> -> vector<32x384xf32>
    %c0_10 = arith.constant 0 : index
    %c0_11 = arith.constant 0 : index
    %9 = vector.load %arg4[%c0_10, %c0_11] : memref<1x384xf32, #tpu.memory_space<vmem>>, vector<1x384xf32>
    %10 = vector.broadcast %9 : vector<1x384xf32> to vector<32x384xf32>
    %11 = arith.addf %8, %10 : vector<32x384xf32>
    %c0_12 = arith.constant 0 : index
    %c384 = arith.constant 384 : index
    %12 = vector.load %arg21[%c0_12, %c384] : memref<32x768xf32, #tpu.memory_space<vmem>>, vector<32x384xf32>
    tpu.vector_store %arg21[%c0_12, %c384], %11 {strides = array<i32>} : memref<32x768xf32, #tpu.memory_space<vmem>>, vector<32x384xf32>,
    %cst_13 = arith.constant 0.000000e+00 : f32
    %13 = vector.broadcast %cst_13 : f32 to vector<32x32xf32>
    %c0_14 = arith.constant 0 : index
    %c0_15 = arith.constant 0 : index
    %14 = vector.load %arg22[%c0_14, %c0_15] : memref<32x32xf32, #tpu.memory_space<vmem>>, vector<32x32xf32>
    tpu.vector_store %arg22[%c0_14, %c0_15], %13 {strides = array<i32>} : memref<32x32xf32, #tpu.memory_space<vmem>>, vector<32x32xf32>,
    %cst_16 = arith.constant 0.000000e+00 : f32
    %15 = vector.broadcast %cst_16 : f32 to vector<32x32xf32>
    %c0_17 = arith.constant 0 : index
    %c0_18 = arith.constant 0 : index
    %16 = vector.load %arg23[%c0_17, %c0_18] : memref<32x32xf32, #tpu.memory_space<vmem>>, vector<32x32xf32>
    tpu.vector_store %arg23[%c0_17, %c0_18], %15 {strides = array<i32>} : memref<32x32xf32, #tpu.memory_space<vmem>>, vector<32x32xf32>,
    %c0_19 = arith.constant 0 : index
    %c0_20 = arith.constant 0 : index
    %17 = vector.load %arg5[%c0_19, %c0_20] : memref<32x384xf32, #tpu.memory_space<vmem>>, vector<32x384xf32>
    %c0_21 = arith.constant 0 : index
    %c0_22 = arith.constant 0 : index
    %18 = vector.load %arg6[%c0_21, %c0_22] : memref<32x384xf32, #tpu.memory_space<vmem>>, vector<32x384xf32>
    %c0_23 = arith.constant 0 : index
    %c0_24 = arith.constant 0 : index
    %19 = vector.load %arg7[%c0_23, %c0_24] : memref<1x32xf32, #tpu.memory_space<vmem>>, vector<1x32xf32>
    %20 = vector.shape_cast %19 : vector<1x32xf32> to vector<1x32xf32>
    %21 = vector.broadcast %20 : vector<1x32xf32> to vector<2x32xf32>
    %c0_25 = arith.constant 0 : index
    %c0_26 = arith.constant 0 : index
    %22 = vector.load %arg8[%c0_25, %c0_26] : memref<1x32xf32, #tpu.memory_space<vmem>>, vector<1x32xf32>
    %23 = vector.shape_cast %22 : vector<1x32xf32> to vector<1x32xf32>
    %24 = vector.broadcast %23 : vector<1x32xf32> to vector<2x32xf32>
    %cst_27 = arith.constant 0.000000e+00 : f32
    %25 = vector.broadcast %cst_27 : f32 to vector<2x32xf32>
    %cst_28 = arith.constant 0.000000e+00 : f32
    %26 = vector.broadcast %cst_28 : f32 to vector<2x32xf32>
    %c0_29 = arith.constant 0 : index
    %c0_30 = arith.constant 0 : index
    %27 = vector.load %arg21[%c0_29, %c0_30] : memref<32x768xf32, #tpu.memory_space<vmem>>, vector<2x384xf32>
    %c24 = arith.constant 24 : index
    %c384_31 = arith.constant 384 : index
    %28 = vector.load %arg21[%c24, %c384_31] : memref<32x768xf32, #tpu.memory_space<vmem>>, vector<2x384xf32>
    %cst_32 = arith.constant dense<0.000000e+00> : vector<2x384xf32>
    %29 = tpu.matmul %25, %17, %cst_32 {dimension_numbers = #tpu.dot_dimension_numbers<[1], [0], [0], [1], [0, 0, 1, 1], [], []>} : vector<2x32xf32>, vector<32x384xf32>, vector<2x384xf32> -> vector<2x384xf32>
    %cst_33 = arith.constant dense<0.000000e+00> : vector<2x384xf32>
    %30 = tpu.matmul %26, %18, %cst_33 {dimension_numbers = #tpu.dot_dimension_numbers<[1], [0], [0], [1], [0, 0, 1, 1], [], []>} : vector<2x32xf32>, vector<32x384xf32>, vector<2x384xf32> -> vector<2x384xf32>
    %31 = vector.extract_strided_slice %27 {offsets = [0, 0], sizes = [2, 32], strides = [1, 1]} : vector<2x384xf32> to vector<2x32xf32>
    %32 = vector.extract_strided_slice %29 {offsets = [0, 0], sizes = [2, 32], strides = [1, 1]} : vector<2x384xf32> to vector<2x32xf32>
    %33 = arith.addf %31, %32 : vector<2x32xf32>
    %34 = arith.negf %33 : vector<2x32xf32>
    %35 = math.exp %34 : vector<2x32xf32>
    %cst_34 = arith.constant 1.000000e+00 : f32
    %36 = vector.broadcast %cst_34 : f32 to vector<2x32xf32>
    %37 = arith.addf %36, %35 : vector<2x32xf32>
    %38 = arith.divf %36, %37 : vector<2x32xf32>
    %39 = vector.extract_strided_slice %27 {offsets = [0, 128], sizes = [2, 32], strides = [1, 1]} : vector<2x384xf32> to vector<2x32xf32>
    %40 = vector.extract_strided_slice %29 {offsets = [0, 128], sizes = [2, 32], strides = [1, 1]} : vector<2x384xf32> to vector<2x32xf32>
    %41 = arith.addf %39, %40 : vector<2x32xf32>
    %42 = arith.negf %41 : vector<2x32xf32>
    %43 = math.exp %42 : vector<2x32xf32>
    %cst_35 = arith.constant 1.000000e+00 : f32
    %44 = vector.broadcast %cst_35 : f32 to vector<2x32xf32>
    %45 = arith.addf %44, %43 : vector<2x32xf32>
    %46 = arith.divf %44, %45 : vector<2x32xf32>
    %47 = vector.extract_strided_slice %27 {offsets = [0, 256], sizes = [2, 32], strides = [1, 1]} : vector<2x384xf32> to vector<2x32xf32>
    %48 = vector.extract_strided_slice %29 {offsets = [0, 256], sizes = [2, 32], strides = [1, 1]} : vector<2x384xf32> to vector<2x32xf32>
    %49 = arith.addf %48, %21 : vector<2x32xf32>
    %50 = arith.mulf %38, %49 : vector<2x32xf32>
    %51 = arith.addf %47, %50 : vector<2x32xf32>
    %52 = math.tanh %51 : vector<2x32xf32>
    %cst_36 = arith.constant 1.000000e+00 : f32
    %53 = vector.broadcast %cst_36 : f32 to vector<2x32xf32>
    %54 = arith.subf %53, %46 : vector<2x32xf32>
    %55 = arith.mulf %54, %52 : vector<2x32xf32>
    %56 = arith.mulf %46, %25 : vector<2x32xf32>
    %57 = arith.addf %55, %56 : vector<2x32xf32>
    %58 = vector.extract_strided_slice %28 {offsets = [0, 0], sizes = [2, 32], strides = [1, 1]} : vector<2x384xf32> to vector<2x32xf32>
    %59 = vector.extract_strided_slice %30 {offsets = [0, 0], sizes = [2, 32], strides = [1, 1]} : vector<2x384xf32> to vector<2x32xf32>
    %60 = arith.addf %58, %59 : vector<2x32xf32>
    %61 = arith.negf %60 : vector<2x32xf32>
    %62 = math.exp %61 : vector<2x32xf32>
    %cst_37 = arith.constant 1.000000e+00 : f32
    %63 = vector.broadcast %cst_37 : f32 to vector<2x32xf32>
    %64 = arith.addf %63, %62 : vector<2x32xf32>
    %65 = arith.divf %63, %64 : vector<2x32xf32>
    %66 = vector.extract_strided_slice %28 {offsets = [0, 128], sizes = [2, 32], strides = [1, 1]} : vector<2x384xf32> to vector<2x32xf32>
    %67 = vector.extract_strided_slice %30 {offsets = [0, 128], sizes = [2, 32], strides = [1, 1]} : vector<2x384xf32> to vector<2x32xf32>
    %68 = arith.addf %66, %67 : vector<2x32xf32>
    %69 = arith.negf %68 : vector<2x32xf32>
    %70 = math.exp %69 : vector<2x32xf32>
    %cst_38 = arith.constant 1.000000e+00 : f32
    %71 = vector.broadcast %cst_38 : f32 to vector<2x32xf32>
    %72 = arith.addf %71, %70 : vector<2x32xf32>
    %73 = arith.divf %71, %72 : vector<2x32xf32>
    %74 = vector.extract_strided_slice %28 {offsets = [0, 256], sizes = [2, 32], strides = [1, 1]} : vector<2x384xf32> to vector<2x32xf32>
    %75 = vector.extract_strided_slice %30 {offsets = [0, 256], sizes = [2, 32], strides = [1, 1]} : vector<2x384xf32> to vector<2x32xf32>
    %76 = arith.addf %75, %24 : vector<2x32xf32>
    %77 = arith.mulf %65, %76 : vector<2x32xf32>
    %78 = arith.addf %74, %77 : vector<2x32xf32>
    %79 = math.tanh %78 : vector<2x32xf32>
    %cst_39 = arith.constant 1.000000e+00 : f32
    %80 = vector.broadcast %cst_39 : f32 to vector<2x32xf32>
    %81 = arith.subf %80, %73 : vector<2x32xf32>
    %82 = arith.mulf %81, %79 : vector<2x32xf32>
    %83 = arith.mulf %73, %26 : vector<2x32xf32>
    %84 = arith.addf %82, %83 : vector<2x32xf32>
    %c0_40 = arith.constant 0 : index
    %c0_41 = arith.constant 0 : index
    %85 = vector.load %arg22[%c0_40, %c0_41] : memref<32x32xf32, #tpu.memory_space<vmem>>, vector<2x32xf32>
    tpu.vector_store %arg22[%c0_40, %c0_41], %57 {strides = array<i32>} : memref<32x32xf32, #tpu.memory_space<vmem>>, vector<2x32xf32>,
    %c24_42 = arith.constant 24 : index
    %c0_43 = arith.constant 0 : index
    %86 = vector.load %arg23[%c24_42, %c0_43] : memref<32x32xf32, #tpu.memory_space<vmem>>, vector<2x32xf32>
    tpu.vector_store %arg23[%c24_42, %c0_43], %84 {strides = array<i32>} : memref<32x32xf32, #tpu.memory_space<vmem>>, vector<2x32xf32>,
    %c8 = arith.constant 8 : index
    %c0_44 = arith.constant 0 : index
    %87 = vector.load %arg21[%c8, %c0_44] : memref<32x768xf32, #tpu.memory_space<vmem>>, vector<2x384xf32>
    %c16 = arith.constant 16 : index
    %c384_45 = arith.constant 384 : index
    %88 = vector.load %arg21[%c16, %c384_45] : memref<32x768xf32, #tpu.memory_space<vmem>>, vector<2x384xf32>
    %cst_46 = arith.constant dense<0.000000e+00> : vector<2x384xf32>
    %89 = tpu.matmul %57, %17, %cst_46 {dimension_numbers = #tpu.dot_dimension_numbers<[1], [0], [0], [1], [0, 0, 1, 1], [], []>} : vector<2x32xf32>, vector<32x384xf32>, vector<2x384xf32> -> vector<2x384xf32>
    %cst_47 = arith.constant dense<0.000000e+00> : vector<2x384xf32>
    %90 = tpu.matmul %84, %18, %cst_47 {dimension_numbers = #tpu.dot_dimension_numbers<[1], [0], [0], [1], [0, 0, 1, 1], [], []>} : vector<2x32xf32>, vector<32x384xf32>, vector<2x384xf32> -> vector<2x384xf32>
    %91 = vector.extract_strided_slice %87 {offsets = [0, 0], sizes = [2, 32], strides = [1, 1]} : vector<2x384xf32> to vector<2x32xf32>
    %92 = vector.extract_strided_slice %89 {offsets = [0, 0], sizes = [2, 32], strides = [1, 1]} : vector<2x384xf32> to vector<2x32xf32>
    %93 = arith.addf %91, %92 : vector<2x32xf32>
    %94 = arith.negf %93 : vector<2x32xf32>
    %95 = math.exp %94 : vector<2x32xf32>
    %cst_48 = arith.constant 1.000000e+00 : f32
    %96 = vector.broadcast %cst_48 : f32 to vector<2x32xf32>
    %97 = arith.addf %96, %95 : vector<2x32xf32>
    %98 = arith.divf %96, %97 : vector<2x32xf32>
    %99 = vector.extract_strided_slice %87 {offsets = [0, 128], sizes = [2, 32], strides = [1, 1]} : vector<2x384xf32> to vector<2x32xf32>
    %100 = vector.extract_strided_slice %89 {offsets = [0, 128], sizes = [2, 32], strides = [1, 1]} : vector<2x384xf32> to vector<2x32xf32>
    %101 = arith.addf %99, %100 : vector<2x32xf32>
    %102 = arith.negf %101 : vector<2x32xf32>
    %103 = math.exp %102 : vector<2x32xf32>
    %cst_49 = arith.constant 1.000000e+00 : f32
    %104 = vector.broadcast %cst_49 : f32 to vector<2x32xf32>
    %105 = arith.addf %104, %103 : vector<2x32xf32>
    %106 = arith.divf %104, %105 : vector<2x32xf32>
    %107 = vector.extract_strided_slice %87 {offsets = [0, 256], sizes = [2, 32], strides = [1, 1]} : vector<2x384xf32> to vector<2x32xf32>
    %108 = vector.extract_strided_slice %89 {offsets = [0, 256], sizes = [2, 32], strides = [1, 1]} : vector<2x384xf32> to vector<2x32xf32>
    %109 = arith.addf %108, %21 : vector<2x32xf32>
    %110 = arith.mulf %98, %109 : vector<2x32xf32>
    %111 = arith.addf %107, %110 : vector<2x32xf32>
    %112 = math.tanh %111 : vector<2x32xf32>
    %cst_50 = arith.constant 1.000000e+00 : f32
    %113 = vector.broadcast %cst_50 : f32 to vector<2x32xf32>
    %114 = arith.subf %113, %106 : vector<2x32xf32>
    %115 = arith.mulf %114, %112 : vector<2x32xf32>
    %116 = arith.mulf %106, %57 : vector<2x32xf32>
    %117 = arith.addf %115, %116 : vector<2x32xf32>
    %118 = vector.extract_strided_slice %88 {offsets = [0, 0], sizes = [2, 32], strides = [1, 1]} : vector<2x384xf32> to vector<2x32xf32>
    %119 = vector.extract_strided_slice %90 {offsets = [0, 0], sizes = [2, 32], strides = [1, 1]} : vector<2x384xf32> to vector<2x32xf32>
    %120 = arith.addf %118, %119 : vector<2x32xf32>
    %121 = arith.negf %120 : vector<2x32xf32>
    %122 = math.exp %121 : vector<2x32xf32>
    %cst_51 = arith.constant 1.000000e+00 : f32
    %123 = vector.broadcast %cst_51 : f32 to vector<2x32xf32>
    %124 = arith.addf %123, %122 : vector<2x32xf32>
    %125 = arith.divf %123, %124 : vector<2x32xf32>
    %126 = vector.extract_strided_slice %88 {offsets = [0, 128], sizes = [2, 32], strides = [1, 1]} : vector<2x384xf32> to vector<2x32xf32>
    %127 = vector.extract_strided_slice %90 {offsets = [0, 128], sizes = [2, 32], strides = [1, 1]} : vector<2x384xf32> to vector<2x32xf32>
    %128 = arith.addf %126, %127 : vector<2x32xf32>
    %129 = arith.negf %128 : vector<2x32xf32>
    %130 = math.exp %129 : vector<2x32xf32>
    %cst_52 = arith.constant 1.000000e+00 : f32
    %131 = vector.broadcast %cst_52 : f32 to vector<2x32xf32>
    %132 = arith.addf %131, %130 : vector<2x32xf32>
    %133 = arith.divf %131, %132 : vector<2x32xf32>
    %134 = vector.extract_strided_slice %88 {offsets = [0, 256], sizes = [2, 32], strides = [1, 1]} : vector<2x384xf32> to vector<2x32xf32>
    %135 = vector.extract_strided_slice %90 {offsets = [0, 256], sizes = [2, 32], strides = [1, 1]} : vector<2x384xf32> to vector<2x32xf32>
    %136 = arith.addf %135, %24 : vector<2x32xf32>
    %137 = arith.mulf %125, %136 : vector<2x32xf32>
    %138 = arith.addf %134, %137 : vector<2x32xf32>
    %139 = math.tanh %138 : vector<2x32xf32>
    %cst_53 = arith.constant 1.000000e+00 : f32
    %140 = vector.broadcast %cst_53 : f32 to vector<2x32xf32>
    %141 = arith.subf %140, %133 : vector<2x32xf32>
    %142 = arith.mulf %141, %139 : vector<2x32xf32>
    %143 = arith.mulf %133, %84 : vector<2x32xf32>
    %144 = arith.addf %142, %143 : vector<2x32xf32>
    %c8_54 = arith.constant 8 : index
    %c0_55 = arith.constant 0 : index
    %145 = vector.load %arg22[%c8_54, %c0_55] : memref<32x32xf32, #tpu.memory_space<vmem>>, vector<2x32xf32>
    tpu.vector_store %arg22[%c8_54, %c0_55], %117 {strides = array<i32>} : memref<32x32xf32, #tpu.memory_space<vmem>>, vector<2x32xf32>,
    %c16_56 = arith.constant 16 : index
    %c0_57 = arith.constant 0 : index
    %146 = vector.load %arg23[%c16_56, %c0_57] : memref<32x32xf32, #tpu.memory_space<vmem>>, vector<2x32xf32>
    tpu.vector_store %arg23[%c16_56, %c0_57], %144 {strides = array<i32>} : memref<32x32xf32, #tpu.memory_space<vmem>>, vector<2x32xf32>,
    %c16_58 = arith.constant 16 : index
    %c0_59 = arith.constant 0 : index
    %147 = vector.load %arg21[%c16_58, %c0_59] : memref<32x768xf32, #tpu.memory_space<vmem>>, vector<2x384xf32>
    %c8_60 = arith.constant 8 : index
    %c384_61 = arith.constant 384 : index
    %148 = vector.load %arg21[%c8_60, %c384_61] : memref<32x768xf32, #tpu.memory_space<vmem>>, vector<2x384xf32>
    %cst_62 = arith.constant dense<0.000000e+00> : vector<2x384xf32>
    %149 = tpu.matmul %117, %17, %cst_62 {dimension_numbers = #tpu.dot_dimension_numbers<[1], [0], [0], [1], [0, 0, 1, 1], [], []>} : vector<2x32xf32>, vector<32x384xf32>, vector<2x384xf32> -> vector<2x384xf32>
    %cst_63 = arith.constant dense<0.000000e+00> : vector<2x384xf32>
    %150 = tpu.matmul %144, %18, %cst_63 {dimension_numbers = #tpu.dot_dimension_numbers<[1], [0], [0], [1], [0, 0, 1, 1], [], []>} : vector<2x32xf32>, vector<32x384xf32>, vector<2x384xf32> -> vector<2x384xf32>
    %151 = vector.extract_strided_slice %147 {offsets = [0, 0], sizes = [2, 32], strides = [1, 1]} : vector<2x384xf32> to vector<2x32xf32>
    %152 = vector.extract_strided_slice %149 {offsets = [0, 0], sizes = [2, 32], strides = [1, 1]} : vector<2x384xf32> to vector<2x32xf32>
    %153 = arith.addf %151, %152 : vector<2x32xf32>
    %154 = arith.negf %153 : vector<2x32xf32>
    %155 = math.exp %154 : vector<2x32xf32>
    %cst_64 = arith.constant 1.000000e+00 : f32
    %156 = vector.broadcast %cst_64 : f32 to vector<2x32xf32>
    %157 = arith.addf %156, %155 : vector<2x32xf32>
    %158 = arith.divf %156, %157 : vector<2x32xf32>
    %159 = vector.extract_strided_slice %147 {offsets = [0, 128], sizes = [2, 32], strides = [1, 1]} : vector<2x384xf32> to vector<2x32xf32>
    %160 = vector.extract_strided_slice %149 {offsets = [0, 128], sizes = [2, 32], strides = [1, 1]} : vector<2x384xf32> to vector<2x32xf32>
    %161 = arith.addf %159, %160 : vector<2x32xf32>
    %162 = arith.negf %161 : vector<2x32xf32>
    %163 = math.exp %162 : vector<2x32xf32>
    %cst_65 = arith.constant 1.000000e+00 : f32
    %164 = vector.broadcast %cst_65 : f32 to vector<2x32xf32>
    %165 = arith.addf %164, %163 : vector<2x32xf32>
    %166 = arith.divf %164, %165 : vector<2x32xf32>
    %167 = vector.extract_strided_slice %147 {offsets = [0, 256], sizes = [2, 32], strides = [1, 1]} : vector<2x384xf32> to vector<2x32xf32>
    %168 = vector.extract_strided_slice %149 {offsets = [0, 256], sizes = [2, 32], strides = [1, 1]} : vector<2x384xf32> to vector<2x32xf32>
    %169 = arith.addf %168, %21 : vector<2x32xf32>
    %170 = arith.mulf %158, %169 : vector<2x32xf32>
    %171 = arith.addf %167, %170 : vector<2x32xf32>
    %172 = math.tanh %171 : vector<2x32xf32>
    %cst_66 = arith.constant 1.000000e+00 : f32
    %173 = vector.broadcast %cst_66 : f32 to vector<2x32xf32>
    %174 = arith.subf %173, %166 : vector<2x32xf32>
    %175 = arith.mulf %174, %172 : vector<2x32xf32>
    %176 = arith.mulf %166, %117 : vector<2x32xf32>
    %177 = arith.addf %175, %176 : vector<2x32xf32>
    %178 = vector.extract_strided_slice %148 {offsets = [0, 0], sizes = [2, 32], strides = [1, 1]} : vector<2x384xf32> to vector<2x32xf32>
    %179 = vector.extract_strided_slice %150 {offsets = [0, 0], sizes = [2, 32], strides = [1, 1]} : vector<2x384xf32> to vector<2x32xf32>
    %180 = arith.addf %178, %179 : vector<2x32xf32>
    %181 = arith.negf %180 : vector<2x32xf32>
    %182 = math.exp %181 : vector<2x32xf32>
    %cst_67 = arith.constant 1.000000e+00 : f32
    %183 = vector.broadcast %cst_67 : f32 to vector<2x32xf32>
    %184 = arith.addf %183, %182 : vector<2x32xf32>
    %185 = arith.divf %183, %184 : vector<2x32xf32>
    %186 = vector.extract_strided_slice %148 {offsets = [0, 128], sizes = [2, 32], strides = [1, 1]} : vector<2x384xf32> to vector<2x32xf32>
    %187 = vector.extract_strided_slice %150 {offsets = [0, 128], sizes = [2, 32], strides = [1, 1]} : vector<2x384xf32> to vector<2x32xf32>
    %188 = arith.addf %186, %187 : vector<2x32xf32>
    %189 = arith.negf %188 : vector<2x32xf32>
    %190 = math.exp %189 : vector<2x32xf32>
    %cst_68 = arith.constant 1.000000e+00 : f32
    %191 = vector.broadcast %cst_68 : f32 to vector<2x32xf32>
    %192 = arith.addf %191, %190 : vector<2x32xf32>
    %193 = arith.divf %191, %192 : vector<2x32xf32>
    %194 = vector.extract_strided_slice %148 {offsets = [0, 256], sizes = [2, 32], strides = [1, 1]} : vector<2x384xf32> to vector<2x32xf32>
    %195 = vector.extract_strided_slice %150 {offsets = [0, 256], sizes = [2, 32], strides = [1, 1]} : vector<2x384xf32> to vector<2x32xf32>
    %196 = arith.addf %195, %24 : vector<2x32xf32>
    %197 = arith.mulf %185, %196 : vector<2x32xf32>
    %198 = arith.addf %194, %197 : vector<2x32xf32>
    %199 = math.tanh %198 : vector<2x32xf32>
    %cst_69 = arith.constant 1.000000e+00 : f32
    %200 = vector.broadcast %cst_69 : f32 to vector<2x32xf32>
    %201 = arith.subf %200, %193 : vector<2x32xf32>
    %202 = arith.mulf %201, %199 : vector<2x32xf32>
    %203 = arith.mulf %193, %144 : vector<2x32xf32>
    %204 = arith.addf %202, %203 : vector<2x32xf32>
    %c16_70 = arith.constant 16 : index
    %c0_71 = arith.constant 0 : index
    %205 = vector.load %arg22[%c16_70, %c0_71] : memref<32x32xf32, #tpu.memory_space<vmem>>, vector<2x32xf32>
    tpu.vector_store %arg22[%c16_70, %c0_71], %177 {strides = array<i32>} : memref<32x32xf32, #tpu.memory_space<vmem>>, vector<2x32xf32>,
    %c8_72 = arith.constant 8 : index
    %c0_73 = arith.constant 0 : index
    %206 = vector.load %arg23[%c8_72, %c0_73] : memref<32x32xf32, #tpu.memory_space<vmem>>, vector<2x32xf32>
    tpu.vector_store %arg23[%c8_72, %c0_73], %204 {strides = array<i32>} : memref<32x32xf32, #tpu.memory_space<vmem>>, vector<2x32xf32>,
    %c24_74 = arith.constant 24 : index
    %c0_75 = arith.constant 0 : index
    %207 = vector.load %arg21[%c24_74, %c0_75] : memref<32x768xf32, #tpu.memory_space<vmem>>, vector<2x384xf32>
    %c0_76 = arith.constant 0 : index
    %c384_77 = arith.constant 384 : index
    %208 = vector.load %arg21[%c0_76, %c384_77] : memref<32x768xf32, #tpu.memory_space<vmem>>, vector<2x384xf32>
    %cst_78 = arith.constant dense<0.000000e+00> : vector<2x384xf32>
    %209 = tpu.matmul %177, %17, %cst_78 {dimension_numbers = #tpu.dot_dimension_numbers<[1], [0], [0], [1], [0, 0, 1, 1], [], []>} : vector<2x32xf32>, vector<32x384xf32>, vector<2x384xf32> -> vector<2x384xf32>
    %cst_79 = arith.constant dense<0.000000e+00> : vector<2x384xf32>
    %210 = tpu.matmul %204, %18, %cst_79 {dimension_numbers = #tpu.dot_dimension_numbers<[1], [0], [0], [1], [0, 0, 1, 1], [], []>} : vector<2x32xf32>, vector<32x384xf32>, vector<2x384xf32> -> vector<2x384xf32>
    %211 = vector.extract_strided_slice %207 {offsets = [0, 0], sizes = [2, 32], strides = [1, 1]} : vector<2x384xf32> to vector<2x32xf32>
    %212 = vector.extract_strided_slice %209 {offsets = [0, 0], sizes = [2, 32], strides = [1, 1]} : vector<2x384xf32> to vector<2x32xf32>
    %213 = arith.addf %211, %212 : vector<2x32xf32>
    %214 = arith.negf %213 : vector<2x32xf32>
    %215 = math.exp %214 : vector<2x32xf32>
    %cst_80 = arith.constant 1.000000e+00 : f32
    %216 = vector.broadcast %cst_80 : f32 to vector<2x32xf32>
    %217 = arith.addf %216, %215 : vector<2x32xf32>
    %218 = arith.divf %216, %217 : vector<2x32xf32>
    %219 = vector.extract_strided_slice %207 {offsets = [0, 128], sizes = [2, 32], strides = [1, 1]} : vector<2x384xf32> to vector<2x32xf32>
    %220 = vector.extract_strided_slice %209 {offsets = [0, 128], sizes = [2, 32], strides = [1, 1]} : vector<2x384xf32> to vector<2x32xf32>
    %221 = arith.addf %219, %220 : vector<2x32xf32>
    %222 = arith.negf %221 : vector<2x32xf32>
    %223 = math.exp %222 : vector<2x32xf32>
    %cst_81 = arith.constant 1.000000e+00 : f32
    %224 = vector.broadcast %cst_81 : f32 to vector<2x32xf32>
    %225 = arith.addf %224, %223 : vector<2x32xf32>
    %226 = arith.divf %224, %225 : vector<2x32xf32>
    %227 = vector.extract_strided_slice %207 {offsets = [0, 256], sizes = [2, 32], strides = [1, 1]} : vector<2x384xf32> to vector<2x32xf32>
    %228 = vector.extract_strided_slice %209 {offsets = [0, 256], sizes = [2, 32], strides = [1, 1]} : vector<2x384xf32> to vector<2x32xf32>
    %229 = arith.addf %228, %21 : vector<2x32xf32>
    %230 = arith.mulf %218, %229 : vector<2x32xf32>
    %231 = arith.addf %227, %230 : vector<2x32xf32>
    %232 = math.tanh %231 : vector<2x32xf32>
    %cst_82 = arith.constant 1.000000e+00 : f32
    %233 = vector.broadcast %cst_82 : f32 to vector<2x32xf32>
    %234 = arith.subf %233, %226 : vector<2x32xf32>
    %235 = arith.mulf %234, %232 : vector<2x32xf32>
    %236 = arith.mulf %226, %177 : vector<2x32xf32>
    %237 = arith.addf %235, %236 : vector<2x32xf32>
    %238 = vector.extract_strided_slice %208 {offsets = [0, 0], sizes = [2, 32], strides = [1, 1]} : vector<2x384xf32> to vector<2x32xf32>
    %239 = vector.extract_strided_slice %210 {offsets = [0, 0], sizes = [2, 32], strides = [1, 1]} : vector<2x384xf32> to vector<2x32xf32>
    %240 = arith.addf %238, %239 : vector<2x32xf32>
    %241 = arith.negf %240 : vector<2x32xf32>
    %242 = math.exp %241 : vector<2x32xf32>
    %cst_83 = arith.constant 1.000000e+00 : f32
    %243 = vector.broadcast %cst_83 : f32 to vector<2x32xf32>
    %244 = arith.addf %243, %242 : vector<2x32xf32>
    %245 = arith.divf %243, %244 : vector<2x32xf32>
    %246 = vector.extract_strided_slice %208 {offsets = [0, 128], sizes = [2, 32], strides = [1, 1]} : vector<2x384xf32> to vector<2x32xf32>
    %247 = vector.extract_strided_slice %210 {offsets = [0, 128], sizes = [2, 32], strides = [1, 1]} : vector<2x384xf32> to vector<2x32xf32>
    %248 = arith.addf %246, %247 : vector<2x32xf32>
    %249 = arith.negf %248 : vector<2x32xf32>
    %250 = math.exp %249 : vector<2x32xf32>
    %cst_84 = arith.constant 1.000000e+00 : f32
    %251 = vector.broadcast %cst_84 : f32 to vector<2x32xf32>
    %252 = arith.addf %251, %250 : vector<2x32xf32>
    %253 = arith.divf %251, %252 : vector<2x32xf32>
    %254 = vector.extract_strided_slice %208 {offsets = [0, 256], sizes = [2, 32], strides = [1, 1]} : vector<2x384xf32> to vector<2x32xf32>
    %255 = vector.extract_strided_slice %210 {offsets = [0, 256], sizes = [2, 32], strides = [1, 1]} : vector<2x384xf32> to vector<2x32xf32>
    %256 = arith.addf %255, %24 : vector<2x32xf32>
    %257 = arith.mulf %245, %256 : vector<2x32xf32>
    %258 = arith.addf %254, %257 : vector<2x32xf32>
    %259 = math.tanh %258 : vector<2x32xf32>
    %cst_85 = arith.constant 1.000000e+00 : f32
    %260 = vector.broadcast %cst_85 : f32 to vector<2x32xf32>
    %261 = arith.subf %260, %253 : vector<2x32xf32>
    %262 = arith.mulf %261, %259 : vector<2x32xf32>
    %263 = arith.mulf %253, %204 : vector<2x32xf32>
    %264 = arith.addf %262, %263 : vector<2x32xf32>
    %c24_86 = arith.constant 24 : index
    %c0_87 = arith.constant 0 : index
    %265 = vector.load %arg22[%c24_86, %c0_87] : memref<32x32xf32, #tpu.memory_space<vmem>>, vector<2x32xf32>
    tpu.vector_store %arg22[%c24_86, %c0_87], %237 {strides = array<i32>} : memref<32x32xf32, #tpu.memory_space<vmem>>, vector<2x32xf32>,
    %c0_88 = arith.constant 0 : index
    %c0_89 = arith.constant 0 : index
    %266 = vector.load %arg23[%c0_88, %c0_89] : memref<32x32xf32, #tpu.memory_space<vmem>>, vector<2x32xf32>
    tpu.vector_store %arg23[%c0_88, %c0_89], %264 {strides = array<i32>} : memref<32x32xf32, #tpu.memory_space<vmem>>, vector<2x32xf32>,
    %c0_90 = arith.constant 0 : index
    %c0_91 = arith.constant 0 : index
    %267 = vector.load %arg22[%c0_90, %c0_91] : memref<32x32xf32, #tpu.memory_space<vmem>>, vector<32x32xf32>
    %c0_92 = arith.constant 0 : index
    %c0_93 = arith.constant 0 : index
    %268 = vector.load %arg23[%c0_92, %c0_93] : memref<32x32xf32, #tpu.memory_space<vmem>>, vector<32x32xf32>
    %c0_94 = arith.constant 0 : index
    %c0_95 = arith.constant 0 : index
    %269 = vector.load %arg9[%c0_94, %c0_95] : memref<64x384xf32, #tpu.memory_space<vmem>>, vector<32x384xf32>
    %cst_96 = arith.constant dense<0.000000e+00> : vector<32x384xf32>
    %270 = tpu.matmul %267, %269, %cst_96 {dimension_numbers = #tpu.dot_dimension_numbers<[1], [0], [0], [1], [0, 0, 1, 1], [], []>} : vector<32x32xf32>, vector<32x384xf32>, vector<32x384xf32> -> vector<32x384xf32>
    %c32 = arith.constant 32 : index
    %c0_97 = arith.constant 0 : index
    %271 = vector.load %arg9[%c32, %c0_97] : memref<64x384xf32, #tpu.memory_space<vmem>>, vector<32x384xf32>
    %cst_98 = arith.constant dense<0.000000e+00> : vector<32x384xf32>
    %272 = tpu.matmul %268, %271, %cst_98 {dimension_numbers = #tpu.dot_dimension_numbers<[1], [0], [0], [1], [0, 0, 1, 1], [], []>} : vector<32x32xf32>, vector<32x384xf32>, vector<32x384xf32> -> vector<32x384xf32>
    %273 = arith.addf %270, %272 : vector<32x384xf32>
    %c0_99 = arith.constant 0 : index
    %c0_100 = arith.constant 0 : index
    %274 = vector.load %arg11[%c0_99, %c0_100] : memref<1x384xf32, #tpu.memory_space<vmem>>, vector<1x384xf32>
    %275 = vector.broadcast %274 : vector<1x384xf32> to vector<32x384xf32>
    %276 = arith.addf %273, %275 : vector<32x384xf32>
    %c0_101 = arith.constant 0 : index
    %c0_102 = arith.constant 0 : index
    %277 = vector.load %arg21[%c0_101, %c0_102] : memref<32x768xf32, #tpu.memory_space<vmem>>, vector<32x384xf32>
    tpu.vector_store %arg21[%c0_101, %c0_102], %276 {strides = array<i32>} : memref<32x768xf32, #tpu.memory_space<vmem>>, vector<32x384xf32>,
    %c0_103 = arith.constant 0 : index
    %c0_104 = arith.constant 0 : index
    %278 = vector.load %arg10[%c0_103, %c0_104] : memref<64x384xf32, #tpu.memory_space<vmem>>, vector<32x384xf32>
    %cst_105 = arith.constant dense<0.000000e+00> : vector<32x384xf32>
    %279 = tpu.matmul %267, %278, %cst_105 {dimension_numbers = #tpu.dot_dimension_numbers<[1], [0], [0], [1], [0, 0, 1, 1], [], []>} : vector<32x32xf32>, vector<32x384xf32>, vector<32x384xf32> -> vector<32x384xf32>
    %c32_106 = arith.constant 32 : index
    %c0_107 = arith.constant 0 : index
    %280 = vector.load %arg10[%c32_106, %c0_107] : memref<64x384xf32, #tpu.memory_space<vmem>>, vector<32x384xf32>
    %cst_108 = arith.constant dense<0.000000e+00> : vector<32x384xf32>
    %281 = tpu.matmul %268, %280, %cst_108 {dimension_numbers = #tpu.dot_dimension_numbers<[1], [0], [0], [1], [0, 0, 1, 1], [], []>} : vector<32x32xf32>, vector<32x384xf32>, vector<32x384xf32> -> vector<32x384xf32>
    %282 = arith.addf %279, %281 : vector<32x384xf32>
    %c0_109 = arith.constant 0 : index
    %c0_110 = arith.constant 0 : index
    %283 = vector.load %arg12[%c0_109, %c0_110] : memref<1x384xf32, #tpu.memory_space<vmem>>, vector<1x384xf32>
    %284 = vector.broadcast %283 : vector<1x384xf32> to vector<32x384xf32>
    %285 = arith.addf %282, %284 : vector<32x384xf32>
    %c0_111 = arith.constant 0 : index
    %c384_112 = arith.constant 384 : index
    %286 = vector.load %arg21[%c0_111, %c384_112] : memref<32x768xf32, #tpu.memory_space<vmem>>, vector<32x384xf32>
    tpu.vector_store %arg21[%c0_111, %c384_112], %285 {strides = array<i32>} : memref<32x768xf32, #tpu.memory_space<vmem>>, vector<32x384xf32>,
    %c0_113 = arith.constant 0 : index
    %c0_114 = arith.constant 0 : index
    %287 = vector.load %arg13[%c0_113, %c0_114] : memref<32x384xf32, #tpu.memory_space<vmem>>, vector<32x384xf32>
    %c0_115 = arith.constant 0 : index
    %c0_116 = arith.constant 0 : index
    %288 = vector.load %arg14[%c0_115, %c0_116] : memref<32x384xf32, #tpu.memory_space<vmem>>, vector<32x384xf32>
    %c0_117 = arith.constant 0 : index
    %c0_118 = arith.constant 0 : index
    %289 = vector.load %arg15[%c0_117, %c0_118] : memref<1x32xf32, #tpu.memory_space<vmem>>, vector<1x32xf32>
    %290 = vector.shape_cast %289 : vector<1x32xf32> to vector<1x32xf32>
    %291 = vector.broadcast %290 : vector<1x32xf32> to vector<2x32xf32>
    %c0_119 = arith.constant 0 : index
    %c0_120 = arith.constant 0 : index
    %292 = vector.load %arg16[%c0_119, %c0_120] : memref<1x32xf32, #tpu.memory_space<vmem>>, vector<1x32xf32>
    %293 = vector.shape_cast %292 : vector<1x32xf32> to vector<1x32xf32>
    %294 = vector.broadcast %293 : vector<1x32xf32> to vector<2x32xf32>
    %cst_121 = arith.constant 0.000000e+00 : f32
    %295 = vector.broadcast %cst_121 : f32 to vector<2x32xf32>
    %cst_122 = arith.constant 0.000000e+00 : f32
    %296 = vector.broadcast %cst_122 : f32 to vector<2x32xf32>
    %c0_123 = arith.constant 0 : index
    %c0_124 = arith.constant 0 : index
    %297 = vector.load %arg21[%c0_123, %c0_124] : memref<32x768xf32, #tpu.memory_space<vmem>>, vector<2x384xf32>
    %c24_125 = arith.constant 24 : index
    %c384_126 = arith.constant 384 : index
    %298 = vector.load %arg21[%c24_125, %c384_126] : memref<32x768xf32, #tpu.memory_space<vmem>>, vector<2x384xf32>
    %cst_127 = arith.constant dense<0.000000e+00> : vector<2x384xf32>
    %299 = tpu.matmul %295, %287, %cst_127 {dimension_numbers = #tpu.dot_dimension_numbers<[1], [0], [0], [1], [0, 0, 1, 1], [], []>} : vector<2x32xf32>, vector<32x384xf32>, vector<2x384xf32> -> vector<2x384xf32>
    %cst_128 = arith.constant dense<0.000000e+00> : vector<2x384xf32>
    %300 = tpu.matmul %296, %288, %cst_128 {dimension_numbers = #tpu.dot_dimension_numbers<[1], [0], [0], [1], [0, 0, 1, 1], [], []>} : vector<2x32xf32>, vector<32x384xf32>, vector<2x384xf32> -> vector<2x384xf32>
    %301 = vector.extract_strided_slice %297 {offsets = [0, 0], sizes = [2, 32], strides = [1, 1]} : vector<2x384xf32> to vector<2x32xf32>
    %302 = vector.extract_strided_slice %299 {offsets = [0, 0], sizes = [2, 32], strides = [1, 1]} : vector<2x384xf32> to vector<2x32xf32>
    %303 = arith.addf %301, %302 : vector<2x32xf32>
    %304 = arith.negf %303 : vector<2x32xf32>
    %305 = math.exp %304 : vector<2x32xf32>
    %cst_129 = arith.constant 1.000000e+00 : f32
    %306 = vector.broadcast %cst_129 : f32 to vector<2x32xf32>
    %307 = arith.addf %306, %305 : vector<2x32xf32>
    %308 = arith.divf %306, %307 : vector<2x32xf32>
    %309 = vector.extract_strided_slice %297 {offsets = [0, 128], sizes = [2, 32], strides = [1, 1]} : vector<2x384xf32> to vector<2x32xf32>
    %310 = vector.extract_strided_slice %299 {offsets = [0, 128], sizes = [2, 32], strides = [1, 1]} : vector<2x384xf32> to vector<2x32xf32>
    %311 = arith.addf %309, %310 : vector<2x32xf32>
    %312 = arith.negf %311 : vector<2x32xf32>
    %313 = math.exp %312 : vector<2x32xf32>
    %cst_130 = arith.constant 1.000000e+00 : f32
    %314 = vector.broadcast %cst_130 : f32 to vector<2x32xf32>
    %315 = arith.addf %314, %313 : vector<2x32xf32>
    %316 = arith.divf %314, %315 : vector<2x32xf32>
    %317 = vector.extract_strided_slice %297 {offsets = [0, 256], sizes = [2, 32], strides = [1, 1]} : vector<2x384xf32> to vector<2x32xf32>
    %318 = vector.extract_strided_slice %299 {offsets = [0, 256], sizes = [2, 32], strides = [1, 1]} : vector<2x384xf32> to vector<2x32xf32>
    %319 = arith.addf %318, %291 : vector<2x32xf32>
    %320 = arith.mulf %308, %319 : vector<2x32xf32>
    %321 = arith.addf %317, %320 : vector<2x32xf32>
    %322 = math.tanh %321 : vector<2x32xf32>
    %cst_131 = arith.constant 1.000000e+00 : f32
    %323 = vector.broadcast %cst_131 : f32 to vector<2x32xf32>
    %324 = arith.subf %323, %316 : vector<2x32xf32>
    %325 = arith.mulf %324, %322 : vector<2x32xf32>
    %326 = arith.mulf %316, %295 : vector<2x32xf32>
    %327 = arith.addf %325, %326 : vector<2x32xf32>
    %328 = vector.extract_strided_slice %298 {offsets = [0, 0], sizes = [2, 32], strides = [1, 1]} : vector<2x384xf32> to vector<2x32xf32>
    %329 = vector.extract_strided_slice %300 {offsets = [0, 0], sizes = [2, 32], strides = [1, 1]} : vector<2x384xf32> to vector<2x32xf32>
    %330 = arith.addf %328, %329 : vector<2x32xf32>
    %331 = arith.negf %330 : vector<2x32xf32>
    %332 = math.exp %331 : vector<2x32xf32>
    %cst_132 = arith.constant 1.000000e+00 : f32
    %333 = vector.broadcast %cst_132 : f32 to vector<2x32xf32>
    %334 = arith.addf %333, %332 : vector<2x32xf32>
    %335 = arith.divf %333, %334 : vector<2x32xf32>
    %336 = vector.extract_strided_slice %298 {offsets = [0, 128], sizes = [2, 32], strides = [1, 1]} : vector<2x384xf32> to vector<2x32xf32>
    %337 = vector.extract_strided_slice %300 {offsets = [0, 128], sizes = [2, 32], strides = [1, 1]} : vector<2x384xf32> to vector<2x32xf32>
    %338 = arith.addf %336, %337 : vector<2x32xf32>
    %339 = arith.negf %338 : vector<2x32xf32>
    %340 = math.exp %339 : vector<2x32xf32>
    %cst_133 = arith.constant 1.000000e+00 : f32
    %341 = vector.broadcast %cst_133 : f32 to vector<2x32xf32>
    %342 = arith.addf %341, %340 : vector<2x32xf32>
    %343 = arith.divf %341, %342 : vector<2x32xf32>
    %344 = vector.extract_strided_slice %298 {offsets = [0, 256], sizes = [2, 32], strides = [1, 1]} : vector<2x384xf32> to vector<2x32xf32>
    %345 = vector.extract_strided_slice %300 {offsets = [0, 256], sizes = [2, 32], strides = [1, 1]} : vector<2x384xf32> to vector<2x32xf32>
    %346 = arith.addf %345, %294 : vector<2x32xf32>
    %347 = arith.mulf %335, %346 : vector<2x32xf32>
    %348 = arith.addf %344, %347 : vector<2x32xf32>
    %349 = math.tanh %348 : vector<2x32xf32>
    %cst_134 = arith.constant 1.000000e+00 : f32
    %350 = vector.broadcast %cst_134 : f32 to vector<2x32xf32>
    %351 = arith.subf %350, %343 : vector<2x32xf32>
    %352 = arith.mulf %351, %349 : vector<2x32xf32>
    %353 = arith.mulf %343, %296 : vector<2x32xf32>
    %354 = arith.addf %352, %353 : vector<2x32xf32>
    %c8_135 = arith.constant 8 : index
    %c0_136 = arith.constant 0 : index
    %355 = vector.load %arg21[%c8_135, %c0_136] : memref<32x768xf32, #tpu.memory_space<vmem>>, vector<2x384xf32>
    %c16_137 = arith.constant 16 : index
    %c384_138 = arith.constant 384 : index
    %356 = vector.load %arg21[%c16_137, %c384_138] : memref<32x768xf32, #tpu.memory_space<vmem>>, vector<2x384xf32>
    %cst_139 = arith.constant dense<0.000000e+00> : vector<2x384xf32>
    %357 = tpu.matmul %327, %287, %cst_139 {dimension_numbers = #tpu.dot_dimension_numbers<[1], [0], [0], [1], [0, 0, 1, 1], [], []>} : vector<2x32xf32>, vector<32x384xf32>, vector<2x384xf32> -> vector<2x384xf32>
    %cst_140 = arith.constant dense<0.000000e+00> : vector<2x384xf32>
    %358 = tpu.matmul %354, %288, %cst_140 {dimension_numbers = #tpu.dot_dimension_numbers<[1], [0], [0], [1], [0, 0, 1, 1], [], []>} : vector<2x32xf32>, vector<32x384xf32>, vector<2x384xf32> -> vector<2x384xf32>
    %359 = vector.extract_strided_slice %355 {offsets = [0, 0], sizes = [2, 32], strides = [1, 1]} : vector<2x384xf32> to vector<2x32xf32>
    %360 = vector.extract_strided_slice %357 {offsets = [0, 0], sizes = [2, 32], strides = [1, 1]} : vector<2x384xf32> to vector<2x32xf32>
    %361 = arith.addf %359, %360 : vector<2x32xf32>
    %362 = arith.negf %361 : vector<2x32xf32>
    %363 = math.exp %362 : vector<2x32xf32>
    %cst_141 = arith.constant 1.000000e+00 : f32
    %364 = vector.broadcast %cst_141 : f32 to vector<2x32xf32>
    %365 = arith.addf %364, %363 : vector<2x32xf32>
    %366 = arith.divf %364, %365 : vector<2x32xf32>
    %367 = vector.extract_strided_slice %355 {offsets = [0, 128], sizes = [2, 32], strides = [1, 1]} : vector<2x384xf32> to vector<2x32xf32>
    %368 = vector.extract_strided_slice %357 {offsets = [0, 128], sizes = [2, 32], strides = [1, 1]} : vector<2x384xf32> to vector<2x32xf32>
    %369 = arith.addf %367, %368 : vector<2x32xf32>
    %370 = arith.negf %369 : vector<2x32xf32>
    %371 = math.exp %370 : vector<2x32xf32>
    %cst_142 = arith.constant 1.000000e+00 : f32
    %372 = vector.broadcast %cst_142 : f32 to vector<2x32xf32>
    %373 = arith.addf %372, %371 : vector<2x32xf32>
    %374 = arith.divf %372, %373 : vector<2x32xf32>
    %375 = vector.extract_strided_slice %355 {offsets = [0, 256], sizes = [2, 32], strides = [1, 1]} : vector<2x384xf32> to vector<2x32xf32>
    %376 = vector.extract_strided_slice %357 {offsets = [0, 256], sizes = [2, 32], strides = [1, 1]} : vector<2x384xf32> to vector<2x32xf32>
    %377 = arith.addf %376, %291 : vector<2x32xf32>
    %378 = arith.mulf %366, %377 : vector<2x32xf32>
    %379 = arith.addf %375, %378 : vector<2x32xf32>
    %380 = math.tanh %379 : vector<2x32xf32>
    %cst_143 = arith.constant 1.000000e+00 : f32
    %381 = vector.broadcast %cst_143 : f32 to vector<2x32xf32>
    %382 = arith.subf %381, %374 : vector<2x32xf32>
    %383 = arith.mulf %382, %380 : vector<2x32xf32>
    %384 = arith.mulf %374, %327 : vector<2x32xf32>
    %385 = arith.addf %383, %384 : vector<2x32xf32>
    %386 = vector.extract_strided_slice %356 {offsets = [0, 0], sizes = [2, 32], strides = [1, 1]} : vector<2x384xf32> to vector<2x32xf32>
    %387 = vector.extract_strided_slice %358 {offsets = [0, 0], sizes = [2, 32], strides = [1, 1]} : vector<2x384xf32> to vector<2x32xf32>
    %388 = arith.addf %386, %387 : vector<2x32xf32>
    %389 = arith.negf %388 : vector<2x32xf32>
    %390 = math.exp %389 : vector<2x32xf32>
    %cst_144 = arith.constant 1.000000e+00 : f32
    %391 = vector.broadcast %cst_144 : f32 to vector<2x32xf32>
    %392 = arith.addf %391, %390 : vector<2x32xf32>
    %393 = arith.divf %391, %392 : vector<2x32xf32>
    %394 = vector.extract_strided_slice %356 {offsets = [0, 128], sizes = [2, 32], strides = [1, 1]} : vector<2x384xf32> to vector<2x32xf32>
    %395 = vector.extract_strided_slice %358 {offsets = [0, 128], sizes = [2, 32], strides = [1, 1]} : vector<2x384xf32> to vector<2x32xf32>
    %396 = arith.addf %394, %395 : vector<2x32xf32>
    %397 = arith.negf %396 : vector<2x32xf32>
    %398 = math.exp %397 : vector<2x32xf32>
    %cst_145 = arith.constant 1.000000e+00 : f32
    %399 = vector.broadcast %cst_145 : f32 to vector<2x32xf32>
    %400 = arith.addf %399, %398 : vector<2x32xf32>
    %401 = arith.divf %399, %400 : vector<2x32xf32>
    %402 = vector.extract_strided_slice %356 {offsets = [0, 256], sizes = [2, 32], strides = [1, 1]} : vector<2x384xf32> to vector<2x32xf32>
    %403 = vector.extract_strided_slice %358 {offsets = [0, 256], sizes = [2, 32], strides = [1, 1]} : vector<2x384xf32> to vector<2x32xf32>
    %404 = arith.addf %403, %294 : vector<2x32xf32>
    %405 = arith.mulf %393, %404 : vector<2x32xf32>
    %406 = arith.addf %402, %405 : vector<2x32xf32>
    %407 = math.tanh %406 : vector<2x32xf32>
    %cst_146 = arith.constant 1.000000e+00 : f32
    %408 = vector.broadcast %cst_146 : f32 to vector<2x32xf32>
    %409 = arith.subf %408, %401 : vector<2x32xf32>
    %410 = arith.mulf %409, %407 : vector<2x32xf32>
    %411 = arith.mulf %401, %354 : vector<2x32xf32>
    %412 = arith.addf %410, %411 : vector<2x32xf32>
    %c16_147 = arith.constant 16 : index
    %c0_148 = arith.constant 0 : index
    %413 = vector.load %arg21[%c16_147, %c0_148] : memref<32x768xf32, #tpu.memory_space<vmem>>, vector<2x384xf32>
    %c8_149 = arith.constant 8 : index
    %c384_150 = arith.constant 384 : index
    %414 = vector.load %arg21[%c8_149, %c384_150] : memref<32x768xf32, #tpu.memory_space<vmem>>, vector<2x384xf32>
    %cst_151 = arith.constant dense<0.000000e+00> : vector<2x384xf32>
    %415 = tpu.matmul %385, %287, %cst_151 {dimension_numbers = #tpu.dot_dimension_numbers<[1], [0], [0], [1], [0, 0, 1, 1], [], []>} : vector<2x32xf32>, vector<32x384xf32>, vector<2x384xf32> -> vector<2x384xf32>
    %cst_152 = arith.constant dense<0.000000e+00> : vector<2x384xf32>
    %416 = tpu.matmul %412, %288, %cst_152 {dimension_numbers = #tpu.dot_dimension_numbers<[1], [0], [0], [1], [0, 0, 1, 1], [], []>} : vector<2x32xf32>, vector<32x384xf32>, vector<2x384xf32> -> vector<2x384xf32>
    %417 = vector.extract_strided_slice %413 {offsets = [0, 0], sizes = [2, 32], strides = [1, 1]} : vector<2x384xf32> to vector<2x32xf32>
    %418 = vector.extract_strided_slice %415 {offsets = [0, 0], sizes = [2, 32], strides = [1, 1]} : vector<2x384xf32> to vector<2x32xf32>
    %419 = arith.addf %417, %418 : vector<2x32xf32>
    %420 = arith.negf %419 : vector<2x32xf32>
    %421 = math.exp %420 : vector<2x32xf32>
    %cst_153 = arith.constant 1.000000e+00 : f32
    %422 = vector.broadcast %cst_153 : f32 to vector<2x32xf32>
    %423 = arith.addf %422, %421 : vector<2x32xf32>
    %424 = arith.divf %422, %423 : vector<2x32xf32>
    %425 = vector.extract_strided_slice %413 {offsets = [0, 128], sizes = [2, 32], strides = [1, 1]} : vector<2x384xf32> to vector<2x32xf32>
    %426 = vector.extract_strided_slice %415 {offsets = [0, 128], sizes = [2, 32], strides = [1, 1]} : vector<2x384xf32> to vector<2x32xf32>
    %427 = arith.addf %425, %426 : vector<2x32xf32>
    %428 = arith.negf %427 : vector<2x32xf32>
    %429 = math.exp %428 : vector<2x32xf32>
    %cst_154 = arith.constant 1.000000e+00 : f32
    %430 = vector.broadcast %cst_154 : f32 to vector<2x32xf32>
    %431 = arith.addf %430, %429 : vector<2x32xf32>
    %432 = arith.divf %430, %431 : vector<2x32xf32>
    %433 = vector.extract_strided_slice %413 {offsets = [0, 256], sizes = [2, 32], strides = [1, 1]} : vector<2x384xf32> to vector<2x32xf32>
    %434 = vector.extract_strided_slice %415 {offsets = [0, 256], sizes = [2, 32], strides = [1, 1]} : vector<2x384xf32> to vector<2x32xf32>
    %435 = arith.addf %434, %291 : vector<2x32xf32>
    %436 = arith.mulf %424, %435 : vector<2x32xf32>
    %437 = arith.addf %433, %436 : vector<2x32xf32>
    %438 = math.tanh %437 : vector<2x32xf32>
    %cst_155 = arith.constant 1.000000e+00 : f32
    %439 = vector.broadcast %cst_155 : f32 to vector<2x32xf32>
    %440 = arith.subf %439, %432 : vector<2x32xf32>
    %441 = arith.mulf %440, %438 : vector<2x32xf32>
    %442 = arith.mulf %432, %385 : vector<2x32xf32>
    %443 = arith.addf %441, %442 : vector<2x32xf32>
    %444 = vector.extract_strided_slice %414 {offsets = [0, 0], sizes = [2, 32], strides = [1, 1]} : vector<2x384xf32> to vector<2x32xf32>
    %445 = vector.extract_strided_slice %416 {offsets = [0, 0], sizes = [2, 32], strides = [1, 1]} : vector<2x384xf32> to vector<2x32xf32>
    %446 = arith.addf %444, %445 : vector<2x32xf32>
    %447 = arith.negf %446 : vector<2x32xf32>
    %448 = math.exp %447 : vector<2x32xf32>
    %cst_156 = arith.constant 1.000000e+00 : f32
    %449 = vector.broadcast %cst_156 : f32 to vector<2x32xf32>
    %450 = arith.addf %449, %448 : vector<2x32xf32>
    %451 = arith.divf %449, %450 : vector<2x32xf32>
    %452 = vector.extract_strided_slice %414 {offsets = [0, 128], sizes = [2, 32], strides = [1, 1]} : vector<2x384xf32> to vector<2x32xf32>
    %453 = vector.extract_strided_slice %416 {offsets = [0, 128], sizes = [2, 32], strides = [1, 1]} : vector<2x384xf32> to vector<2x32xf32>
    %454 = arith.addf %452, %453 : vector<2x32xf32>
    %455 = arith.negf %454 : vector<2x32xf32>
    %456 = math.exp %455 : vector<2x32xf32>
    %cst_157 = arith.constant 1.000000e+00 : f32
    %457 = vector.broadcast %cst_157 : f32 to vector<2x32xf32>
    %458 = arith.addf %457, %456 : vector<2x32xf32>
    %459 = arith.divf %457, %458 : vector<2x32xf32>
    %460 = vector.extract_strided_slice %414 {offsets = [0, 256], sizes = [2, 32], strides = [1, 1]} : vector<2x384xf32> to vector<2x32xf32>
    %461 = vector.extract_strided_slice %416 {offsets = [0, 256], sizes = [2, 32], strides = [1, 1]} : vector<2x384xf32> to vector<2x32xf32>
    %462 = arith.addf %461, %294 : vector<2x32xf32>
    %463 = arith.mulf %451, %462 : vector<2x32xf32>
    %464 = arith.addf %460, %463 : vector<2x32xf32>
    %465 = math.tanh %464 : vector<2x32xf32>
    %cst_158 = arith.constant 1.000000e+00 : f32
    %466 = vector.broadcast %cst_158 : f32 to vector<2x32xf32>
    %467 = arith.subf %466, %459 : vector<2x32xf32>
    %468 = arith.mulf %467, %465 : vector<2x32xf32>
    %469 = arith.mulf %459, %412 : vector<2x32xf32>
    %470 = arith.addf %468, %469 : vector<2x32xf32>
    %c24_159 = arith.constant 24 : index
    %c0_160 = arith.constant 0 : index
    %471 = vector.load %arg21[%c24_159, %c0_160] : memref<32x768xf32, #tpu.memory_space<vmem>>, vector<2x384xf32>
    %c0_161 = arith.constant 0 : index
    %c384_162 = arith.constant 384 : index
    %472 = vector.load %arg21[%c0_161, %c384_162] : memref<32x768xf32, #tpu.memory_space<vmem>>, vector<2x384xf32>
    %cst_163 = arith.constant dense<0.000000e+00> : vector<2x384xf32>
    %473 = tpu.matmul %443, %287, %cst_163 {dimension_numbers = #tpu.dot_dimension_numbers<[1], [0], [0], [1], [0, 0, 1, 1], [], []>} : vector<2x32xf32>, vector<32x384xf32>, vector<2x384xf32> -> vector<2x384xf32>
    %cst_164 = arith.constant dense<0.000000e+00> : vector<2x384xf32>
    %474 = tpu.matmul %470, %288, %cst_164 {dimension_numbers = #tpu.dot_dimension_numbers<[1], [0], [0], [1], [0, 0, 1, 1], [], []>} : vector<2x32xf32>, vector<32x384xf32>, vector<2x384xf32> -> vector<2x384xf32>
    %475 = vector.extract_strided_slice %471 {offsets = [0, 0], sizes = [2, 32], strides = [1, 1]} : vector<2x384xf32> to vector<2x32xf32>
    %476 = vector.extract_strided_slice %473 {offsets = [0, 0], sizes = [2, 32], strides = [1, 1]} : vector<2x384xf32> to vector<2x32xf32>
    %477 = arith.addf %475, %476 : vector<2x32xf32>
    %478 = arith.negf %477 : vector<2x32xf32>
    %479 = math.exp %478 : vector<2x32xf32>
    %cst_165 = arith.constant 1.000000e+00 : f32
    %480 = vector.broadcast %cst_165 : f32 to vector<2x32xf32>
    %481 = arith.addf %480, %479 : vector<2x32xf32>
    %482 = arith.divf %480, %481 : vector<2x32xf32>
    %483 = vector.extract_strided_slice %471 {offsets = [0, 128], sizes = [2, 32], strides = [1, 1]} : vector<2x384xf32> to vector<2x32xf32>
    %484 = vector.extract_strided_slice %473 {offsets = [0, 128], sizes = [2, 32], strides = [1, 1]} : vector<2x384xf32> to vector<2x32xf32>
    %485 = arith.addf %483, %484 : vector<2x32xf32>
    %486 = arith.negf %485 : vector<2x32xf32>
    %487 = math.exp %486 : vector<2x32xf32>
    %cst_166 = arith.constant 1.000000e+00 : f32
    %488 = vector.broadcast %cst_166 : f32 to vector<2x32xf32>
    %489 = arith.addf %488, %487 : vector<2x32xf32>
    %490 = arith.divf %488, %489 : vector<2x32xf32>
    %491 = vector.extract_strided_slice %471 {offsets = [0, 256], sizes = [2, 32], strides = [1, 1]} : vector<2x384xf32> to vector<2x32xf32>
    %492 = vector.extract_strided_slice %473 {offsets = [0, 256], sizes = [2, 32], strides = [1, 1]} : vector<2x384xf32> to vector<2x32xf32>
    %493 = arith.addf %492, %291 : vector<2x32xf32>
    %494 = arith.mulf %482, %493 : vector<2x32xf32>
    %495 = arith.addf %491, %494 : vector<2x32xf32>
    %496 = math.tanh %495 : vector<2x32xf32>
    %cst_167 = arith.constant 1.000000e+00 : f32
    %497 = vector.broadcast %cst_167 : f32 to vector<2x32xf32>
    %498 = arith.subf %497, %490 : vector<2x32xf32>
    %499 = arith.mulf %498, %496 : vector<2x32xf32>
    %500 = arith.mulf %490, %443 : vector<2x32xf32>
    %501 = arith.addf %499, %500 : vector<2x32xf32>
    %502 = vector.extract_strided_slice %472 {offsets = [0, 0], sizes = [2, 32], strides = [1, 1]} : vector<2x384xf32> to vector<2x32xf32>
    %503 = vector.extract_strided_slice %474 {offsets = [0, 0], sizes = [2, 32], strides = [1, 1]} : vector<2x384xf32> to vector<2x32xf32>
    %504 = arith.addf %502, %503 : vector<2x32xf32>
    %505 = arith.negf %504 : vector<2x32xf32>
    %506 = math.exp %505 : vector<2x32xf32>
    %cst_168 = arith.constant 1.000000e+00 : f32
    %507 = vector.broadcast %cst_168 : f32 to vector<2x32xf32>
    %508 = arith.addf %507, %506 : vector<2x32xf32>
    %509 = arith.divf %507, %508 : vector<2x32xf32>
    %510 = vector.extract_strided_slice %472 {offsets = [0, 128], sizes = [2, 32], strides = [1, 1]} : vector<2x384xf32> to vector<2x32xf32>
    %511 = vector.extract_strided_slice %474 {offsets = [0, 128], sizes = [2, 32], strides = [1, 1]} : vector<2x384xf32> to vector<2x32xf32>
    %512 = arith.addf %510, %511 : vector<2x32xf32>
    %513 = arith.negf %512 : vector<2x32xf32>
    %514 = math.exp %513 : vector<2x32xf32>
    %cst_169 = arith.constant 1.000000e+00 : f32
    %515 = vector.broadcast %cst_169 : f32 to vector<2x32xf32>
    %516 = arith.addf %515, %514 : vector<2x32xf32>
    %517 = arith.divf %515, %516 : vector<2x32xf32>
    %518 = vector.extract_strided_slice %472 {offsets = [0, 256], sizes = [2, 32], strides = [1, 1]} : vector<2x384xf32> to vector<2x32xf32>
    %519 = vector.extract_strided_slice %474 {offsets = [0, 256], sizes = [2, 32], strides = [1, 1]} : vector<2x384xf32> to vector<2x32xf32>
    %520 = arith.addf %519, %294 : vector<2x32xf32>
    %521 = arith.mulf %509, %520 : vector<2x32xf32>
    %522 = arith.addf %518, %521 : vector<2x32xf32>
    %523 = math.tanh %522 : vector<2x32xf32>
    %cst_170 = arith.constant 1.000000e+00 : f32
    %524 = vector.broadcast %cst_170 : f32 to vector<2x32xf32>
    %525 = arith.subf %524, %517 : vector<2x32xf32>
    %526 = arith.mulf %525, %523 : vector<2x32xf32>
    %527 = arith.mulf %517, %470 : vector<2x32xf32>
    %528 = arith.addf %526, %527 : vector<2x32xf32>
    %c0_171 = arith.constant 0 : index
    %c0_172 = arith.constant 0 : index
    %529 = vector.load %arg17[%c0_171, %c0_172] : memref<32x3xf32, #tpu.memory_space<vmem>>, vector<32x3xf32>
    %cst_173 = arith.constant dense<0.000000e+00> : vector<2x3xf32>
    %530 = tpu.matmul %501, %529, %cst_173 {dimension_numbers = #tpu.dot_dimension_numbers<[1], [0], [0], [1], [0, 0, 1, 1], [], []>} : vector<2x32xf32>, vector<32x3xf32>, vector<2x3xf32> -> vector<2x3xf32>
    %c0_174 = arith.constant 0 : index
    %c0_175 = arith.constant 0 : index
    %531 = vector.load %arg18[%c0_174, %c0_175] : memref<32x3xf32, #tpu.memory_space<vmem>>, vector<32x3xf32>
    %cst_176 = arith.constant dense<0.000000e+00> : vector<2x3xf32>
    %532 = tpu.matmul %528, %531, %cst_176 {dimension_numbers = #tpu.dot_dimension_numbers<[1], [0], [0], [1], [0, 0, 1, 1], [], []>} : vector<2x32xf32>, vector<32x3xf32>, vector<2x3xf32> -> vector<2x3xf32>
    %533 = arith.addf %530, %532 : vector<2x3xf32>
    %c0_177 = arith.constant 0 : index
    %c0_178 = arith.constant 0 : index
    %534 = vector.load %arg19[%c0_177, %c0_178] : memref<1x3xf32, #tpu.memory_space<vmem>>, vector<1x3xf32>
    %535 = vector.broadcast %534 : vector<1x3xf32> to vector<2x3xf32>
    %536 = arith.addf %533, %535 : vector<2x3xf32>
    %c0_179 = arith.constant 0 : index
    %c0_180 = arith.constant 0 : index
    %537 = vector.load %arg20[%c0_179, %c0_180] : memref<2x3xf32, #tpu.memory_space<vmem>>, vector<2x3xf32>
    tpu.vector_store %arg20[%c0_179, %c0_180], %536 {strides = array<i32>} : memref<2x3xf32, #tpu.memory_space<vmem>>, vector<2x3xf32>,
    return
  }
}

</mosaic_0001>

<llo_original>
// kernel: torch_rnn_model_forward.1
$region0: #{torch_rnn_model_forward.1}
  #allocation0 [shape = 'u32[]', space=smem, size = 0x4, offset = 0x4, fixed_abs, tag = 'smem constant byte address 0x4 - core index']
  #allocation1 [shape = 'u32[144,128]{1,0:T(1,128)}', space=vmem, size = 0x12000, scoped, tag = 'internal scratch']
  #allocation2 [shape = 'f32[32,768]{1,0:T(8,128)}', space=vmem, size = 0x18000, scoped, tag = 'scratch operand']
  #allocation3 [shape = 'f32[32,32]{1,0:T(8,128)}', space=vmem, size = 0x4000, scoped, tag = 'scratch operand']
  #allocation4 [shape = 'f32[32,32]{1,0:T(8,128)}', space=vmem, size = 0x4000, scoped, tag = 'scratch operand']
  %s0 = inlined_call_operand.vmem [shape: f32[32,20], index: 0, kind: input, shape index: {}]
  %s1 = inlined_call_operand.hbm [shape: f32[20,384], index: 1, kind: input, shape index: {}]
  %s2 = inlined_call_operand.hbm [shape: f32[20,384], index: 2, kind: input, shape index: {}]
  %s3 = inlined_call_operand.hbm [shape: f32[1,384], index: 3, kind: input, shape index: {}]
  %s4 = inlined_call_operand.hbm [shape: f32[1,384], index: 4, kind: input, shape index: {}]
  %s5 = inlined_call_operand.vmem [shape: f32[32,384], index: 5, kind: input, shape index: {}]
  %s6 = inlined_call_operand.hbm [shape: f32[32,384], index: 6, kind: input, shape index: {}]
  %s7 = inlined_call_operand.vmem [shape: f32[1,32], index: 7, kind: input, shape index: {}]
  %s8 = inlined_call_operand.hbm [shape: f32[1,32], index: 8, kind: input, shape index: {}]
  %s9 = inlined_call_operand.vmem [shape: f32[64,384], index: 9, kind: input, shape index: {}]
  %s10 = inlined_call_operand.hbm [shape: f32[64,384], index: 10, kind: input, shape index: {}]
  %s11 = inlined_call_operand.hbm [shape: f32[1,384], index: 11, kind: input, shape index: {}]
  %s12 = inlined_call_operand.hbm [shape: f32[1,384], index: 12, kind: input, shape index: {}]
  %s13 = inlined_call_operand.vmem [shape: f32[32,384], index: 13, kind: input, shape index: {}]
  %s14 = inlined_call_operand.hbm [shape: f32[32,384], index: 14, kind: input, shape index: {}]
  %s15 = inlined_call_operand.hbm [shape: f32[1,32], index: 15, kind: input, shape index: {}]
  %s16 = inlined_call_operand.hbm [shape: f32[1,32], index: 16, kind: input, shape index: {}]
  %s17 = inlined_call_operand.vmem [shape: f32[32,3], index: 17, kind: input, shape index: {}]
  %s18 = inlined_call_operand.vmem [shape: f32[32,3], index: 18, kind: input, shape index: {}]
  %s19 = inlined_call_operand.hbm [shape: f32[1,3], index: 19, kind: input, shape index: {}]
  %s20 = inlined_call_operand.hbm [shape: f32[2,3], index: 20, kind: output, shape index: {}]
  %s21 = sld [smem:[#allocation0]]
  $region142: #{torch_rnn_model_forward.1} parent=0
    _
  %s23 = ssub.s32 1, %s21
  %s24 = scalar_select 0, %s23, %s21
  $region1: #{torch_rnn_model_forward.1} parent=0
    #allocation5 [shape = 'u8[36864]{0}', space=vmem, size = 0x9000, scoped, tag = 'input window, operand 1, single buffered']
    #allocation6 [shape = 's32[1]{0}', space=sflag, size = 0x4, scoped, tag = 'scoped memory for torch_rnn_model_forward.1']
    #allocation7 [shape = 's32[1]{0}', space=sflag, size = 0x4, scoped, tag = 'scoped memory for torch_rnn_model_forward.1']
    #allocation8 [shape = 'u8[36864]{0}', space=vmem, size = 0x9000, scoped, tag = 'input window, operand 2, single buffered']
    #allocation9 [shape = 's32[1]{0}', space=sflag, size = 0x4, scoped, tag = 'scoped memory for torch_rnn_model_forward.1']
    #allocation10 [shape = 'u8[1536]{0}', space=vmem, size = 0x800, scoped, tag = 'input window, operand 3, single buffered']
    #allocation11 [shape = 'u8[1536]{0}', space=vmem, size = 0x800, scoped, tag = 'input window, operand 4, single buffered']
    #allocation12 [shape = 's32[1]{0}', space=sflag, size = 0x4, scoped, tag = 'scoped memory for torch_rnn_model_forward.1']
    #allocation13 [shape = 'u8[49152]{0}', space=vmem, size = 0xc000, scoped, tag = 'input window, operand 6, single buffered']
    #allocation14 [shape = 'u8[512]{0}', space=vmem, size = 0x400, scoped, tag = 'input window, operand 8, single buffered']
    #allocation15 [shape = 's32[1]{0}', space=sflag, size = 0x4, scoped, tag = 'scoped memory for torch_rnn_model_forward.1']
    #allocation16 [shape = 'u8[98304]{0}', space=vmem, size = 0x18000, scoped, tag = 'input window, operand 10, single buffered']
    #allocation17 [shape = 'u8[1536]{0}', space=vmem, size = 0x800, scoped, tag = 'input window, operand 11, single buffered']
    #allocation18 [shape = 's32[1]{0}', space=sflag, size = 0x4, scoped, tag = 'scoped memory for torch_rnn_model_forward.1']
    #allocation19 [shape = 'u8[1536]{0}', space=vmem, size = 0x800, scoped, tag = 'input window, operand 12, single buffered']
    #allocation20 [shape = 'u8[49152]{0}', space=vmem, size = 0xc000, scoped, tag = 'input window, operand 14, single buffered']
    #allocation21 [shape = 's32[1]{0}', space=sflag, size = 0x4, scoped, tag = 'scoped memory for torch_rnn_model_forward.1']
    #allocation22 [shape = 'u8[512]{0}', space=vmem, size = 0x400, scoped, tag = 'input window, operand 15, single buffered']
    #allocation23 [shape = 'u8[512]{0}', space=vmem, size = 0x400, scoped, tag = 'input window, operand 16, single buffered']
    #allocation24 [shape = 's32[1]{0}', space=sflag, size = 0x4, scoped, tag = 'scoped memory for torch_rnn_model_forward.1']
    #allocation25 [shape = 'u8[512]{0}', space=vmem, size = 0x400, scoped, tag = 'input window, operand 19, single buffered']
    #allocation26 [shape = 'u8[1024]{0}', space=vmem, size = 0x400, scoped, tag = 'output window, operand 0, single buffered']
    %25 = vsyncpa [#allocation6], 0
    %26 = vsyncpa [#allocation9], 0
    %27 = vsyncpa [#allocation12], 0
    %28 = vsyncpa [#allocation15], 0
    %29 = vsyncpa [#allocation18], 0
    %30 = vsyncpa [#allocation21], 0
    %31 = vsyncpa [#allocation24], 0
    %32 = vsyncpa [#allocation7], 0
    // Predicated region
    $region2: #{torch_rnn_model_forward.1} parent=1 // pred_check
      _
    $region3: #{torch_rnn_model_forward.1} parent=1 // pred_check_branch
      %34 = sbr.rel (0) target = $region5
    $region4: #{torch_rnn_model_forward.1} parent=1 // pred_region
      _
    $region5: #{torch_rnn_model_forward.1} parent=1 // pred_fallthru
      _
    // Predicated region
    $region6: #{torch_rnn_model_forward.1} parent=1 // pred_check
      _
    $region7: #{torch_rnn_model_forward.1} parent=1 // pred_check_branch
      %36 = sbr.rel (0) target = $region9
    $region8: #{torch_rnn_model_forward.1} parent=1 // pred_region
      %s38 = ssub.s32 1152, 1152
      %39 = vsyncadd [#allocation6], %s38
      %s40 = sshll.u32 [#allocation5], 4
      %s41 = int_to_ptr.vmem [resolvable:$true] %s40
      %46 = dma.hbm_to_vmem [thread:$0]  %s1, 1152, %s41, [#allocation6], 384, 384, 24
    $region9: #{torch_rnn_model_forward.1} parent=1 // pred_fallthru
      _
    // Predicated region
    $region10: #{torch_rnn_model_forward.1} parent=1 // pred_check
      _
    $region11: #{torch_rnn_model_forward.1} parent=1 // pred_check_branch
      %48 = sbr.rel (0) target = $region13
    $region12: #{torch_rnn_model_forward.1} parent=1 // pred_region
      %s50 = ssub.s32 1152, 1152
      %51 = vsyncadd [#allocation9], %s50
      %s52 = sshll.u32 [#allocation8], 4
      %s53 = int_to_ptr.vmem [resolvable:$true] %s52
      %58 = dma.hbm_to_vmem [thread:$0]  %s2, 1152, %s53, [#allocation9], 384, 384, 24
    $region13: #{torch_rnn_model_forward.1} parent=1 // pred_fallthru
      _
    // Predicated region
    $region14: #{torch_rnn_model_forward.1} parent=1 // pred_check
      _
    $region15: #{torch_rnn_model_forward.1} parent=1 // pred_check_branch
      %60 = sbr.rel (0) target = $region17
    $region16: #{torch_rnn_model_forward.1} parent=1 // pred_region
      %s62 = ssub.s32 48, 48
      %63 = vsyncadd [#allocation9], %s62
      %s65 = sshll.u32 [#allocation10], 4
      %s66 = int_to_ptr.vmem [resolvable:$true] %s65
      %68 = dma.hbm_to_vmem [thread:$0]  %s3, 48, %s66, [#allocation9]
    $region17: #{torch_rnn_model_forward.1} parent=1 // pred_fallthru
      _
    // Predicated region
    $region18: #{torch_rnn_model_forward.1} parent=1 // pred_check
      _
    $region19: #{torch_rnn_model_forward.1} parent=1 // pred_check_branch
      %70 = sbr.rel (0) target = $region21
    $region20: #{torch_rnn_model_forward.1} parent=1 // pred_region
      %s72 = ssub.s32 48, 48
      %73 = vsyncadd [#allocation12], %s72
      %s75 = sshll.u32 [#allocation11], 4
      %s76 = int_to_ptr.vmem [resolvable:$true] %s75
      %78 = dma.hbm_to_vmem [thread:$0]  %s4, 48, %s76, [#allocation12]
    $region21: #{torch_rnn_model_forward.1} parent=1 // pred_fallthru
      _
    // Predicated region
    $region22: #{torch_rnn_model_forward.1} parent=1 // pred_check
      _
    $region23: #{torch_rnn_model_forward.1} parent=1 // pred_check_branch
      %80 = sbr.rel (0) target = $region25
    $region24: #{torch_rnn_model_forward.1} parent=1 // pred_region
      _
    $region25: #{torch_rnn_model_forward.1} parent=1 // pred_fallthru
      _
    // Predicated region
    $region26: #{torch_rnn_model_forward.1} parent=1 // pred_check
      _
    $region27: #{torch_rnn_model_forward.1} parent=1 // pred_check_branch
      %82 = sbr.rel (0) target = $region29
    $region28: #{torch_rnn_model_forward.1} parent=1 // pred_region
      %s84 = ssub.s32 1536, 1536
      %85 = vsyncadd [#allocation12], %s84
      %s86 = sshll.u32 [#allocation13], 4
      %s87 = int_to_ptr.vmem [resolvable:$true] %s86
      %92 = dma.hbm_to_vmem [thread:$0]  %s6, 1536, %s87, [#allocation12], 384, 384, 24
    $region29: #{torch_rnn_model_forward.1} parent=1 // pred_fallthru
      _
    // Predicated region
    $region30: #{torch_rnn_model_forward.1} parent=1 // pred_check
      _
    $region31: #{torch_rnn_model_forward.1} parent=1 // pred_check_branch
      %94 = sbr.rel (0) target = $region33
    $region32: #{torch_rnn_model_forward.1} parent=1 // pred_region
      _
    $region33: #{torch_rnn_model_forward.1} parent=1 // pred_fallthru
      _
    // Predicated region
    $region34: #{torch_rnn_model_forward.1} parent=1 // pred_check
      _
    $region35: #{torch_rnn_model_forward.1} parent=1 // pred_check_branch
      %96 = sbr.rel (0) target = $region37
    $region36: #{torch_rnn_model_forward.1} parent=1 // pred_region
      %s98 = ssub.s32 16, 16
      %99 = vsyncadd [#allocation15], %s98
      %s101 = sshll.u32 [#allocation14], 4
      %s102 = int_to_ptr.vmem [resolvable:$true] %s101
      %104 = dma.hbm_to_vmem [thread:$0]  %s8, 16, %s102, [#allocation15]
    $region37: #{torch_rnn_model_forward.1} parent=1 // pred_fallthru
      _
    // Predicated region
    $region38: #{torch_rnn_model_forward.1} parent=1 // pred_check
      _
    $region39: #{torch_rnn_model_forward.1} parent=1 // pred_check_branch
      %106 = sbr.rel (0) target = $region41
    $region40: #{torch_rnn_model_forward.1} parent=1 // pred_region
      _
    $region41: #{torch_rnn_model_forward.1} parent=1 // pred_fallthru
      _
    // Predicated region
    $region42: #{torch_rnn_model_forward.1} parent=1 // pred_check
      _
    $region43: #{torch_rnn_model_forward.1} parent=1 // pred_check_branch
      %108 = sbr.rel (0) target = $region45
    $region44: #{torch_rnn_model_forward.1} parent=1 // pred_region
      %s110 = ssub.s32 3072, 3072
      %111 = vsyncadd [#allocation15], %s110
      %s112 = sshll.u32 [#allocation16], 4
      %s113 = int_to_ptr.vmem [resolvable:$true] %s112
      %118 = dma.hbm_to_vmem [thread:$0]  %s10, 3072, %s113, [#allocation15], 384, 384, 24
    $region45: #{torch_rnn_model_forward.1} parent=1 // pred_fallthru
      _
    // Predicated region
    $region46: #{torch_rnn_model_forward.1} parent=1 // pred_check
      _
    $region47: #{torch_rnn_model_forward.1} parent=1 // pred_check_branch
      %120 = sbr.rel (0) target = $region49
    $region48: #{torch_rnn_model_forward.1} parent=1 // pred_region
      %s122 = ssub.s32 48, 48
      %123 = vsyncadd [#allocation18], %s122
      %s125 = sshll.u32 [#allocation17], 4
      %s126 = int_to_ptr.vmem [resolvable:$true] %s125
      %128 = dma.hbm_to_vmem [thread:$0]  %s11, 48, %s126, [#allocation18]
    $region49: #{torch_rnn_model_forward.1} parent=1 // pred_fallthru
      _
    // Predicated region
    $region50: #{torch_rnn_model_forward.1} parent=1 // pred_check
      _
    $region51: #{torch_rnn_model_forward.1} parent=1 // pred_check_branch
      %130 = sbr.rel (0) target = $region53
    $region52: #{torch_rnn_model_forward.1} parent=1 // pred_region
      %s132 = ssub.s32 48, 48
      %133 = vsyncadd [#allocation18], %s132
      %s135 = sshll.u32 [#allocation19], 4
      %s136 = int_to_ptr.vmem [resolvable:$true] %s135
      %138 = dma.hbm_to_vmem [thread:$0]  %s12, 48, %s136, [#allocation18]
    $region53: #{torch_rnn_model_forward.1} parent=1 // pred_fallthru
      _
    // Predicated region
    $region54: #{torch_rnn_model_forward.1} parent=1 // pred_check
      _
    $region55: #{torch_rnn_model_forward.1} parent=1 // pred_check_branch
      %140 = sbr.rel (0) target = $region57
    $region56: #{torch_rnn_model_forward.1} parent=1 // pred_region
      _
    $region57: #{torch_rnn_model_forward.1} parent=1 // pred_fallthru
      _
    // Predicated region
    $region58: #{torch_rnn_model_forward.1} parent=1 // pred_check
      _
    $region59: #{torch_rnn_model_forward.1} parent=1 // pred_check_branch
      %142 = sbr.rel (0) target = $region61
    $region60: #{torch_rnn_model_forward.1} parent=1 // pred_region
      %s144 = ssub.s32 1536, 1536
      %145 = vsyncadd [#allocation21], %s144
      %s146 = sshll.u32 [#allocation20], 4
      %s147 = int_to_ptr.vmem [resolvable:$true] %s146
      %152 = dma.hbm_to_vmem [thread:$0]  %s14, 1536, %s147, [#allocation21], 384, 384, 24
    $region61: #{torch_rnn_model_forward.1} parent=1 // pred_fallthru
      _
    // Predicated region
    $region62: #{torch_rnn_model_forward.1} parent=1 // pred_check
      _
    $region63: #{torch_rnn_model_forward.1} parent=1 // pred_check_branch
      %154 = sbr.rel (0) target = $region65
    $region64: #{torch_rnn_model_forward.1} parent=1 // pred_region
      %s156 = ssub.s32 16, 16
      %157 = vsyncadd [#allocation21], %s156
      %s159 = sshll.u32 [#allocation22], 4
      %s160 = int_to_ptr.vmem [resolvable:$true] %s159
      %162 = dma.hbm_to_vmem [thread:$0]  %s15, 16, %s160, [#allocation21]
    $region65: #{torch_rnn_model_forward.1} parent=1 // pred_fallthru
      _
    // Predicated region
    $region66: #{torch_rnn_model_forward.1} parent=1 // pred_check
      _
    $region67: #{torch_rnn_model_forward.1} parent=1 // pred_check_branch
      %164 = sbr.rel (0) target = $region69
    $region68: #{torch_rnn_model_forward.1} parent=1 // pred_region
      %s166 = ssub.s32 16, 16
      %167 = vsyncadd [#allocation24], %s166
      %s169 = sshll.u32 [#allocation23], 4
      %s170 = int_to_ptr.vmem [resolvable:$true] %s169
      %172 = dma.hbm_to_vmem [thread:$0]  %s16, 16, %s170, [#allocation24]
    $region69: #{torch_rnn_model_forward.1} parent=1 // pred_fallthru
      _
    // Predicated region
    $region70: #{torch_rnn_model_forward.1} parent=1 // pred_check
      _
    $region71: #{torch_rnn_model_forward.1} parent=1 // pred_check_branch
      %174 = sbr.rel (0) target = $region73
    $region72: #{torch_rnn_model_forward.1} parent=1 // pred_region
      _
    $region73: #{torch_rnn_model_forward.1} parent=1 // pred_fallthru
      _
    // Predicated region
    $region74: #{torch_rnn_model_forward.1} parent=1 // pred_check
      _
    $region75: #{torch_rnn_model_forward.1} parent=1 // pred_check_branch
      %176 = sbr.rel (0) target = $region77
    $region76: #{torch_rnn_model_forward.1} parent=1 // pred_region
      _
    $region77: #{torch_rnn_model_forward.1} parent=1 // pred_fallthru
      _
    // Predicated region
    $region78: #{torch_rnn_model_forward.1} parent=1 // pred_check
      _
    $region79: #{torch_rnn_model_forward.1} parent=1 // pred_check_branch
      %178 = sbr.rel (0) target = $region81
    $region80: #{torch_rnn_model_forward.1} parent=1 // pred_region
      %s180 = ssub.s32 16, 16
      %181 = vsyncadd [#allocation24], %s180
      %s183 = sshll.u32 [#allocation25], 4
      %s184 = int_to_ptr.vmem [resolvable:$true] %s183
      %186 = dma.hbm_to_vmem [thread:$0]  %s19, 16, %s184, [#allocation24]
    $region81: #{torch_rnn_model_forward.1} parent=1 // pred_fallthru
      _
    // Predicated region
    $region82: #{torch_rnn_model_forward.1} parent=1 // pred_check
      _
    $region83: #{torch_rnn_model_forward.1} parent=1 // pred_check_branch
      %188 = sbr.rel (0) target = $region85
    $region84: #{torch_rnn_model_forward.1} parent=1 // pred_region
      %189 = dma.done [#allocation6], 1152
    $region85: #{torch_rnn_model_forward.1} parent=1 // pred_fallthru
      _
    // Predicated region
    $region86: #{torch_rnn_model_forward.1} parent=1 // pred_check
      _
    $region87: #{torch_rnn_model_forward.1} parent=1 // pred_check_branch
      %191 = sbr.rel (0) target = $region89
    $region88: #{torch_rnn_model_forward.1} parent=1 // pred_region
      %192 = dma.done [#allocation9], 1152
    $region89: #{torch_rnn_model_forward.1} parent=1 // pred_fallthru
      _
    // Predicated region
    $region90: #{torch_rnn_model_forward.1} parent=1 // pred_check
      _
    $region91: #{torch_rnn_model_forward.1} parent=1 // pred_check_branch
      %194 = sbr.rel (0) target = $region93
    $region92: #{torch_rnn_model_forward.1} parent=1 // pred_region
      %195 = dma.done [#allocation9], 48
    $region93: #{torch_rnn_model_forward.1} parent=1 // pred_fallthru
      _
    // Predicated region
    $region94: #{torch_rnn_model_forward.1} parent=1 // pred_check
      _
    $region95: #{torch_rnn_model_forward.1} parent=1 // pred_check_branch
      %197 = sbr.rel (0) target = $region97
    $region96: #{torch_rnn_model_forward.1} parent=1 // pred_region
      %198 = dma.done [#allocation12], 48
    $region97: #{torch_rnn_model_forward.1} parent=1 // pred_fallthru
      _
    // Predicated region
    $region98: #{torch_rnn_model_forward.1} parent=1 // pred_check
      _
    $region99: #{torch_rnn_model_forward.1} parent=1 // pred_check_branch
      %200 = sbr.rel (0) target = $region101
    $region100: #{torch_rnn_model_forward.1} parent=1 // pred_region
      %201 = dma.done [#allocation12], 1536
    $region101: #{torch_rnn_model_forward.1} parent=1 // pred_fallthru
      _
    // Predicated region
    $region102: #{torch_rnn_model_forward.1} parent=1 // pred_check
      _
    $region103: #{torch_rnn_model_forward.1} parent=1 // pred_check_branch
      %203 = sbr.rel (0) target = $region105
    $region104: #{torch_rnn_model_forward.1} parent=1 // pred_region
      %204 = dma.done [#allocation15], 16
    $region105: #{torch_rnn_model_forward.1} parent=1 // pred_fallthru
      _
    // Predicated region
    $region106: #{torch_rnn_model_forward.1} parent=1 // pred_check
      _
    $region107: #{torch_rnn_model_forward.1} parent=1 // pred_check_branch
      %206 = sbr.rel (0) target = $region109
    $region108: #{torch_rnn_model_forward.1} parent=1 // pred_region
      %207 = dma.done [#allocation15], 3072
    $region109: #{torch_rnn_model_forward.1} parent=1 // pred_fallthru
      _
    // Predicated region
    $region110: #{torch_rnn_model_forward.1} parent=1 // pred_check
      _
    $region111: #{torch_rnn_model_forward.1} parent=1 // pred_check_branch
      %209 = sbr.rel (0) target = $region113
    $region112: #{torch_rnn_model_forward.1} parent=1 // pred_region
      %210 = dma.done [#allocation18], 48
    $region113: #{torch_rnn_model_forward.1} parent=1 // pred_fallthru
      _
    // Predicated region
    $region114: #{torch_rnn_model_forward.1} parent=1 // pred_check
      _
    $region115: #{torch_rnn_model_forward.1} parent=1 // pred_check_branch
      %212 = sbr.rel (0) target = $region117
    $region116: #{torch_rnn_model_forward.1} parent=1 // pred_region
      %213 = dma.done [#allocation18], 48
    $region117: #{torch_rnn_model_forward.1} parent=1 // pred_fallthru
      _
    // Predicated region
    $region118: #{torch_rnn_model_forward.1} parent=1 // pred_check
      _
    $region119: #{torch_rnn_model_forward.1} parent=1 // pred_check_branch
      %215 = sbr.rel (0) target = $region121
    $region120: #{torch_rnn_model_forward.1} parent=1 // pred_region
      %216 = dma.done [#allocation21], 1536
    $region121: #{torch_rnn_model_forward.1} parent=1 // pred_fallthru
      _
    // Predicated region
    $region122: #{torch_rnn_model_forward.1} parent=1 // pred_check
      _
    $region123: #{torch_rnn_model_forward.1} parent=1 // pred_check_branch
      %218 = sbr.rel (0) target = $region125
    $region124: #{torch_rnn_model_forward.1} parent=1 // pred_region
      %219 = dma.done [#allocation21], 16
    $region125: #{torch_rnn_model_forward.1} parent=1 // pred_fallthru
      _
    // Predicated region
    $region126: #{torch_rnn_model_forward.1} parent=1 // pred_check
      _
    $region127: #{torch_rnn_model_forward.1} parent=1 // pred_check_branch
      %221 = sbr.rel (0) target = $region129
    $region128: #{torch_rnn_model_forward.1} parent=1 // pred_region
      %222 = dma.done [#allocation24], 16
    $region129: #{torch_rnn_model_forward.1} parent=1 // pred_fallthru
      _
    // Predicated region
    $region130: #{torch_rnn_model_forward.1} parent=1 // pred_check
      _
    $region131: #{torch_rnn_model_forward.1} parent=1 // pred_check_branch
      %224 = sbr.rel (0) target = $region133
    $region132: #{torch_rnn_model_forward.1} parent=1 // pred_region
      %225 = dma.done [#allocation24], 16
    $region133: #{torch_rnn_model_forward.1} parent=1 // pred_fallthru
      _
    %v226 = vld [vmem:[%s0] sm:$0xff]
    %v227 = vld [vmem:[%s0 + $0x8] sm:$0xff]
    %v228 = vld [vmem:[%s0 + $0x10] sm:$0xff]
    %v229 = vld [vmem:[%s0 + $0x18] sm:$0xff]
    %v230 = vld [vmem:[#allocation5] sm:$0xff]
    %v231 = vld [vmem:[#allocation5 + $0x8] sm:$0xff]
    %v232 = vld [vmem:[#allocation5 + $0x10] sm:$0xff]
    %v233 = vld [vmem:[#allocation5 + $0x18] sm:$0xff]
    %v234 = vld [vmem:[#allocation5 + $0x20] sm:$0xff]
    %v235 = vld [vmem:[#allocation5 + $0x28] sm:$0xff]
    %v236 = vld [vmem:[#allocation5 + $0x30] sm:$0xf]
    %v237 = vld [vmem:[#allocation5 + $0x38] sm:$0xf]
    %v238 = vld [vmem:[#allocation5 + $0x40] sm:$0xf]
    %v239 = vld [vmem:[#allocation10] sm:$0x7]
    %v241 = vlaneseq
    %v242 = vshrl.u32 %v241, 7
    %v243 = vsub.s32 0, %v242
    %v244 = vrot.slane %v239, %v243
    %v245 = vlaneseq
    %v246 = vshrl.u32 %v245, 7
    %v247 = vsub.s32 1, %v246
    %v248 = vrot.slane %v239, %v247
    %v249 = vlaneseq
    %v250 = vshrl.u32 %v249, 7
    %v251 = vsub.s32 2, %v250
    %v252 = vrot.slane %v239, %v251
    %vm256 = vcmask 162816
    %v258 = vsel %vm256, %v226, 0
    %v261 = vsel %vm256, %v227, 0
    %v264 = vsel %vm256, %v228, 0
    %v267 = vsel %vm256, %v229, 0
    %vm269 = vcmask 1043456
    %v271 = vsel %vm269, %v236, 0
    %v274 = vsel %vm269, %v237, 0
    %v277 = vsel %vm269, %v238, 0
    %279 = vmatprep.subr.mxu0 0.0
    %280 = vmatpush1.msra.mxu0 0.0
    %281 = vmatprep.subr.mxu0 0.0
    %282 = vmatpush1.msra.mxu0 0.0
    %283 = vmatprep.subr.mxu0 0.0
    %284 = vmatpush1.msra.mxu0 0.0
    %285 = vmatprep.subr.mxu0 0.0
    %286 = vmatpush1.msra.mxu0 0.0
    %287 = vmatprep.subr.mxu0 0.0
    %288 = vmatpush1.msra.mxu0 0.0
    %289 = vmatprep.subr.mxu0 0.0
    %290 = vmatpush1.msra.mxu0 0.0
    %291 = vmatprep.subr.mxu0 0.0
    %292 = vmatpush1.msra.mxu0 0.0
    %293 = vmatprep.subr.mxu0 0.0
    %294 = vmatpush1.msra.mxu0 0.0
    %295 = vmatprep.subr.mxu0 0.0
    %296 = vmatpush1.msra.mxu0 0.0
    %297 = vmatprep.subr.mxu0 0.0
    %298 = vmatpush1.msra.mxu0 0.0
    %299 = vmatprep.subr.mxu0 0.0
    %300 = vmatpush1.msra.mxu0 0.0
    %301 = vmatprep.subr.mxu0 0.0
    %302 = vmatpush1.msra.mxu0 0.0
    %303 = vmatprep.subr.mxu0 0.0
    %304 = vmatpush1.msra.mxu0 0.0
    %305 = vmatprep.subr.mxu0 %v274
    %306 = vmatpush1.msra.mxu0 %v271
    %307 = vmatprep.subr.mxu0 %v234
    %308 = vmatpush1.msra.mxu0 %v233
    %309 = vmatprep.subr.mxu0 %v231
    %310 = vmatpush1.msra.mxu0 %v230
    %311 = vmatprep.subr.mxu0 0.0
    %312 = vmatpush2.msra.mxu0 0.0
    %313 = vmatprep.subr.mxu0 0.0
    %314 = vmatpush2.msra.mxu0 0.0
    %315 = vmatprep.subr.mxu0 0.0
    %316 = vmatpush2.msra.mxu0 0.0
    %317 = vmatprep.subr.mxu0 0.0
    %318 = vmatpush2.msra.mxu0 0.0
    %319 = vmatprep.subr.mxu0 0.0
    %320 = vmatpush2.msra.mxu0 0.0
    %321 = vmatprep.subr.mxu0 0.0
    %322 = vmatpush2.msra.mxu0 0.0
    %323 = vmatprep.subr.mxu0 0.0
    %324 = vmatpush2.msra.mxu0 0.0
    %325 = vmatprep.subr.mxu0 0.0
    %326 = vmatpush2.msra.mxu0 0.0
    %327 = vmatprep.subr.mxu0 0.0
    %328 = vmatpush2.msra.mxu0 0.0
    %329 = vmatprep.subr.mxu0 0.0
    %330 = vmatpush2.msra.mxu0 0.0
    %331 = vmatprep.subr.mxu0 0.0
    %332 = vmatpush2.msra.mxu0 0.0
    %333 = vmatprep.subr.mxu0 0.0
    %334 = vmatpush2.msra.mxu0 0.0
    %335 = vmatprep.subr.mxu0 0.0
    %336 = vmatpush2.msra.mxu0 0.0
    %337 = vmatprep.subr.mxu0 0.0
    %338 = vmatpush2.msra.mxu0 0.0
    %339 = vmatprep.subr.mxu0 0.0
    %340 = vmatpush2.msra.mxu0 0.0
    %341 = vmatprep.subr.mxu0 0.0
    %342 = vmatpush2.msra.mxu0 0.0
    %343 = vmatprep.mubr.f32.mxu0 0.0
    %344 = vmatmul.mubr.f32.gmra.mxu0 %v258
    %v345 = vpop.f32.mrf.mxu0
    %v346 = vadd.f32 %v244, %v345
    %v347 = vpop.f32.mrf.mxu0
    %v348 = vadd.f32 %v248, %v347
    %349 = vmatprep.mubr.f32.mxu0 0.0
    %350 = vmatmul.mubr.f32.gmra.mxu0 %v261
    %v351 = vpop.f32.mrf.mxu0
    %v352 = vadd.f32 %v244, %v351
    %v353 = vpop.f32.mrf.mxu0
    %v354 = vadd.f32 %v248, %v353
    %355 = vmatprep.mubr.f32.mxu0 0.0
    %356 = vmatmul.mubr.f32.gmra.mxu0 %v264
    %v357 = vpop.f32.mrf.mxu0
    %v358 = vadd.f32 %v244, %v357
    %v359 = vpop.f32.mrf.mxu0
    %v360 = vadd.f32 %v248, %v359
    %361 = vmatprep.mubr.f32.mxu0 0.0
    %362 = vmatmul.mubr.f32.gmra.mxu0 %v267
    %v363 = vpop.f32.mrf.mxu0
    %v364 = vadd.f32 %v244, %v363
    %v365 = vpop.f32.mrf.mxu0
    %v366 = vadd.f32 %v248, %v365
    %367 = vdwg.mxu0
    %368 = vmatprep.subr.mxu0 0.0
    %369 = vmatpush1.msra.mxu0 0.0
    %370 = vmatprep.subr.mxu0 0.0
    %371 = vmatpush1.msra.mxu0 0.0
    %372 = vmatprep.subr.mxu0 0.0
    %373 = vmatpush1.msra.mxu0 0.0
    %374 = vmatprep.subr.mxu0 0.0
    %375 = vmatpush1.msra.mxu0 0.0
    %376 = vmatprep.subr.mxu0 0.0
    %377 = vmatpush1.msra.mxu0 0.0
    %378 = vmatprep.subr.mxu0 0.0
    %379 = vmatpush1.msra.mxu0 0.0
    %380 = vmatprep.subr.mxu0 0.0
    %381 = vmatpush1.msra.mxu0 0.0
    %382 = vmatprep.subr.mxu0 0.0
    %383 = vmatpush1.msra.mxu0 0.0
    %384 = vmatprep.subr.mxu0 0.0
    %385 = vmatpush1.msra.mxu0 0.0
    %386 = vmatprep.subr.mxu0 0.0
    %387 = vmatpush1.msra.mxu0 0.0
    %388 = vmatprep.subr.mxu0 0.0
    %389 = vmatpush1.msra.mxu0 0.0
    %390 = vmatprep.subr.mxu0 0.0
    %391 = vmatpush1.msra.mxu0 0.0
    %392 = vmatprep.subr.mxu0 0.0
    %393 = vmatpush1.msra.mxu0 0.0
    %394 = vmatprep.subr.mxu0 0.0
    %395 = vmatpush1.msra.mxu0 %v277
    %396 = vmatprep.subr.mxu0 0.0
    %397 = vmatpush1.msra.mxu0 %v235
    %398 = vmatprep.subr.mxu0 0.0
    %399 = vmatpush1.msra.mxu0 %v232
    %400 = vmatprep.subr.mxu0 0.0
    %401 = vmatpush2.msra.mxu0 0.0
    %402 = vmatprep.subr.mxu0 0.0
    %403 = vmatpush2.msra.mxu0 0.0
    %404 = vmatprep.subr.mxu0 0.0
    %405 = vmatpush2.msra.mxu0 0.0
    %406 = vmatprep.subr.mxu0 0.0
    %407 = vmatpush2.msra.mxu0 0.0
    %408 = vmatprep.subr.mxu0 0.0
    %409 = vmatpush2.msra.mxu0 0.0
    %410 = vmatprep.subr.mxu0 0.0
    %411 = vmatpush2.msra.mxu0 0.0
    %412 = vmatprep.subr.mxu0 0.0
    %413 = vmatpush2.msra.mxu0 0.0
    %414 = vmatprep.subr.mxu0 0.0
    %415 = vmatpush2.msra.mxu0 0.0
    %416 = vmatprep.subr.mxu0 0.0
    %417 = vmatpush2.msra.mxu0 0.0
    %418 = vmatprep.subr.mxu0 0.0
    %419 = vmatpush2.msra.mxu0 0.0
    %420 = vmatprep.subr.mxu0 0.0
    %421 = vmatpush2.msra.mxu0 0.0
    %422 = vmatprep.subr.mxu0 0.0
    %423 = vmatpush2.msra.mxu0 0.0
    %424 = vmatprep.subr.mxu0 0.0
    %425 = vmatpush2.msra.mxu0 0.0
    %426 = vmatprep.subr.mxu0 0.0
    %427 = vmatpush2.msra.mxu0 0.0
    %428 = vmatprep.subr.mxu0 0.0
    %429 = vmatpush2.msra.mxu0 0.0
    %430 = vmatprep.subr.mxu0 0.0
    %431 = vmatpush2.msra.mxu0 0.0
    %432 = vmatprep.mubr.f32.mxu0 0.0
    %433 = vmatmul.mubr.f32.gmra.mxu0 %v258
    %v434 = vpop.f32.mrf.mxu0
    %v435 = vadd.f32 %v252, %v434
    %v436 = vpop.f32.mrf.mxu0
    %437 = vmatprep.mubr.f32.mxu0 0.0
    %438 = vmatmul.mubr.f32.gmra.mxu0 %v261
    %v439 = vpop.f32.mrf.mxu0
    %v440 = vadd.f32 %v252, %v439
    %v441 = vpop.f32.mrf.mxu0
    %442 = vmatprep.mubr.f32.mxu0 0.0
    %443 = vmatmul.mubr.f32.gmra.mxu0 %v264
    %v444 = vpop.f32.mrf.mxu0
    %v445 = vadd.f32 %v252, %v444
    %v446 = vpop.f32.mrf.mxu0
    %447 = vmatprep.mubr.f32.mxu0 0.0
    %448 = vmatmul.mubr.f32.gmra.mxu0 %v267
    %v449 = vpop.f32.mrf.mxu0
    %v450 = vadd.f32 %v252, %v449
    %v451 = vpop.f32.mrf.mxu0
    %452 = vdwg.mxu0
    %453 = vst [vmem:[#allocation2] sm:$0xff] %v346
    %454 = vst [vmem:[#allocation2 + $0x8] sm:$0xff] %v348
    %455 = vst [vmem:[#allocation2 + $0x10] sm:$0xff] %v435
    %456 = vst [vmem:[#allocation2 + $0x30] sm:$0xff] %v352
    %457 = vst [vmem:[#allocation2 + $0x38] sm:$0xff] %v354
    %458 = vst [vmem:[#allocation2 + $0x40] sm:$0xff] %v440
    %459 = vst [vmem:[#allocation2 + $0x60] sm:$0xff] %v358
    %460 = vst [vmem:[#allocation2 + $0x68] sm:$0xff] %v360
    %461 = vst [vmem:[#allocation2 + $0x70] sm:$0xff] %v445
    %462 = vst [vmem:[#allocation2 + $0x90] sm:$0xff] %v364
    %463 = vst [vmem:[#allocation2 + $0x98] sm:$0xff] %v366
    %464 = vst [vmem:[#allocation2 + $0xa0] sm:$0xff] %v450
    %v465 = vld [vmem:[#allocation8] sm:$0xff]
    %v466 = vld [vmem:[#allocation8 + $0x8] sm:$0xff]
    %v467 = vld [vmem:[#allocation8 + $0x10] sm:$0xff]
    %v468 = vld [vmem:[#allocation8 + $0x18] sm:$0xff]
    %v469 = vld [vmem:[#allocation8 + $0x20] sm:$0xff]
    %v470 = vld [vmem:[#allocation8 + $0x28] sm:$0xff]
    %v471 = vld [vmem:[#allocation8 + $0x30] sm:$0xf]
    %v472 = vld [vmem:[#allocation8 + $0x38] sm:$0xf]
    %v473 = vld [vmem:[#allocation8 + $0x40] sm:$0xf]
    %v474 = vld [vmem:[#allocation11] sm:$0x7]
    %v476 = vlaneseq
    %v477 = vshrl.u32 %v476, 7
    %v478 = vsub.s32 0, %v477
    %v479 = vrot.slane %v474, %v478
    %v480 = vlaneseq
    %v481 = vshrl.u32 %v480, 7
    %v482 = vsub.s32 1, %v481
    %v483 = vrot.slane %v474, %v482
    %v484 = vlaneseq
    %v485 = vshrl.u32 %v484, 7
    %v486 = vsub.s32 2, %v485
    %v487 = vrot.slane %v474, %v486
    %v492 = vsel %vm269, %v471, 0
    %v495 = vsel %vm269, %v472, 0
    %v498 = vsel %vm269, %v473, 0
    %500 = vmatprep.subr.mxu0 0.0
    %501 = vmatpush1.msra.mxu0 0.0
    %502 = vmatprep.subr.mxu0 0.0
    %503 = vmatpush1.msra.mxu0 0.0
    %504 = vmatprep.subr.mxu0 0.0
    %505 = vmatpush1.msra.mxu0 0.0
    %506 = vmatprep.subr.mxu0 0.0
    %507 = vmatpush1.msra.mxu0 0.0
    %508 = vmatprep.subr.mxu0 0.0
    %509 = vmatpush1.msra.mxu0 0.0
    %510 = vmatprep.subr.mxu0 0.0
    %511 = vmatpush1.msra.mxu0 0.0
    %512 = vmatprep.subr.mxu0 0.0
    %513 = vmatpush1.msra.mxu0 0.0
    %514 = vmatprep.subr.mxu0 0.0
    %515 = vmatpush1.msra.mxu0 0.0
    %516 = vmatprep.subr.mxu0 0.0
    %517 = vmatpush1.msra.mxu0 0.0
    %518 = vmatprep.subr.mxu0 0.0
    %519 = vmatpush1.msra.mxu0 0.0
    %520 = vmatprep.subr.mxu0 0.0
    %521 = vmatpush1.msra.mxu0 0.0
    %522 = vmatprep.subr.mxu0 0.0
    %523 = vmatpush1.msra.mxu0 0.0
    %524 = vmatprep.subr.mxu0 0.0
    %525 = vmatpush1.msra.mxu0 0.0
    %526 = vmatprep.subr.mxu0 %v495
    %527 = vmatpush1.msra.mxu0 %v492
    %528 = vmatprep.subr.mxu0 %v469
    %529 = vmatpush1.msra.mxu0 %v468
    %530 = vmatprep.subr.mxu0 %v466
    %531 = vmatpush1.msra.mxu0 %v465
    %532 = vmatprep.subr.mxu0 0.0
    %533 = vmatpush2.msra.mxu0 0.0
    %534 = vmatprep.subr.mxu0 0.0
    %535 = vmatpush2.msra.mxu0 0.0
    %536 = vmatprep.subr.mxu0 0.0
    %537 = vmatpush2.msra.mxu0 0.0
    %538 = vmatprep.subr.mxu0 0.0
    %539 = vmatpush2.msra.mxu0 0.0
    %540 = vmatprep.subr.mxu0 0.0
    %541 = vmatpush2.msra.mxu0 0.0
    %542 = vmatprep.subr.mxu0 0.0
    %543 = vmatpush2.msra.mxu0 0.0
    %544 = vmatprep.subr.mxu0 0.0
    %545 = vmatpush2.msra.mxu0 0.0
    %546 = vmatprep.subr.mxu0 0.0
    %547 = vmatpush2.msra.mxu0 0.0
    %548 = vmatprep.subr.mxu0 0.0
    %549 = vmatpush2.msra.mxu0 0.0
    %550 = vmatprep.subr.mxu0 0.0
    %551 = vmatpush2.msra.mxu0 0.0
    %552 = vmatprep.subr.mxu0 0.0
    %553 = vmatpush2.msra.mxu0 0.0
    %554 = vmatprep.subr.mxu0 0.0
    %555 = vmatpush2.msra.mxu0 0.0
    %556 = vmatprep.subr.mxu0 0.0
    %557 = vmatpush2.msra.mxu0 0.0
    %558 = vmatprep.subr.mxu0 0.0
    %559 = vmatpush2.msra.mxu0 0.0
    %560 = vmatprep.subr.mxu0 0.0
    %561 = vmatpush2.msra.mxu0 0.0
    %562 = vmatprep.subr.mxu0 0.0
    %563 = vmatpush2.msra.mxu0 0.0
    %564 = vmatprep.mubr.f32.mxu0 0.0
    %565 = vmatmul.mubr.f32.gmra.mxu0 %v258
    %v566 = vpop.f32.mrf.mxu0
    %v567 = vadd.f32 %v479, %v566
    %v568 = vpop.f32.mrf.mxu0
    %v569 = vadd.f32 %v483, %v568
    %570 = vmatprep.mubr.f32.mxu0 0.0
    %571 = vmatmul.mubr.f32.gmra.mxu0 %v261
    %v572 = vpop.f32.mrf.mxu0
    %v573 = vadd.f32 %v479, %v572
    %v574 = vpop.f32.mrf.mxu0
    %v575 = vadd.f32 %v483, %v574
    %576 = vmatprep.mubr.f32.mxu0 0.0
    %577 = vmatmul.mubr.f32.gmra.mxu0 %v264
    %v578 = vpop.f32.mrf.mxu0
    %v579 = vadd.f32 %v479, %v578
    %v580 = vpop.f32.mrf.mxu0
    %v581 = vadd.f32 %v483, %v580
    %582 = vmatprep.mubr.f32.mxu0 0.0
    %583 = vmatmul.mubr.f32.gmra.mxu0 %v267
    %v584 = vpop.f32.mrf.mxu0
    %v585 = vadd.f32 %v479, %v584
    %v586 = vpop.f32.mrf.mxu0
    %v587 = vadd.f32 %v483, %v586
    %588 = vdwg.mxu0
    %589 = vmatprep.subr.mxu0 0.0
    %590 = vmatpush1.msra.mxu0 0.0
    %591 = vmatprep.subr.mxu0 0.0
    %592 = vmatpush1.msra.mxu0 0.0
    %593 = vmatprep.subr.mxu0 0.0
    %594 = vmatpush1.msra.mxu0 0.0
    %595 = vmatprep.subr.mxu0 0.0
    %596 = vmatpush1.msra.mxu0 0.0
    %597 = vmatprep.subr.mxu0 0.0
    %598 = vmatpush1.msra.mxu0 0.0
    %599 = vmatprep.subr.mxu0 0.0
    %600 = vmatpush1.msra.mxu0 0.0
    %601 = vmatprep.subr.mxu0 0.0
    %602 = vmatpush1.msra.mxu0 0.0
    %603 = vmatprep.subr.mxu0 0.0
    %604 = vmatpush1.msra.mxu0 0.0
    %605 = vmatprep.subr.mxu0 0.0
    %606 = vmatpush1.msra.mxu0 0.0
    %607 = vmatprep.subr.mxu0 0.0
    %608 = vmatpush1.msra.mxu0 0.0
    %609 = vmatprep.subr.mxu0 0.0
    %610 = vmatpush1.msra.mxu0 0.0
    %611 = vmatprep.subr.mxu0 0.0
    %612 = vmatpush1.msra.mxu0 0.0
    %613 = vmatprep.subr.mxu0 0.0
    %614 = vmatpush1.msra.mxu0 0.0
    %615 = vmatprep.subr.mxu0 0.0
    %616 = vmatpush1.msra.mxu0 %v498
    %617 = vmatprep.subr.mxu0 0.0
    %618 = vmatpush1.msra.mxu0 %v470
    %619 = vmatprep.subr.mxu0 0.0
    %620 = vmatpush1.msra.mxu0 %v467
    %621 = vmatprep.subr.mxu0 0.0
    %622 = vmatpush2.msra.mxu0 0.0
    %623 = vmatprep.subr.mxu0 0.0
    %624 = vmatpush2.msra.mxu0 0.0
    %625 = vmatprep.subr.mxu0 0.0
    %626 = vmatpush2.msra.mxu0 0.0
    %627 = vmatprep.subr.mxu0 0.0
    %628 = vmatpush2.msra.mxu0 0.0
    %629 = vmatprep.subr.mxu0 0.0
    %630 = vmatpush2.msra.mxu0 0.0
    %631 = vmatprep.subr.mxu0 0.0
    %632 = vmatpush2.msra.mxu0 0.0
    %633 = vmatprep.subr.mxu0 0.0
    %634 = vmatpush2.msra.mxu0 0.0
    %635 = vmatprep.subr.mxu0 0.0
    %636 = vmatpush2.msra.mxu0 0.0
    %637 = vmatprep.subr.mxu0 0.0
    %638 = vmatpush2.msra.mxu0 0.0
    %639 = vmatprep.subr.mxu0 0.0
    %640 = vmatpush2.msra.mxu0 0.0
    %641 = vmatprep.subr.mxu0 0.0
    %642 = vmatpush2.msra.mxu0 0.0
    %643 = vmatprep.subr.mxu0 0.0
    %644 = vmatpush2.msra.mxu0 0.0
    %645 = vmatprep.subr.mxu0 0.0
    %646 = vmatpush2.msra.mxu0 0.0
    %647 = vmatprep.subr.mxu0 0.0
    %648 = vmatpush2.msra.mxu0 0.0
    %649 = vmatprep.subr.mxu0 0.0
    %650 = vmatpush2.msra.mxu0 0.0
    %651 = vmatprep.subr.mxu0 0.0
    %652 = vmatpush2.msra.mxu0 0.0
    %653 = vmatprep.mubr.f32.mxu0 0.0
    %654 = vmatmul.mubr.f32.gmra.mxu0 %v258
    %v655 = vpop.f32.mrf.mxu0
    %v656 = vadd.f32 %v487, %v655
    %v657 = vpop.f32.mrf.mxu0
    %658 = vmatprep.mubr.f32.mxu0 0.0
    %659 = vmatmul.mubr.f32.gmra.mxu0 %v261
    %v660 = vpop.f32.mrf.mxu0
    %v661 = vadd.f32 %v487, %v660
    %v662 = vpop.f32.mrf.mxu0
    %663 = vmatprep.mubr.f32.mxu0 0.0
    %664 = vmatmul.mubr.f32.gmra.mxu0 %v264
    %v665 = vpop.f32.mrf.mxu0
    %v666 = vadd.f32 %v487, %v665
    %v667 = vpop.f32.mrf.mxu0
    %668 = vmatprep.mubr.f32.mxu0 0.0
    %669 = vmatmul.mubr.f32.gmra.mxu0 %v267
    %v670 = vpop.f32.mrf.mxu0
    %v671 = vadd.f32 %v487, %v670
    %v672 = vpop.f32.mrf.mxu0
    %673 = vdwg.mxu0
    %674 = vst [vmem:[#allocation2 + $0x18] sm:$0xff] %v567
    %675 = vst [vmem:[#allocation2 + $0x20] sm:$0xff] %v569
    %676 = vst [vmem:[#allocation2 + $0x28] sm:$0xff] %v656
    %677 = vst [vmem:[#allocation2 + $0x48] sm:$0xff] %v573
    %678 = vst [vmem:[#allocation2 + $0x50] sm:$0xff] %v575
    %679 = vst [vmem:[#allocation2 + $0x58] sm:$0xff] %v661
    %680 = vst [vmem:[#allocation2 + $0x78] sm:$0xff] %v579
    %681 = vst [vmem:[#allocation2 + $0x80] sm:$0xff] %v581
    %682 = vst [vmem:[#allocation2 + $0x88] sm:$0xff] %v666
    %683 = vst [vmem:[#allocation2 + $0xa8] sm:$0xff] %v585
    %684 = vst [vmem:[#allocation2 + $0xb0] sm:$0xff] %v587
    %685 = vst [vmem:[#allocation2 + $0xb8] sm:$0xff] %v671
    %vm686 = vcmask 261120
    %687 = vst.msk [vmem:[#allocation3] sm:$0xff] %vm686, 0.0
    %688 = vst.msk [vmem:[#allocation3 + $0x8] sm:$0xff] %vm686, 0.0
    %689 = vst.msk [vmem:[#allocation3 + $0x10] sm:$0xff] %vm686, 0.0
    %690 = vst.msk [vmem:[#allocation3 + $0x18] sm:$0xff] %vm686, 0.0
    %691 = vst.msk [vmem:[#allocation4] sm:$0xff] %vm686, 0.0
    %692 = vst.msk [vmem:[#allocation4 + $0x8] sm:$0xff] %vm686, 0.0
    %693 = vst.msk [vmem:[#allocation4 + $0x10] sm:$0xff] %vm686, 0.0
    %694 = vst.msk [vmem:[#allocation4 + $0x18] sm:$0xff] %vm686, 0.0
    %v695 = vld [vmem:[%s5] sm:$0xff]
    %v696 = vld [vmem:[%s5 + $0x8] sm:$0xff]
    %v697 = vld [vmem:[%s5 + $0x10] sm:$0xff]
    %v698 = vld [vmem:[%s5 + $0x18] sm:$0xff]
    %v699 = vld [vmem:[%s5 + $0x20] sm:$0xff]
    %v700 = vld [vmem:[%s5 + $0x28] sm:$0xff]
    %v701 = vld [vmem:[%s5 + $0x30] sm:$0xff]
    %v702 = vld [vmem:[%s5 + $0x38] sm:$0xff]
    %v703 = vld [vmem:[%s5 + $0x40] sm:$0xff]
    %v704 = vld [vmem:[%s5 + $0x48] sm:$0xff]
    %v705 = vld [vmem:[%s5 + $0x50] sm:$0xff]
    %v706 = vld [vmem:[%s5 + $0x58] sm:$0xff]
    %v707 = vld [vmem:[#allocation13] sm:$0xff]
    %v708 = vld [vmem:[#allocation13 + $0x8] sm:$0xff]
    %v709 = vld [vmem:[#allocation13 + $0x10] sm:$0xff]
    %v710 = vld [vmem:[#allocation13 + $0x18] sm:$0xff]
    %v711 = vld [vmem:[#allocation13 + $0x20] sm:$0xff]
    %v712 = vld [vmem:[#allocation13 + $0x28] sm:$0xff]
    %v713 = vld [vmem:[#allocation13 + $0x30] sm:$0xff]
    %v714 = vld [vmem:[#allocation13 + $0x38] sm:$0xff]
    %v715 = vld [vmem:[#allocation13 + $0x40] sm:$0xff]
    %v716 = vld [vmem:[#allocation13 + $0x48] sm:$0xff]
    %v717 = vld [vmem:[#allocation13 + $0x50] sm:$0xff]
    %v718 = vld [vmem:[#allocation13 + $0x58] sm:$0xff]
    %v719 = vld [vmem:[%s7] sm:$0x1]
    %v721 = vlaneseq
    %v722 = vshrl.u32 %v721, 7
    %v723 = vsub.s32 0, %v722
    %v724 = vrot.slane %v719, %v723
    %v726 = vld [vmem:[#allocation14] sm:$0x1]
    %v728 = vlaneseq
    %v729 = vshrl.u32 %v728, 7
    %v730 = vsub.s32 0, %v729
    %v731 = vrot.slane %v726, %v730
    %v733 = vld [vmem:[#allocation2] sm:$0x3]
    %v734 = vld [vmem:[#allocation2 + $0x8] sm:$0x3]
    %v735 = vld [vmem:[#allocation2 + $0x10] sm:$0x3]
    %v736 = vld [vmem:[#allocation2 + $0xa8] sm:$0x3]
    %v737 = vld [vmem:[#allocation2 + $0xb0] sm:$0x3]
    %v738 = vld [vmem:[#allocation2 + $0xb8] sm:$0x3]
    %v740 = vsel %vm686, 0.0, 0
    %742 = vmatprep.subr.mxu0 0.0
    %743 = vmatpush1.msra.mxu0 0.0
    %744 = vmatprep.subr.mxu0 0.0
    %745 = vmatpush1.msra.mxu0 0.0
    %746 = vmatprep.subr.mxu0 0.0
    %747 = vmatpush1.msra.mxu0 0.0
    %748 = vmatprep.subr.mxu0 0.0
    %749 = vmatpush1.msra.mxu0 0.0
    %750 = vmatprep.subr.mxu0 0.0
    %751 = vmatpush1.msra.mxu0 0.0
    %752 = vmatprep.subr.mxu0 0.0
    %753 = vmatpush1.msra.mxu0 0.0
    %754 = vmatprep.subr.mxu0 0.0
    %755 = vmatpush1.msra.mxu0 0.0
    %756 = vmatprep.subr.mxu0 0.0
    %757 = vmatpush1.msra.mxu0 0.0
    %758 = vmatprep.subr.mxu0 0.0
    %759 = vmatpush1.msra.mxu0 0.0
    %760 = vmatprep.subr.mxu0 0.0
    %761 = vmatpush1.msra.mxu0 0.0
    %762 = vmatprep.subr.mxu0 0.0
    %763 = vmatpush1.msra.mxu0 0.0
    %764 = vmatprep.subr.mxu0 0.0
    %765 = vmatpush1.msra.mxu0 0.0
    %766 = vmatprep.subr.mxu0 %v705
    %767 = vmatpush1.msra.mxu0 %v704
    %768 = vmatprep.subr.mxu0 %v702
    %769 = vmatpush1.msra.mxu0 %v701
    %770 = vmatprep.subr.mxu0 %v699
    %771 = vmatpush1.msra.mxu0 %v698
    %772 = vmatprep.subr.mxu0 %v696
    %773 = vmatpush1.msra.mxu0 %v695
    %774 = vmatprep.subr.mxu0 0.0
    %775 = vmatpush2.msra.mxu0 0.0
    %776 = vmatprep.subr.mxu0 0.0
    %777 = vmatpush2.msra.mxu0 0.0
    %778 = vmatprep.subr.mxu0 0.0
    %779 = vmatpush2.msra.mxu0 0.0
    %780 = vmatprep.subr.mxu0 0.0
    %781 = vmatpush2.msra.mxu0 0.0
    %782 = vmatprep.subr.mxu0 0.0
    %783 = vmatpush2.msra.mxu0 0.0
    %784 = vmatprep.subr.mxu0 0.0
    %785 = vmatpush2.msra.mxu0 0.0
    %786 = vmatprep.subr.mxu0 0.0
    %787 = vmatpush2.msra.mxu0 0.0
    %788 = vmatprep.subr.mxu0 0.0
    %789 = vmatpush2.msra.mxu0 0.0
    %790 = vmatprep.subr.mxu0 0.0
    %791 = vmatpush2.msra.mxu0 0.0
    %792 = vmatprep.subr.mxu0 0.0
    %793 = vmatpush2.msra.mxu0 0.0
    %794 = vmatprep.subr.mxu0 0.0
    %795 = vmatpush2.msra.mxu0 0.0
    %796 = vmatprep.subr.mxu0 0.0
    %797 = vmatpush2.msra.mxu0 0.0
    %798 = vmatprep.subr.mxu0 0.0
    %799 = vmatpush2.msra.mxu0 0.0
    %800 = vmatprep.subr.mxu0 0.0
    %801 = vmatpush2.msra.mxu0 0.0
    %802 = vmatprep.subr.mxu0 0.0
    %803 = vmatpush2.msra.mxu0 0.0
    %804 = vmatprep.subr.mxu0 0.0
    %805 = vmatpush2.msra.mxu0 0.0
    %806 = vmatprep.mubr.f32.mxu0 0.0
    %807 = vmatmul.mubr.f32.gmra.mxu0 %v740
    %v808 = vpop.f32.mrf.mxu0
    %v809 = vadd.f32 0.0, %v808
    %v810 = vpop.f32.mrf.mxu0
    %v811 = vadd.f32 0.0, %v810
    %812 = vdwg.mxu0
    %813 = vmatprep.subr.mxu0 0.0
    %814 = vmatpush1.msra.mxu0 0.0
    %815 = vmatprep.subr.mxu0 0.0
    %816 = vmatpush1.msra.mxu0 0.0
    %817 = vmatprep.subr.mxu0 0.0
    %818 = vmatpush1.msra.mxu0 0.0
    %819 = vmatprep.subr.mxu0 0.0
    %820 = vmatpush1.msra.mxu0 0.0
    %821 = vmatprep.subr.mxu0 0.0
    %822 = vmatpush1.msra.mxu0 0.0
    %823 = vmatprep.subr.mxu0 0.0
    %824 = vmatpush1.msra.mxu0 0.0
    %825 = vmatprep.subr.mxu0 0.0
    %826 = vmatpush1.msra.mxu0 0.0
    %827 = vmatprep.subr.mxu0 0.0
    %828 = vmatpush1.msra.mxu0 0.0
    %829 = vmatprep.subr.mxu0 0.0
    %830 = vmatpush1.msra.mxu0 0.0
    %831 = vmatprep.subr.mxu0 0.0
    %832 = vmatpush1.msra.mxu0 0.0
    %833 = vmatprep.subr.mxu0 0.0
    %834 = vmatpush1.msra.mxu0 0.0
    %835 = vmatprep.subr.mxu0 0.0
    %836 = vmatpush1.msra.mxu0 0.0
    %837 = vmatprep.subr.mxu0 0.0
    %838 = vmatpush1.msra.mxu0 %v706
    %839 = vmatprep.subr.mxu0 0.0
    %840 = vmatpush1.msra.mxu0 %v703
    %841 = vmatprep.subr.mxu0 0.0
    %842 = vmatpush1.msra.mxu0 %v700
    %843 = vmatprep.subr.mxu0 0.0
    %844 = vmatpush1.msra.mxu0 %v697
    %845 = vmatprep.subr.mxu0 0.0
    %846 = vmatpush2.msra.mxu0 0.0
    %847 = vmatprep.subr.mxu0 0.0
    %848 = vmatpush2.msra.mxu0 0.0
    %849 = vmatprep.subr.mxu0 0.0
    %850 = vmatpush2.msra.mxu0 0.0
    %851 = vmatprep.subr.mxu0 0.0
    %852 = vmatpush2.msra.mxu0 0.0
    %853 = vmatprep.subr.mxu0 0.0
    %854 = vmatpush2.msra.mxu0 0.0
    %855 = vmatprep.subr.mxu0 0.0
    %856 = vmatpush2.msra.mxu0 0.0
    %857 = vmatprep.subr.mxu0 0.0
    %858 = vmatpush2.msra.mxu0 0.0
    %859 = vmatprep.subr.mxu0 0.0
    %860 = vmatpush2.msra.mxu0 0.0
    %861 = vmatprep.subr.mxu0 0.0
    %862 = vmatpush2.msra.mxu0 0.0
    %863 = vmatprep.subr.mxu0 0.0
    %864 = vmatpush2.msra.mxu0 0.0
    %865 = vmatprep.subr.mxu0 0.0
    %866 = vmatpush2.msra.mxu0 0.0
    %867 = vmatprep.subr.mxu0 0.0
    %868 = vmatpush2.msra.mxu0 0.0
    %869 = vmatprep.subr.mxu0 0.0
    %870 = vmatpush2.msra.mxu0 0.0
    %871 = vmatprep.subr.mxu0 0.0
    %872 = vmatpush2.msra.mxu0 0.0
    %873 = vmatprep.subr.mxu0 0.0
    %874 = vmatpush2.msra.mxu0 0.0
    %875 = vmatprep.subr.mxu0 0.0
    %876 = vmatpush2.msra.mxu0 0.0
    %877 = vmatprep.mubr.f32.mxu0 0.0
    %878 = vmatmul.mubr.f32.gmra.mxu0 %v740
    %v879 = vpop.f32.mrf.mxu0
    %v880 = vadd.f32 0.0, %v879
    %v881 = vpop.f32.mrf.mxu0
    %882 = vdwg.mxu0
    %883 = vmatprep.subr.mxu0 0.0
    %884 = vmatpush1.msra.mxu0 0.0
    %885 = vmatprep.subr.mxu0 0.0
    %886 = vmatpush1.msra.mxu0 0.0
    %887 = vmatprep.subr.mxu0 0.0
    %888 = vmatpush1.msra.mxu0 0.0
    %889 = vmatprep.subr.mxu0 0.0
    %890 = vmatpush1.msra.mxu0 0.0
    %891 = vmatprep.subr.mxu0 0.0
    %892 = vmatpush1.msra.mxu0 0.0
    %893 = vmatprep.subr.mxu0 0.0
    %894 = vmatpush1.msra.mxu0 0.0
    %895 = vmatprep.subr.mxu0 0.0
    %896 = vmatpush1.msra.mxu0 0.0
    %897 = vmatprep.subr.mxu0 0.0
    %898 = vmatpush1.msra.mxu0 0.0
    %899 = vmatprep.subr.mxu0 0.0
    %900 = vmatpush1.msra.mxu0 0.0
    %901 = vmatprep.subr.mxu0 0.0
    %902 = vmatpush1.msra.mxu0 0.0
    %903 = vmatprep.subr.mxu0 0.0
    %904 = vmatpush1.msra.mxu0 0.0
    %905 = vmatprep.subr.mxu0 0.0
    %906 = vmatpush1.msra.mxu0 0.0
    %907 = vmatprep.subr.mxu0 %v717
    %908 = vmatpush1.msra.mxu0 %v716
    %909 = vmatprep.subr.mxu0 %v714
    %910 = vmatpush1.msra.mxu0 %v713
    %911 = vmatprep.subr.mxu0 %v711
    %912 = vmatpush1.msra.mxu0 %v710
    %913 = vmatprep.subr.mxu0 %v708
    %914 = vmatpush1.msra.mxu0 %v707
    %915 = vmatprep.subr.mxu0 0.0
    %916 = vmatpush2.msra.mxu0 0.0
    %917 = vmatprep.subr.mxu0 0.0
    %918 = vmatpush2.msra.mxu0 0.0
    %919 = vmatprep.subr.mxu0 0.0
    %920 = vmatpush2.msra.mxu0 0.0
    %921 = vmatprep.subr.mxu0 0.0
    %922 = vmatpush2.msra.mxu0 0.0
    %923 = vmatprep.subr.mxu0 0.0
    %924 = vmatpush2.msra.mxu0 0.0
    %925 = vmatprep.subr.mxu0 0.0
    %926 = vmatpush2.msra.mxu0 0.0
    %927 = vmatprep.subr.mxu0 0.0
    %928 = vmatpush2.msra.mxu0 0.0
    %929 = vmatprep.subr.mxu0 0.0
    %930 = vmatpush2.msra.mxu0 0.0
    %931 = vmatprep.subr.mxu0 0.0
    %932 = vmatpush2.msra.mxu0 0.0
    %933 = vmatprep.subr.mxu0 0.0
    %934 = vmatpush2.msra.mxu0 0.0
    %935 = vmatprep.subr.mxu0 0.0
    %936 = vmatpush2.msra.mxu0 0.0
    %937 = vmatprep.subr.mxu0 0.0
    %938 = vmatpush2.msra.mxu0 0.0
    %939 = vmatprep.subr.mxu0 0.0
    %940 = vmatpush2.msra.mxu0 0.0
    %941 = vmatprep.subr.mxu0 0.0
    %942 = vmatpush2.msra.mxu0 0.0
    %943 = vmatprep.subr.mxu0 0.0
    %944 = vmatpush2.msra.mxu0 0.0
    %945 = vmatprep.subr.mxu0 0.0
    %946 = vmatpush2.msra.mxu0 0.0
    %947 = vmatprep.mubr.f32.mxu0 0.0
    %948 = vmatmul.mubr.f32.gmra.mxu0 %v740
    %v949 = vpop.f32.mrf.mxu0
    %v950 = vadd.f32 0.0, %v949
    %v951 = vpop.f32.mrf.mxu0
    %v952 = vadd.f32 0.0, %v951
    %953 = vdwg.mxu0
    %954 = vmatprep.subr.mxu0 0.0
    %955 = vmatpush1.msra.mxu0 0.0
    %956 = vmatprep.subr.mxu0 0.0
    %957 = vmatpush1.msra.mxu0 0.0
    %958 = vmatprep.subr.mxu0 0.0
    %959 = vmatpush1.msra.mxu0 0.0
    %960 = vmatprep.subr.mxu0 0.0
    %961 = vmatpush1.msra.mxu0 0.0
    %962 = vmatprep.subr.mxu0 0.0
    %963 = vmatpush1.msra.mxu0 0.0
    %964 = vmatprep.subr.mxu0 0.0
    %965 = vmatpush1.msra.mxu0 0.0
    %966 = vmatprep.subr.mxu0 0.0
    %967 = vmatpush1.msra.mxu0 0.0
    %968 = vmatprep.subr.mxu0 0.0
    %969 = vmatpush1.msra.mxu0 0.0
    %970 = vmatprep.subr.mxu0 0.0
    %971 = vmatpush1.msra.mxu0 0.0
    %972 = vmatprep.subr.mxu0 0.0
    %973 = vmatpush1.msra.mxu0 0.0
    %974 = vmatprep.subr.mxu0 0.0
    %975 = vmatpush1.msra.mxu0 0.0
    %976 = vmatprep.subr.mxu0 0.0
    %977 = vmatpush1.msra.mxu0 0.0
    %978 = vmatprep.subr.mxu0 0.0
    %979 = vmatpush1.msra.mxu0 %v718
    %980 = vmatprep.subr.mxu0 0.0
    %981 = vmatpush1.msra.mxu0 %v715
    %982 = vmatprep.subr.mxu0 0.0
    %983 = vmatpush1.msra.mxu0 %v712
    %984 = vmatprep.subr.mxu0 0.0
    %985 = vmatpush1.msra.mxu0 %v709
    %986 = vmatprep.subr.mxu0 0.0
    %987 = vmatpush2.msra.mxu0 0.0
    %988 = vmatprep.subr.mxu0 0.0
    %989 = vmatpush2.msra.mxu0 0.0
    %990 = vmatprep.subr.mxu0 0.0
    %991 = vmatpush2.msra.mxu0 0.0
    %992 = vmatprep.subr.mxu0 0.0
    %993 = vmatpush2.msra.mxu0 0.0
    %994 = vmatprep.subr.mxu0 0.0
    %995 = vmatpush2.msra.mxu0 0.0
    %996 = vmatprep.subr.mxu0 0.0
    %997 = vmatpush2.msra.mxu0 0.0
    %998 = vmatprep.subr.mxu0 0.0
    %999 = vmatpush2.msra.mxu0 0.0
    %1000 = vmatprep.subr.mxu0 0.0
    %1001 = vmatpush2.msra.mxu0 0.0
    %1002 = vmatprep.subr.mxu0 0.0
    %1003 = vmatpush2.msra.mxu0 0.0
    %1004 = vmatprep.subr.mxu0 0.0
    %1005 = vmatpush2.msra.mxu0 0.0
    %1006 = vmatprep.subr.mxu0 0.0
    %1007 = vmatpush2.msra.mxu0 0.0
    %1008 = vmatprep.subr.mxu0 0.0
    %1009 = vmatpush2.msra.mxu0 0.0
    %1010 = vmatprep.subr.mxu0 0.0
    %1011 = vmatpush2.msra.mxu0 0.0
    %1012 = vmatprep.subr.mxu0 0.0
    %1013 = vmatpush2.msra.mxu0 0.0
    %1014 = vmatprep.subr.mxu0 0.0
    %1015 = vmatpush2.msra.mxu0 0.0
    %1016 = vmatprep.subr.mxu0 0.0
    %1017 = vmatpush2.msra.mxu0 0.0
    %1018 = vmatprep.mubr.f32.mxu0 0.0
    %1019 = vmatmul.mubr.f32.gmra.mxu0 %v740
    %v1020 = vpop.f32.mrf.mxu0
    %v1021 = vadd.f32 0.0, %v1020
    %v1022 = vpop.f32.mrf.mxu0
    %1023 = vdwg.mxu0
    %v1024 = vadd.f32 %v733, %v809
    %v1025 = vxor.u32 %v1024, 2147483648
    %v1026 = vmul.f32 %v1025, 1.442695
    %v1027 = vpow.pop %v1026
    %v1028 = vadd.f32 %v1027, 1.0
    %v1029 = vrcp.pop %v1028
    %v1030 = vmul.f32 1.0, %v1029
    %v1031 = vadd.f32 %v734, %v811
    %v1032 = vxor.u32 %v1031, 2147483648
    %v1033 = vmul.f32 %v1032, 1.442695
    %v1034 = vpow.pop %v1033
    %v1035 = vadd.f32 %v1034, 1.0
    %v1036 = vrcp.pop %v1035
    %v1037 = vmul.f32 1.0, %v1036
    %v1038 = vadd.f32 %v880, %v724
    %v1039 = vmul.f32 %v1030, %v1038
    %v1040 = vadd.f32 %v735, %v1039
    %v1041 = vtanh.pop %v1040
    %v1042 = vsub.f32 1.0, %v1037
    %v1043 = vmul.f32 %v1042, %v1041
    %v1044 = vmul.f32 %v1037, 0.0
    %v1045 = vadd.f32 %v1043, %v1044
    %v1046 = vadd.f32 %v736, %v950
    %v1047 = vxor.u32 %v1046, 2147483648
    %v1048 = vmul.f32 %v1047, 1.442695
    %v1049 = vpow.pop %v1048
    %v1050 = vadd.f32 %v1049, 1.0
    %v1051 = vrcp.pop %v1050
    %v1052 = vmul.f32 1.0, %v1051
    %v1053 = vadd.f32 %v737, %v952
    %v1054 = vxor.u32 %v1053, 2147483648
    %v1055 = vmul.f32 %v1054, 1.442695
    %v1056 = vpow.pop %v1055
    %v1057 = vadd.f32 %v1056, 1.0
    %v1058 = vrcp.pop %v1057
    %v1059 = vmul.f32 1.0, %v1058
    %v1060 = vadd.f32 %v1021, %v731
    %v1061 = vmul.f32 %v1052, %v1060
    %v1062 = vadd.f32 %v738, %v1061
    %v1063 = vtanh.pop %v1062
    %v1064 = vsub.f32 1.0, %v1059
    %v1065 = vmul.f32 %v1064, %v1063
    %v1066 = vmul.f32 %v1059, 0.0
    %v1067 = vadd.f32 %v1065, %v1066
    %vm1068 = vcmask 254976
    %1069 = vst.msk [vmem:[#allocation3] sm:$0x3] %vm1068, %v1045
    %1070 = vst.msk [vmem:[#allocation4 + $0x18] sm:$0x3] %vm1068, %v1067
    %v1071 = vld [vmem:[#allocation2 + $0x30] sm:$0x3]
    %v1072 = vld [vmem:[#allocation2 + $0x38] sm:$0x3]
    %v1073 = vld [vmem:[#allocation2 + $0x40] sm:$0x3]
    %v1074 = vld [vmem:[#allocation2 + $0x78] sm:$0x3]
    %v1075 = vld [vmem:[#allocation2 + $0x80] sm:$0x3]
    %v1076 = vld [vmem:[#allocation2 + $0x88] sm:$0x3]
    %v1078 = vsel %vm686, %v1045, 0
    %1080 = vmatprep.subr.mxu0 0.0
    %1081 = vmatpush1.msra.mxu0 0.0
    %1082 = vmatprep.subr.mxu0 0.0
    %1083 = vmatpush1.msra.mxu0 0.0
    %1084 = vmatprep.subr.mxu0 0.0
    %1085 = vmatpush1.msra.mxu0 0.0
    %1086 = vmatprep.subr.mxu0 0.0
    %1087 = vmatpush1.msra.mxu0 0.0
    %1088 = vmatprep.subr.mxu0 0.0
    %1089 = vmatpush1.msra.mxu0 0.0
    %1090 = vmatprep.subr.mxu0 0.0
    %1091 = vmatpush1.msra.mxu0 0.0
    %1092 = vmatprep.subr.mxu0 0.0
    %1093 = vmatpush1.msra.mxu0 0.0
    %1094 = vmatprep.subr.mxu0 0.0
    %1095 = vmatpush1.msra.mxu0 0.0
    %1096 = vmatprep.subr.mxu0 0.0
    %1097 = vmatpush1.msra.mxu0 0.0
    %1098 = vmatprep.subr.mxu0 0.0
    %1099 = vmatpush1.msra.mxu0 0.0
    %1100 = vmatprep.subr.mxu0 0.0
    %1101 = vmatpush1.msra.mxu0 0.0
    %1102 = vmatprep.subr.mxu0 0.0
    %1103 = vmatpush1.msra.mxu0 0.0
    %1104 = vmatprep.subr.mxu0 %v705
    %1105 = vmatpush1.msra.mxu0 %v704
    %1106 = vmatprep.subr.mxu0 %v702
    %1107 = vmatpush1.msra.mxu0 %v701
    %1108 = vmatprep.subr.mxu0 %v699
    %1109 = vmatpush1.msra.mxu0 %v698
    %1110 = vmatprep.subr.mxu0 %v696
    %1111 = vmatpush1.msra.mxu0 %v695
    %1112 = vmatprep.subr.mxu0 0.0
    %1113 = vmatpush2.msra.mxu0 0.0
    %1114 = vmatprep.subr.mxu0 0.0
    %1115 = vmatpush2.msra.mxu0 0.0
    %1116 = vmatprep.subr.mxu0 0.0
    %1117 = vmatpush2.msra.mxu0 0.0
    %1118 = vmatprep.subr.mxu0 0.0
    %1119 = vmatpush2.msra.mxu0 0.0
    %1120 = vmatprep.subr.mxu0 0.0
    %1121 = vmatpush2.msra.mxu0 0.0
    %1122 = vmatprep.subr.mxu0 0.0
    %1123 = vmatpush2.msra.mxu0 0.0
    %1124 = vmatprep.subr.mxu0 0.0
    %1125 = vmatpush2.msra.mxu0 0.0
    %1126 = vmatprep.subr.mxu0 0.0
    %1127 = vmatpush2.msra.mxu0 0.0
    %1128 = vmatprep.subr.mxu0 0.0
    %1129 = vmatpush2.msra.mxu0 0.0
    %1130 = vmatprep.subr.mxu0 0.0
    %1131 = vmatpush2.msra.mxu0 0.0
    %1132 = vmatprep.subr.mxu0 0.0
    %1133 = vmatpush2.msra.mxu0 0.0
    %1134 = vmatprep.subr.mxu0 0.0
    %1135 = vmatpush2.msra.mxu0 0.0
    %1136 = vmatprep.subr.mxu0 0.0
    %1137 = vmatpush2.msra.mxu0 0.0
    %1138 = vmatprep.subr.mxu0 0.0
    %1139 = vmatpush2.msra.mxu0 0.0
    %1140 = vmatprep.subr.mxu0 0.0
    %1141 = vmatpush2.msra.mxu0 0.0
    %1142 = vmatprep.subr.mxu0 0.0
    %1143 = vmatpush2.msra.mxu0 0.0
    %1144 = vmatprep.mubr.f32.mxu0 0.0
    %1145 = vmatmul.mubr.f32.gmra.mxu0 %v1078
    %v1146 = vpop.f32.mrf.mxu0
    %v1147 = vadd.f32 0.0, %v1146
    %v1148 = vpop.f32.mrf.mxu0
    %v1149 = vadd.f32 0.0, %v1148
    %1150 = vdwg.mxu0
    %1151 = vmatprep.subr.mxu0 0.0
    %1152 = vmatpush1.msra.mxu0 0.0
    %1153 = vmatprep.subr.mxu0 0.0
    %1154 = vmatpush1.msra.mxu0 0.0
    %1155 = vmatprep.subr.mxu0 0.0
    %1156 = vmatpush1.msra.mxu0 0.0
    %1157 = vmatprep.subr.mxu0 0.0
    %1158 = vmatpush1.msra.mxu0 0.0
    %1159 = vmatprep.subr.mxu0 0.0
    %1160 = vmatpush1.msra.mxu0 0.0
    %1161 = vmatprep.subr.mxu0 0.0
    %1162 = vmatpush1.msra.mxu0 0.0
    %1163 = vmatprep.subr.mxu0 0.0
    %1164 = vmatpush1.msra.mxu0 0.0
    %1165 = vmatprep.subr.mxu0 0.0
    %1166 = vmatpush1.msra.mxu0 0.0
    %1167 = vmatprep.subr.mxu0 0.0
    %1168 = vmatpush1.msra.mxu0 0.0
    %1169 = vmatprep.subr.mxu0 0.0
    %1170 = vmatpush1.msra.mxu0 0.0
    %1171 = vmatprep.subr.mxu0 0.0
    %1172 = vmatpush1.msra.mxu0 0.0
    %1173 = vmatprep.subr.mxu0 0.0
    %1174 = vmatpush1.msra.mxu0 0.0
    %1175 = vmatprep.subr.mxu0 0.0
    %1176 = vmatpush1.msra.mxu0 %v706
    %1177 = vmatprep.subr.mxu0 0.0
    %1178 = vmatpush1.msra.mxu0 %v703
    %1179 = vmatprep.subr.mxu0 0.0
    %1180 = vmatpush1.msra.mxu0 %v700
    %1181 = vmatprep.subr.mxu0 0.0
    %1182 = vmatpush1.msra.mxu0 %v697
    %1183 = vmatprep.subr.mxu0 0.0
    %1184 = vmatpush2.msra.mxu0 0.0
    %1185 = vmatprep.subr.mxu0 0.0
    %1186 = vmatpush2.msra.mxu0 0.0
    %1187 = vmatprep.subr.mxu0 0.0
    %1188 = vmatpush2.msra.mxu0 0.0
    %1189 = vmatprep.subr.mxu0 0.0
    %1190 = vmatpush2.msra.mxu0 0.0
    %1191 = vmatprep.subr.mxu0 0.0
    %1192 = vmatpush2.msra.mxu0 0.0
    %1193 = vmatprep.subr.mxu0 0.0
    %1194 = vmatpush2.msra.mxu0 0.0
    %1195 = vmatprep.subr.mxu0 0.0
    %1196 = vmatpush2.msra.mxu0 0.0
    %1197 = vmatprep.subr.mxu0 0.0
    %1198 = vmatpush2.msra.mxu0 0.0
    %1199 = vmatprep.subr.mxu0 0.0
    %1200 = vmatpush2.msra.mxu0 0.0
    %1201 = vmatprep.subr.mxu0 0.0
    %1202 = vmatpush2.msra.mxu0 0.0
    %1203 = vmatprep.subr.mxu0 0.0
    %1204 = vmatpush2.msra.mxu0 0.0
    %1205 = vmatprep.subr.mxu0 0.0
    %1206 = vmatpush2.msra.mxu0 0.0
    %1207 = vmatprep.subr.mxu0 0.0
    %1208 = vmatpush2.msra.mxu0 0.0
    %1209 = vmatprep.subr.mxu0 0.0
    %1210 = vmatpush2.msra.mxu0 0.0
    %1211 = vmatprep.subr.mxu0 0.0
    %1212 = vmatpush2.msra.mxu0 0.0
    %1213 = vmatprep.subr.mxu0 0.0
    %1214 = vmatpush2.msra.mxu0 0.0
    %1215 = vmatprep.mubr.f32.mxu0 0.0
    %1216 = vmatmul.mubr.f32.gmra.mxu0 %v1078
    %v1217 = vpop.f32.mrf.mxu0
    %v1218 = vadd.f32 0.0, %v1217
    %v1219 = vpop.f32.mrf.mxu0
    %1220 = vdwg.mxu0
    %v1222 = vsel %vm686, %v1067, 0
    %1224 = vmatprep.subr.mxu0 0.0
    %1225 = vmatpush1.msra.mxu0 0.0
    %1226 = vmatprep.subr.mxu0 0.0
    %1227 = vmatpush1.msra.mxu0 0.0
    %1228 = vmatprep.subr.mxu0 0.0
    %1229 = vmatpush1.msra.mxu0 0.0
    %1230 = vmatprep.subr.mxu0 0.0
    %1231 = vmatpush1.msra.mxu0 0.0
    %1232 = vmatprep.subr.mxu0 0.0
    %1233 = vmatpush1.msra.mxu0 0.0
    %1234 = vmatprep.subr.mxu0 0.0
    %1235 = vmatpush1.msra.mxu0 0.0
    %1236 = vmatprep.subr.mxu0 0.0
    %1237 = vmatpush1.msra.mxu0 0.0
    %1238 = vmatprep.subr.mxu0 0.0
    %1239 = vmatpush1.msra.mxu0 0.0
    %1240 = vmatprep.subr.mxu0 0.0
    %1241 = vmatpush1.msra.mxu0 0.0
    %1242 = vmatprep.subr.mxu0 0.0
    %1243 = vmatpush1.msra.mxu0 0.0
    %1244 = vmatprep.subr.mxu0 0.0
    %1245 = vmatpush1.msra.mxu0 0.0
    %1246 = vmatprep.subr.mxu0 0.0
    %1247 = vmatpush1.msra.mxu0 0.0
    %1248 = vmatprep.subr.mxu0 %v717
    %1249 = vmatpush1.msra.mxu0 %v716
    %1250 = vmatprep.subr.mxu0 %v714
    %1251 = vmatpush1.msra.mxu0 %v713
    %1252 = vmatprep.subr.mxu0 %v711
    %1253 = vmatpush1.msra.mxu0 %v710
    %1254 = vmatprep.subr.mxu0 %v708
    %1255 = vmatpush1.msra.mxu0 %v707
    %1256 = vmatprep.subr.mxu0 0.0
    %1257 = vmatpush2.msra.mxu0 0.0
    %1258 = vmatprep.subr.mxu0 0.0
    %1259 = vmatpush2.msra.mxu0 0.0
    %1260 = vmatprep.subr.mxu0 0.0
    %1261 = vmatpush2.msra.mxu0 0.0
    %1262 = vmatprep.subr.mxu0 0.0
    %1263 = vmatpush2.msra.mxu0 0.0
    %1264 = vmatprep.subr.mxu0 0.0
    %1265 = vmatpush2.msra.mxu0 0.0
    %1266 = vmatprep.subr.mxu0 0.0
    %1267 = vmatpush2.msra.mxu0 0.0
    %1268 = vmatprep.subr.mxu0 0.0
    %1269 = vmatpush2.msra.mxu0 0.0
    %1270 = vmatprep.subr.mxu0 0.0
    %1271 = vmatpush2.msra.mxu0 0.0
    %1272 = vmatprep.subr.mxu0 0.0
    %1273 = vmatpush2.msra.mxu0 0.0
    %1274 = vmatprep.subr.mxu0 0.0
    %1275 = vmatpush2.msra.mxu0 0.0
    %1276 = vmatprep.subr.mxu0 0.0
    %1277 = vmatpush2.msra.mxu0 0.0
    %1278 = vmatprep.subr.mxu0 0.0
    %1279 = vmatpush2.msra.mxu0 0.0
    %1280 = vmatprep.subr.mxu0 0.0
    %1281 = vmatpush2.msra.mxu0 0.0
    %1282 = vmatprep.subr.mxu0 0.0
    %1283 = vmatpush2.msra.mxu0 0.0
    %1284 = vmatprep.subr.mxu0 0.0
    %1285 = vmatpush2.msra.mxu0 0.0
    %1286 = vmatprep.subr.mxu0 0.0
    %1287 = vmatpush2.msra.mxu0 0.0
    %1288 = vmatprep.mubr.f32.mxu0 0.0
    %1289 = vmatmul.mubr.f32.gmra.mxu0 %v1222
    %v1290 = vpop.f32.mrf.mxu0
    %v1291 = vadd.f32 0.0, %v1290
    %v1292 = vpop.f32.mrf.mxu0
    %v1293 = vadd.f32 0.0, %v1292
    %1294 = vdwg.mxu0
    %1295 = vmatprep.subr.mxu0 0.0
    %1296 = vmatpush1.msra.mxu0 0.0
    %1297 = vmatprep.subr.mxu0 0.0
    %1298 = vmatpush1.msra.mxu0 0.0
    %1299 = vmatprep.subr.mxu0 0.0
    %1300 = vmatpush1.msra.mxu0 0.0
    %1301 = vmatprep.subr.mxu0 0.0
    %1302 = vmatpush1.msra.mxu0 0.0
    %1303 = vmatprep.subr.mxu0 0.0
    %1304 = vmatpush1.msra.mxu0 0.0
    %1305 = vmatprep.subr.mxu0 0.0
    %1306 = vmatpush1.msra.mxu0 0.0
    %1307 = vmatprep.subr.mxu0 0.0
    %1308 = vmatpush1.msra.mxu0 0.0
    %1309 = vmatprep.subr.mxu0 0.0
    %1310 = vmatpush1.msra.mxu0 0.0
    %1311 = vmatprep.subr.mxu0 0.0
    %1312 = vmatpush1.msra.mxu0 0.0
    %1313 = vmatprep.subr.mxu0 0.0
    %1314 = vmatpush1.msra.mxu0 0.0
    %1315 = vmatprep.subr.mxu0 0.0
    %1316 = vmatpush1.msra.mxu0 0.0
    %1317 = vmatprep.subr.mxu0 0.0
    %1318 = vmatpush1.msra.mxu0 0.0
    %1319 = vmatprep.subr.mxu0 0.0
    %1320 = vmatpush1.msra.mxu0 %v718
    %1321 = vmatprep.subr.mxu0 0.0
    %1322 = vmatpush1.msra.mxu0 %v715
    %1323 = vmatprep.subr.mxu0 0.0
    %1324 = vmatpush1.msra.mxu0 %v712
    %1325 = vmatprep.subr.mxu0 0.0
    %1326 = vmatpush1.msra.mxu0 %v709
    %1327 = vmatprep.subr.mxu0 0.0
    %1328 = vmatpush2.msra.mxu0 0.0
    %1329 = vmatprep.subr.mxu0 0.0
    %1330 = vmatpush2.msra.mxu0 0.0
    %1331 = vmatprep.subr.mxu0 0.0
    %1332 = vmatpush2.msra.mxu0 0.0
    %1333 = vmatprep.subr.mxu0 0.0
    %1334 = vmatpush2.msra.mxu0 0.0
    %1335 = vmatprep.subr.mxu0 0.0
    %1336 = vmatpush2.msra.mxu0 0.0
    %1337 = vmatprep.subr.mxu0 0.0
    %1338 = vmatpush2.msra.mxu0 0.0
    %1339 = vmatprep.subr.mxu0 0.0
    %1340 = vmatpush2.msra.mxu0 0.0
    %1341 = vmatprep.subr.mxu0 0.0
    %1342 = vmatpush2.msra.mxu0 0.0
    %1343 = vmatprep.subr.mxu0 0.0
    %1344 = vmatpush2.msra.mxu0 0.0
    %1345 = vmatprep.subr.mxu0 0.0
    %1346 = vmatpush2.msra.mxu0 0.0
    %1347 = vmatprep.subr.mxu0 0.0
    %1348 = vmatpush2.msra.mxu0 0.0
    %1349 = vmatprep.subr.mxu0 0.0
    %1350 = vmatpush2.msra.mxu0 0.0
    %1351 = vmatprep.subr.mxu0 0.0
    %1352 = vmatpush2.msra.mxu0 0.0
    %1353 = vmatprep.subr.mxu0 0.0
    %1354 = vmatpush2.msra.mxu0 0.0
    %1355 = vmatprep.subr.mxu0 0.0
    %1356 = vmatpush2.msra.mxu0 0.0
    %1357 = vmatprep.subr.mxu0 0.0
    %1358 = vmatpush2.msra.mxu0 0.0
    %1359 = vmatprep.mubr.f32.mxu0 0.0
    %1360 = vmatmul.mubr.f32.gmra.mxu0 %v1222
    %v1361 = vpop.f32.mrf.mxu0
    %v1362 = vadd.f32 0.0, %v1361
    %v1363 = vpop.f32.mrf.mxu0
    %1364 = vdwg.mxu0
    %v1365 = vadd.f32 %v1071, %v1147
    %v1366 = vxor.u32 %v1365, 2147483648
    %v1367 = vmul.f32 %v1366, 1.442695
    %v1368 = vpow.pop %v1367
    %v1369 = vadd.f32 %v1368, 1.0
    %v1370 = vrcp.pop %v1369
    %v1371 = vmul.f32 1.0, %v1370
    %v1372 = vadd.f32 %v1072, %v1149
    %v1373 = vxor.u32 %v1372, 2147483648
    %v1374 = vmul.f32 %v1373, 1.442695
    %v1375 = vpow.pop %v1374
    %v1376 = vadd.f32 %v1375, 1.0
    %v1377 = vrcp.pop %v1376
    %v1378 = vmul.f32 1.0, %v1377
    %v1379 = vadd.f32 %v1218, %v724
    %v1380 = vmul.f32 %v1371, %v1379
    %v1381 = vadd.f32 %v1073, %v1380
    %v1382 = vtanh.pop %v1381
    %v1383 = vsub.f32 1.0, %v1378
    %v1384 = vmul.f32 %v1383, %v1382
    %v1385 = vmul.f32 %v1378, %v1045
    %v1386 = vadd.f32 %v1384, %v1385
    %v1387 = vadd.f32 %v1074, %v1291
    %v1388 = vxor.u32 %v1387, 2147483648
    %v1389 = vmul.f32 %v1388, 1.442695
    %v1390 = vpow.pop %v1389
    %v1391 = vadd.f32 %v1390, 1.0
    %v1392 = vrcp.pop %v1391
    %v1393 = vmul.f32 1.0, %v1392
    %v1394 = vadd.f32 %v1075, %v1293
    %v1395 = vxor.u32 %v1394, 2147483648
    %v1396 = vmul.f32 %v1395, 1.442695
    %v1397 = vpow.pop %v1396
    %v1398 = vadd.f32 %v1397, 1.0
    %v1399 = vrcp.pop %v1398
    %v1400 = vmul.f32 1.0, %v1399
    %v1401 = vadd.f32 %v1362, %v731
    %v1402 = vmul.f32 %v1393, %v1401
    %v1403 = vadd.f32 %v1076, %v1402
    %v1404 = vtanh.pop %v1403
    %v1405 = vsub.f32 1.0, %v1400
    %v1406 = vmul.f32 %v1405, %v1404
    %v1407 = vmul.f32 %v1400, %v1067
    %v1408 = vadd.f32 %v1406, %v1407
    %1409 = vst.msk [vmem:[#allocation3 + $0x8] sm:$0x3] %vm1068, %v1386
    %1410 = vst.msk [vmem:[#allocation4 + $0x10] sm:$0x3] %vm1068, %v1408
    %v1411 = vld [vmem:[#allocation2 + $0x60] sm:$0x3]
    %v1412 = vld [vmem:[#allocation2 + $0x68] sm:$0x3]
    %v1413 = vld [vmem:[#allocation2 + $0x70] sm:$0x3]
    %v1414 = vld [vmem:[#allocation2 + $0x48] sm:$0x3]
    %v1415 = vld [vmem:[#allocation2 + $0x50] sm:$0x3]
    %v1416 = vld [vmem:[#allocation2 + $0x58] sm:$0x3]
    %v1418 = vsel %vm686, %v1386, 0
    %1420 = vmatprep.subr.mxu0 0.0
    %1421 = vmatpush1.msra.mxu0 0.0
    %1422 = vmatprep.subr.mxu0 0.0
    %1423 = vmatpush1.msra.mxu0 0.0
    %1424 = vmatprep.subr.mxu0 0.0
    %1425 = vmatpush1.msra.mxu0 0.0
    %1426 = vmatprep.subr.mxu0 0.0
    %1427 = vmatpush1.msra.mxu0 0.0
    %1428 = vmatprep.subr.mxu0 0.0
    %1429 = vmatpush1.msra.mxu0 0.0
    %1430 = vmatprep.subr.mxu0 0.0
    %1431 = vmatpush1.msra.mxu0 0.0
    %1432 = vmatprep.subr.mxu0 0.0
    %1433 = vmatpush1.msra.mxu0 0.0
    %1434 = vmatprep.subr.mxu0 0.0
    %1435 = vmatpush1.msra.mxu0 0.0
    %1436 = vmatprep.subr.mxu0 0.0
    %1437 = vmatpush1.msra.mxu0 0.0
    %1438 = vmatprep.subr.mxu0 0.0
    %1439 = vmatpush1.msra.mxu0 0.0
    %1440 = vmatprep.subr.mxu0 0.0
    %1441 = vmatpush1.msra.mxu0 0.0
    %1442 = vmatprep.subr.mxu0 0.0
    %1443 = vmatpush1.msra.mxu0 0.0
    %1444 = vmatprep.subr.mxu0 %v705
    %1445 = vmatpush1.msra.mxu0 %v704
    %1446 = vmatprep.subr.mxu0 %v702
    %1447 = vmatpush1.msra.mxu0 %v701
    %1448 = vmatprep.subr.mxu0 %v699
    %1449 = vmatpush1.msra.mxu0 %v698
    %1450 = vmatprep.subr.mxu0 %v696
    %1451 = vmatpush1.msra.mxu0 %v695
    %1452 = vmatprep.subr.mxu0 0.0
    %1453 = vmatpush2.msra.mxu0 0.0
    %1454 = vmatprep.subr.mxu0 0.0
    %1455 = vmatpush2.msra.mxu0 0.0
    %1456 = vmatprep.subr.mxu0 0.0
    %1457 = vmatpush2.msra.mxu0 0.0
    %1458 = vmatprep.subr.mxu0 0.0
    %1459 = vmatpush2.msra.mxu0 0.0
    %1460 = vmatprep.subr.mxu0 0.0
    %1461 = vmatpush2.msra.mxu0 0.0
    %1462 = vmatprep.subr.mxu0 0.0
    %1463 = vmatpush2.msra.mxu0 0.0
    %1464 = vmatprep.subr.mxu0 0.0
    %1465 = vmatpush2.msra.mxu0 0.0
    %1466 = vmatprep.subr.mxu0 0.0
    %1467 = vmatpush2.msra.mxu0 0.0
    %1468 = vmatprep.subr.mxu0 0.0
    %1469 = vmatpush2.msra.mxu0 0.0
    %1470 = vmatprep.subr.mxu0 0.0
    %1471 = vmatpush2.msra.mxu0 0.0
    %1472 = vmatprep.subr.mxu0 0.0
    %1473 = vmatpush2.msra.mxu0 0.0
    %1474 = vmatprep.subr.mxu0 0.0
    %1475 = vmatpush2.msra.mxu0 0.0
    %1476 = vmatprep.subr.mxu0 0.0
    %1477 = vmatpush2.msra.mxu0 0.0
    %1478 = vmatprep.subr.mxu0 0.0
    %1479 = vmatpush2.msra.mxu0 0.0
    %1480 = vmatprep.subr.mxu0 0.0
    %1481 = vmatpush2.msra.mxu0 0.0
    %1482 = vmatprep.subr.mxu0 0.0
    %1483 = vmatpush2.msra.mxu0 0.0
    %1484 = vmatprep.mubr.f32.mxu0 0.0
    %1485 = vmatmul.mubr.f32.gmra.mxu0 %v1418
    %v1486 = vpop.f32.mrf.mxu0
    %v1487 = vadd.f32 0.0, %v1486
    %v1488 = vpop.f32.mrf.mxu0
    %v1489 = vadd.f32 0.0, %v1488
    %1490 = vdwg.mxu0
    %1491 = vmatprep.subr.mxu0 0.0
    %1492 = vmatpush1.msra.mxu0 0.0
    %1493 = vmatprep.subr.mxu0 0.0
    %1494 = vmatpush1.msra.mxu0 0.0
    %1495 = vmatprep.subr.mxu0 0.0
    %1496 = vmatpush1.msra.mxu0 0.0
    %1497 = vmatprep.subr.mxu0 0.0
    %1498 = vmatpush1.msra.mxu0 0.0
    %1499 = vmatprep.subr.mxu0 0.0
    %1500 = vmatpush1.msra.mxu0 0.0
    %1501 = vmatprep.subr.mxu0 0.0
    %1502 = vmatpush1.msra.mxu0 0.0
    %1503 = vmatprep.subr.mxu0 0.0
    %1504 = vmatpush1.msra.mxu0 0.0
    %1505 = vmatprep.subr.mxu0 0.0
    %1506 = vmatpush1.msra.mxu0 0.0
    %1507 = vmatprep.subr.mxu0 0.0
    %1508 = vmatpush1.msra.mxu0 0.0
    %1509 = vmatprep.subr.mxu0 0.0
    %1510 = vmatpush1.msra.mxu0 0.0
    %1511 = vmatprep.subr.mxu0 0.0
    %1512 = vmatpush1.msra.mxu0 0.0
    %1513 = vmatprep.subr.mxu0 0.0
    %1514 = vmatpush1.msra.mxu0 0.0
    %1515 = vmatprep.subr.mxu0 0.0
    %1516 = vmatpush1.msra.mxu0 %v706
    %1517 = vmatprep.subr.mxu0 0.0
    %1518 = vmatpush1.msra.mxu0 %v703
    %1519 = vmatprep.subr.mxu0 0.0
    %1520 = vmatpush1.msra.mxu0 %v700
    %1521 = vmatprep.subr.mxu0 0.0
    %1522 = vmatpush1.msra.mxu0 %v697
    %1523 = vmatprep.subr.mxu0 0.0
    %1524 = vmatpush2.msra.mxu0 0.0
    %1525 = vmatprep.subr.mxu0 0.0
    %1526 = vmatpush2.msra.mxu0 0.0
    %1527 = vmatprep.subr.mxu0 0.0
    %1528 = vmatpush2.msra.mxu0 0.0
    %1529 = vmatprep.subr.mxu0 0.0
    %1530 = vmatpush2.msra.mxu0 0.0
    %1531 = vmatprep.subr.mxu0 0.0
    %1532 = vmatpush2.msra.mxu0 0.0
    %1533 = vmatprep.subr.mxu0 0.0
    %1534 = vmatpush2.msra.mxu0 0.0
    %1535 = vmatprep.subr.mxu0 0.0
    %1536 = vmatpush2.msra.mxu0 0.0
    %1537 = vmatprep.subr.mxu0 0.0
    %1538 = vmatpush2.msra.mxu0 0.0
    %1539 = vmatprep.subr.mxu0 0.0
    %1540 = vmatpush2.msra.mxu0 0.0
    %1541 = vmatprep.subr.mxu0 0.0
    %1542 = vmatpush2.msra.mxu0 0.0
    %1543 = vmatprep.subr.mxu0 0.0
    %1544 = vmatpush2.msra.mxu0 0.0
    %1545 = vmatprep.subr.mxu0 0.0
    %1546 = vmatpush2.msra.mxu0 0.0
    %1547 = vmatprep.subr.mxu0 0.0
    %1548 = vmatpush2.msra.mxu0 0.0
    %1549 = vmatprep.subr.mxu0 0.0
    %1550 = vmatpush2.msra.mxu0 0.0
    %1551 = vmatprep.subr.mxu0 0.0
    %1552 = vmatpush2.msra.mxu0 0.0
    %1553 = vmatprep.subr.mxu0 0.0
    %1554 = vmatpush2.msra.mxu0 0.0
    %1555 = vmatprep.mubr.f32.mxu0 0.0
    %1556 = vmatmul.mubr.f32.gmra.mxu0 %v1418
    %v1557 = vpop.f32.mrf.mxu0
    %v1558 = vadd.f32 0.0, %v1557
    %v1559 = vpop.f32.mrf.mxu0
    %1560 = vdwg.mxu0
    %v1562 = vsel %vm686, %v1408, 0
    %1564 = vmatprep.subr.mxu0 0.0
    %1565 = vmatpush1.msra.mxu0 0.0
    %1566 = vmatprep.subr.mxu0 0.0
    %1567 = vmatpush1.msra.mxu0 0.0
    %1568 = vmatprep.subr.mxu0 0.0
    %1569 = vmatpush1.msra.mxu0 0.0
    %1570 = vmatprep.subr.mxu0 0.0
    %1571 = vmatpush1.msra.mxu0 0.0
    %1572 = vmatprep.subr.mxu0 0.0
    %1573 = vmatpush1.msra.mxu0 0.0
    %1574 = vmatprep.subr.mxu0 0.0
    %1575 = vmatpush1.msra.mxu0 0.0
    %1576 = vmatprep.subr.mxu0 0.0
    %1577 = vmatpush1.msra.mxu0 0.0
    %1578 = vmatprep.subr.mxu0 0.0
    %1579 = vmatpush1.msra.mxu0 0.0
    %1580 = vmatprep.subr.mxu0 0.0
    %1581 = vmatpush1.msra.mxu0 0.0
    %1582 = vmatprep.subr.mxu0 0.0
    %1583 = vmatpush1.msra.mxu0 0.0
    %1584 = vmatprep.subr.mxu0 0.0
    %1585 = vmatpush1.msra.mxu0 0.0
    %1586 = vmatprep.subr.mxu0 0.0
    %1587 = vmatpush1.msra.mxu0 0.0
    %1588 = vmatprep.subr.mxu0 %v717
    %1589 = vmatpush1.msra.mxu0 %v716
    %1590 = vmatprep.subr.mxu0 %v714
    %1591 = vmatpush1.msra.mxu0 %v713
    %1592 = vmatprep.subr.mxu0 %v711
    %1593 = vmatpush1.msra.mxu0 %v710
    %1594 = vmatprep.subr.mxu0 %v708
    %1595 = vmatpush1.msra.mxu0 %v707
    %1596 = vmatprep.subr.mxu0 0.0
    %1597 = vmatpush2.msra.mxu0 0.0
    %1598 = vmatprep.subr.mxu0 0.0
    %1599 = vmatpush2.msra.mxu0 0.0
    %1600 = vmatprep.subr.mxu0 0.0
    %1601 = vmatpush2.msra.mxu0 0.0
    %1602 = vmatprep.subr.mxu0 0.0
    %1603 = vmatpush2.msra.mxu0 0.0
    %1604 = vmatprep.subr.mxu0 0.0
    %1605 = vmatpush2.msra.mxu0 0.0
    %1606 = vmatprep.subr.mxu0 0.0
    %1607 = vmatpush2.msra.mxu0 0.0
    %1608 = vmatprep.subr.mxu0 0.0
    %1609 = vmatpush2.msra.mxu0 0.0
    %1610 = vmatprep.subr.mxu0 0.0
    %1611 = vmatpush2.msra.mxu0 0.0
    %1612 = vmatprep.subr.mxu0 0.0
    %1613 = vmatpush2.msra.mxu0 0.0
    %1614 = vmatprep.subr.mxu0 0.0
    %1615 = vmatpush2.msra.mxu0 0.0
    %1616 = vmatprep.subr.mxu0 0.0
    %1617 = vmatpush2.msra.mxu0 0.0
    %1618 = vmatprep.subr.mxu0 0.0
    %1619 = vmatpush2.msra.mxu0 0.0
    %1620 = vmatprep.subr.mxu0 0.0
    %1621 = vmatpush2.msra.mxu0 0.0
    %1622 = vmatprep.subr.mxu0 0.0
    %1623 = vmatpush2.msra.mxu0 0.0
    %1624 = vmatprep.subr.mxu0 0.0
    %1625 = vmatpush2.msra.mxu0 0.0
    %1626 = vmatprep.subr.mxu0 0.0
    %1627 = vmatpush2.msra.mxu0 0.0
    %1628 = vmatprep.mubr.f32.mxu0 0.0
    %1629 = vmatmul.mubr.f32.gmra.mxu0 %v1562
    %v1630 = vpop.f32.mrf.mxu0
    %v1631 = vadd.f32 0.0, %v1630
    %v1632 = vpop.f32.mrf.mxu0
    %v1633 = vadd.f32 0.0, %v1632
    %1634 = vdwg.mxu0
    %1635 = vmatprep.subr.mxu0 0.0
    %1636 = vmatpush1.msra.mxu0 0.0
    %1637 = vmatprep.subr.mxu0 0.0
    %1638 = vmatpush1.msra.mxu0 0.0
    %1639 = vmatprep.subr.mxu0 0.0
    %1640 = vmatpush1.msra.mxu0 0.0
    %1641 = vmatprep.subr.mxu0 0.0
    %1642 = vmatpush1.msra.mxu0 0.0
    %1643 = vmatprep.subr.mxu0 0.0
    %1644 = vmatpush1.msra.mxu0 0.0
    %1645 = vmatprep.subr.mxu0 0.0
    %1646 = vmatpush1.msra.mxu0 0.0
    %1647 = vmatprep.subr.mxu0 0.0
    %1648 = vmatpush1.msra.mxu0 0.0
    %1649 = vmatprep.subr.mxu0 0.0
    %1650 = vmatpush1.msra.mxu0 0.0
    %1651 = vmatprep.subr.mxu0 0.0
    %1652 = vmatpush1.msra.mxu0 0.0
    %1653 = vmatprep.subr.mxu0 0.0
    %1654 = vmatpush1.msra.mxu0 0.0
    %1655 = vmatprep.subr.mxu0 0.0
    %1656 = vmatpush1.msra.mxu0 0.0
    %1657 = vmatprep.subr.mxu0 0.0
    %1658 = vmatpush1.msra.mxu0 0.0
    %1659 = vmatprep.subr.mxu0 0.0
    %1660 = vmatpush1.msra.mxu0 %v718
    %1661 = vmatprep.subr.mxu0 0.0
    %1662 = vmatpush1.msra.mxu0 %v715
    %1663 = vmatprep.subr.mxu0 0.0
    %1664 = vmatpush1.msra.mxu0 %v712
    %1665 = vmatprep.subr.mxu0 0.0
    %1666 = vmatpush1.msra.mxu0 %v709
    %1667 = vmatprep.subr.mxu0 0.0
    %1668 = vmatpush2.msra.mxu0 0.0
    %1669 = vmatprep.subr.mxu0 0.0
    %1670 = vmatpush2.msra.mxu0 0.0
    %1671 = vmatprep.subr.mxu0 0.0
    %1672 = vmatpush2.msra.mxu0 0.0
    %1673 = vmatprep.subr.mxu0 0.0
    %1674 = vmatpush2.msra.mxu0 0.0
    %1675 = vmatprep.subr.mxu0 0.0
    %1676 = vmatpush2.msra.mxu0 0.0
    %1677 = vmatprep.subr.mxu0 0.0
    %1678 = vmatpush2.msra.mxu0 0.0
    %1679 = vmatprep.subr.mxu0 0.0
    %1680 = vmatpush2.msra.mxu0 0.0
    %1681 = vmatprep.subr.mxu0 0.0
    %1682 = vmatpush2.msra.mxu0 0.0
    %1683 = vmatprep.subr.mxu0 0.0
    %1684 = vmatpush2.msra.mxu0 0.0
    %1685 = vmatprep.subr.mxu0 0.0
    %1686 = vmatpush2.msra.mxu0 0.0
    %1687 = vmatprep.subr.mxu0 0.0
    %1688 = vmatpush2.msra.mxu0 0.0
    %1689 = vmatprep.subr.mxu0 0.0
    %1690 = vmatpush2.msra.mxu0 0.0
    %1691 = vmatprep.subr.mxu0 0.0
    %1692 = vmatpush2.msra.mxu0 0.0
    %1693 = vmatprep.subr.mxu0 0.0
    %1694 = vmatpush2.msra.mxu0 0.0
    %1695 = vmatprep.subr.mxu0 0.0
    %1696 = vmatpush2.msra.mxu0 0.0
    %1697 = vmatprep.subr.mxu0 0.0
    %1698 = vmatpush2.msra.mxu0 0.0
    %1699 = vmatprep.mubr.f32.mxu0 0.0
    %1700 = vmatmul.mubr.f32.gmra.mxu0 %v1562
    %v1701 = vpop.f32.mrf.mxu0
    %v1702 = vadd.f32 0.0, %v1701
    %v1703 = vpop.f32.mrf.mxu0
    %1704 = vdwg.mxu0
    %v1705 = vadd.f32 %v1411, %v1487
    %v1706 = vxor.u32 %v1705, 2147483648
    %v1707 = vmul.f32 %v1706, 1.442695
    %v1708 = vpow.pop %v1707
    %v1709 = vadd.f32 %v1708, 1.0
    %v1710 = vrcp.pop %v1709
    %v1711 = vmul.f32 1.0, %v1710
    %v1712 = vadd.f32 %v1412, %v1489
    %v1713 = vxor.u32 %v1712, 2147483648
    %v1714 = vmul.f32 %v1713, 1.442695
    %v1715 = vpow.pop %v1714
    %v1716 = vadd.f32 %v1715, 1.0
    %v1717 = vrcp.pop %v1716
    %v1718 = vmul.f32 1.0, %v1717
    %v1719 = vadd.f32 %v1558, %v724
    %v1720 = vmul.f32 %v1711, %v1719
    %v1721 = vadd.f32 %v1413, %v1720
    %v1722 = vtanh.pop %v1721
    %v1723 = vsub.f32 1.0, %v1718
    %v1724 = vmul.f32 %v1723, %v1722
    %v1725 = vmul.f32 %v1718, %v1386
    %v1726 = vadd.f32 %v1724, %v1725
    %v1727 = vadd.f32 %v1414, %v1631
    %v1728 = vxor.u32 %v1727, 2147483648
    %v1729 = vmul.f32 %v1728, 1.442695
    %v1730 = vpow.pop %v1729
    %v1731 = vadd.f32 %v1730, 1.0
    %v1732 = vrcp.pop %v1731
    %v1733 = vmul.f32 1.0, %v1732
    %v1734 = vadd.f32 %v1415, %v1633
    %v1735 = vxor.u32 %v1734, 2147483648
    %v1736 = vmul.f32 %v1735, 1.442695
    %v1737 = vpow.pop %v1736
    %v1738 = vadd.f32 %v1737, 1.0
    %v1739 = vrcp.pop %v1738
    %v1740 = vmul.f32 1.0, %v1739
    %v1741 = vadd.f32 %v1702, %v731
    %v1742 = vmul.f32 %v1733, %v1741
    %v1743 = vadd.f32 %v1416, %v1742
    %v1744 = vtanh.pop %v1743
    %v1745 = vsub.f32 1.0, %v1740
    %v1746 = vmul.f32 %v1745, %v1744
    %v1747 = vmul.f32 %v1740, %v1408
    %v1748 = vadd.f32 %v1746, %v1747
    %1749 = vst.msk [vmem:[#allocation3 + $0x10] sm:$0x3] %vm1068, %v1726
    %1750 = vst.msk [vmem:[#allocation4 + $0x8] sm:$0x3] %vm1068, %v1748
    %v1751 = vld [vmem:[#allocation2 + $0x90] sm:$0x3]
    %v1752 = vld [vmem:[#allocation2 + $0x98] sm:$0x3]
    %v1753 = vld [vmem:[#allocation2 + $0xa0] sm:$0x3]
    %v1754 = vld [vmem:[#allocation2 + $0x18] sm:$0x3]
    %v1755 = vld [vmem:[#allocation2 + $0x20] sm:$0x3]
    %v1756 = vld [vmem:[#allocation2 + $0x28] sm:$0x3]
    %v1758 = vsel %vm686, %v1726, 0
    %1760 = vmatprep.subr.mxu0 0.0
    %1761 = vmatpush1.msra.mxu0 0.0
    %1762 = vmatprep.subr.mxu0 0.0
    %1763 = vmatpush1.msra.mxu0 0.0
    %1764 = vmatprep.subr.mxu0 0.0
    %1765 = vmatpush1.msra.mxu0 0.0
    %1766 = vmatprep.subr.mxu0 0.0
    %1767 = vmatpush1.msra.mxu0 0.0
    %1768 = vmatprep.subr.mxu0 0.0
    %1769 = vmatpush1.msra.mxu0 0.0
    %1770 = vmatprep.subr.mxu0 0.0
    %1771 = vmatpush1.msra.mxu0 0.0
    %1772 = vmatprep.subr.mxu0 0.0
    %1773 = vmatpush1.msra.mxu0 0.0
    %1774 = vmatprep.subr.mxu0 0.0
    %1775 = vmatpush1.msra.mxu0 0.0
    %1776 = vmatprep.subr.mxu0 0.0
    %1777 = vmatpush1.msra.mxu0 0.0
    %1778 = vmatprep.subr.mxu0 0.0
    %1779 = vmatpush1.msra.mxu0 0.0
    %1780 = vmatprep.subr.mxu0 0.0
    %1781 = vmatpush1.msra.mxu0 0.0
    %1782 = vmatprep.subr.mxu0 0.0
    %1783 = vmatpush1.msra.mxu0 0.0
    %1784 = vmatprep.subr.mxu0 %v705
    %1785 = vmatpush1.msra.mxu0 %v704
    %1786 = vmatprep.subr.mxu0 %v702
    %1787 = vmatpush1.msra.mxu0 %v701
    %1788 = vmatprep.subr.mxu0 %v699
    %1789 = vmatpush1.msra.mxu0 %v698
    %1790 = vmatprep.subr.mxu0 %v696
    %1791 = vmatpush1.msra.mxu0 %v695
    %1792 = vmatprep.subr.mxu0 0.0
    %1793 = vmatpush2.msra.mxu0 0.0
    %1794 = vmatprep.subr.mxu0 0.0
    %1795 = vmatpush2.msra.mxu0 0.0
    %1796 = vmatprep.subr.mxu0 0.0
    %1797 = vmatpush2.msra.mxu0 0.0
    %1798 = vmatprep.subr.mxu0 0.0
    %1799 = vmatpush2.msra.mxu0 0.0
    %1800 = vmatprep.subr.mxu0 0.0
    %1801 = vmatpush2.msra.mxu0 0.0
    %1802 = vmatprep.subr.mxu0 0.0
    %1803 = vmatpush2.msra.mxu0 0.0
    %1804 = vmatprep.subr.mxu0 0.0
    %1805 = vmatpush2.msra.mxu0 0.0
    %1806 = vmatprep.subr.mxu0 0.0
    %1807 = vmatpush2.msra.mxu0 0.0
    %1808 = vmatprep.subr.mxu0 0.0
    %1809 = vmatpush2.msra.mxu0 0.0
    %1810 = vmatprep.subr.mxu0 0.0
    %1811 = vmatpush2.msra.mxu0 0.0
    %1812 = vmatprep.subr.mxu0 0.0
    %1813 = vmatpush2.msra.mxu0 0.0
    %1814 = vmatprep.subr.mxu0 0.0
    %1815 = vmatpush2.msra.mxu0 0.0
    %1816 = vmatprep.subr.mxu0 0.0
    %1817 = vmatpush2.msra.mxu0 0.0
    %1818 = vmatprep.subr.mxu0 0.0
    %1819 = vmatpush2.msra.mxu0 0.0
    %1820 = vmatprep.subr.mxu0 0.0
    %1821 = vmatpush2.msra.mxu0 0.0
    %1822 = vmatprep.subr.mxu0 0.0
    %1823 = vmatpush2.msra.mxu0 0.0
    %1824 = vmatprep.mubr.f32.mxu0 0.0
    %1825 = vmatmul.mubr.f32.gmra.mxu0 %v1758
    %v1826 = vpop.f32.mrf.mxu0
    %v1827 = vadd.f32 0.0, %v1826
    %v1828 = vpop.f32.mrf.mxu0
    %v1829 = vadd.f32 0.0, %v1828
    %1830 = vdwg.mxu0
    %1831 = vmatprep.subr.mxu0 0.0
    %1832 = vmatpush1.msra.mxu0 0.0
    %1833 = vmatprep.subr.mxu0 0.0
    %1834 = vmatpush1.msra.mxu0 0.0
    %1835 = vmatprep.subr.mxu0 0.0
    %1836 = vmatpush1.msra.mxu0 0.0
    %1837 = vmatprep.subr.mxu0 0.0
    %1838 = vmatpush1.msra.mxu0 0.0
    %1839 = vmatprep.subr.mxu0 0.0
    %1840 = vmatpush1.msra.mxu0 0.0
    %1841 = vmatprep.subr.mxu0 0.0
    %1842 = vmatpush1.msra.mxu0 0.0
    %1843 = vmatprep.subr.mxu0 0.0
    %1844 = vmatpush1.msra.mxu0 0.0
    %1845 = vmatprep.subr.mxu0 0.0
    %1846 = vmatpush1.msra.mxu0 0.0
    %1847 = vmatprep.subr.mxu0 0.0
    %1848 = vmatpush1.msra.mxu0 0.0
    %1849 = vmatprep.subr.mxu0 0.0
    %1850 = vmatpush1.msra.mxu0 0.0
    %1851 = vmatprep.subr.mxu0 0.0
    %1852 = vmatpush1.msra.mxu0 0.0
    %1853 = vmatprep.subr.mxu0 0.0
    %1854 = vmatpush1.msra.mxu0 0.0
    %1855 = vmatprep.subr.mxu0 0.0
    %1856 = vmatpush1.msra.mxu0 %v706
    %1857 = vmatprep.subr.mxu0 0.0
    %1858 = vmatpush1.msra.mxu0 %v703
    %1859 = vmatprep.subr.mxu0 0.0
    %1860 = vmatpush1.msra.mxu0 %v700
    %1861 = vmatprep.subr.mxu0 0.0
    %1862 = vmatpush1.msra.mxu0 %v697
    %1863 = vmatprep.subr.mxu0 0.0
    %1864 = vmatpush2.msra.mxu0 0.0
    %1865 = vmatprep.subr.mxu0 0.0
    %1866 = vmatpush2.msra.mxu0 0.0
    %1867 = vmatprep.subr.mxu0 0.0
    %1868 = vmatpush2.msra.mxu0 0.0
    %1869 = vmatprep.subr.mxu0 0.0
    %1870 = vmatpush2.msra.mxu0 0.0
    %1871 = vmatprep.subr.mxu0 0.0
    %1872 = vmatpush2.msra.mxu0 0.0
    %1873 = vmatprep.subr.mxu0 0.0
    %1874 = vmatpush2.msra.mxu0 0.0
    %1875 = vmatprep.subr.mxu0 0.0
    %1876 = vmatpush2.msra.mxu0 0.0
    %1877 = vmatprep.subr.mxu0 0.0
    %1878 = vmatpush2.msra.mxu0 0.0
    %1879 = vmatprep.subr.mxu0 0.0
    %1880 = vmatpush2.msra.mxu0 0.0
    %1881 = vmatprep.subr.mxu0 0.0
    %1882 = vmatpush2.msra.mxu0 0.0
    %1883 = vmatprep.subr.mxu0 0.0
    %1884 = vmatpush2.msra.mxu0 0.0
    %1885 = vmatprep.subr.mxu0 0.0
    %1886 = vmatpush2.msra.mxu0 0.0
    %1887 = vmatprep.subr.mxu0 0.0
    %1888 = vmatpush2.msra.mxu0 0.0
    %1889 = vmatprep.subr.mxu0 0.0
    %1890 = vmatpush2.msra.mxu0 0.0
    %1891 = vmatprep.subr.mxu0 0.0
    %1892 = vmatpush2.msra.mxu0 0.0
    %1893 = vmatprep.subr.mxu0 0.0
    %1894 = vmatpush2.msra.mxu0 0.0
    %1895 = vmatprep.mubr.f32.mxu0 0.0
    %1896 = vmatmul.mubr.f32.gmra.mxu0 %v1758
    %v1897 = vpop.f32.mrf.mxu0
    %v1898 = vadd.f32 0.0, %v1897
    %v1899 = vpop.f32.mrf.mxu0
    %1900 = vdwg.mxu0
    %v1902 = vsel %vm686, %v1748, 0
    %1904 = vmatprep.subr.mxu0 0.0
    %1905 = vmatpush1.msra.mxu0 0.0
    %1906 = vmatprep.subr.mxu0 0.0
    %1907 = vmatpush1.msra.mxu0 0.0
    %1908 = vmatprep.subr.mxu0 0.0
    %1909 = vmatpush1.msra.mxu0 0.0
    %1910 = vmatprep.subr.mxu0 0.0
    %1911 = vmatpush1.msra.mxu0 0.0
    %1912 = vmatprep.subr.mxu0 0.0
    %1913 = vmatpush1.msra.mxu0 0.0
    %1914 = vmatprep.subr.mxu0 0.0
    %1915 = vmatpush1.msra.mxu0 0.0
    %1916 = vmatprep.subr.mxu0 0.0
    %1917 = vmatpush1.msra.mxu0 0.0
    %1918 = vmatprep.subr.mxu0 0.0
    %1919 = vmatpush1.msra.mxu0 0.0
    %1920 = vmatprep.subr.mxu0 0.0
    %1921 = vmatpush1.msra.mxu0 0.0
    %1922 = vmatprep.subr.mxu0 0.0
    %1923 = vmatpush1.msra.mxu0 0.0
    %1924 = vmatprep.subr.mxu0 0.0
    %1925 = vmatpush1.msra.mxu0 0.0
    %1926 = vmatprep.subr.mxu0 0.0
    %1927 = vmatpush1.msra.mxu0 0.0
    %1928 = vmatprep.subr.mxu0 %v717
    %1929 = vmatpush1.msra.mxu0 %v716
    %1930 = vmatprep.subr.mxu0 %v714
    %1931 = vmatpush1.msra.mxu0 %v713
    %1932 = vmatprep.subr.mxu0 %v711
    %1933 = vmatpush1.msra.mxu0 %v710
    %1934 = vmatprep.subr.mxu0 %v708
    %1935 = vmatpush1.msra.mxu0 %v707
    %1936 = vmatprep.subr.mxu0 0.0
    %1937 = vmatpush2.msra.mxu0 0.0
    %1938 = vmatprep.subr.mxu0 0.0
    %1939 = vmatpush2.msra.mxu0 0.0
    %1940 = vmatprep.subr.mxu0 0.0
    %1941 = vmatpush2.msra.mxu0 0.0
    %1942 = vmatprep.subr.mxu0 0.0
    %1943 = vmatpush2.msra.mxu0 0.0
    %1944 = vmatprep.subr.mxu0 0.0
    %1945 = vmatpush2.msra.mxu0 0.0
    %1946 = vmatprep.subr.mxu0 0.0
    %1947 = vmatpush2.msra.mxu0 0.0
    %1948 = vmatprep.subr.mxu0 0.0
    %1949 = vmatpush2.msra.mxu0 0.0
    %1950 = vmatprep.subr.mxu0 0.0
    %1951 = vmatpush2.msra.mxu0 0.0
    %1952 = vmatprep.subr.mxu0 0.0
    %1953 = vmatpush2.msra.mxu0 0.0
    %1954 = vmatprep.subr.mxu0 0.0
    %1955 = vmatpush2.msra.mxu0 0.0
    %1956 = vmatprep.subr.mxu0 0.0
    %1957 = vmatpush2.msra.mxu0 0.0
    %1958 = vmatprep.subr.mxu0 0.0
    %1959 = vmatpush2.msra.mxu0 0.0
    %1960 = vmatprep.subr.mxu0 0.0
    %1961 = vmatpush2.msra.mxu0 0.0
    %1962 = vmatprep.subr.mxu0 0.0
    %1963 = vmatpush2.msra.mxu0 0.0
    %1964 = vmatprep.subr.mxu0 0.0
    %1965 = vmatpush2.msra.mxu0 0.0
    %1966 = vmatprep.subr.mxu0 0.0
    %1967 = vmatpush2.msra.mxu0 0.0
    %1968 = vmatprep.mubr.f32.mxu0 0.0
    %1969 = vmatmul.mubr.f32.gmra.mxu0 %v1902
    %v1970 = vpop.f32.mrf.mxu0
    %v1971 = vadd.f32 0.0, %v1970
    %v1972 = vpop.f32.mrf.mxu0
    %v1973 = vadd.f32 0.0, %v1972
    %1974 = vdwg.mxu0
    %1975 = vmatprep.subr.mxu0 0.0
    %1976 = vmatpush1.msra.mxu0 0.0
    %1977 = vmatprep.subr.mxu0 0.0
    %1978 = vmatpush1.msra.mxu0 0.0
    %1979 = vmatprep.subr.mxu0 0.0
    %1980 = vmatpush1.msra.mxu0 0.0
    %1981 = vmatprep.subr.mxu0 0.0
    %1982 = vmatpush1.msra.mxu0 0.0
    %1983 = vmatprep.subr.mxu0 0.0
    %1984 = vmatpush1.msra.mxu0 0.0
    %1985 = vmatprep.subr.mxu0 0.0
    %1986 = vmatpush1.msra.mxu0 0.0
    %1987 = vmatprep.subr.mxu0 0.0
    %1988 = vmatpush1.msra.mxu0 0.0
    %1989 = vmatprep.subr.mxu0 0.0
    %1990 = vmatpush1.msra.mxu0 0.0
    %1991 = vmatprep.subr.mxu0 0.0
    %1992 = vmatpush1.msra.mxu0 0.0
    %1993 = vmatprep.subr.mxu0 0.0
    %1994 = vmatpush1.msra.mxu0 0.0
    %1995 = vmatprep.subr.mxu0 0.0
    %1996 = vmatpush1.msra.mxu0 0.0
    %1997 = vmatprep.subr.mxu0 0.0
    %1998 = vmatpush1.msra.mxu0 0.0
    %1999 = vmatprep.subr.mxu0 0.0
    %2000 = vmatpush1.msra.mxu0 %v718
    %2001 = vmatprep.subr.mxu0 0.0
    %2002 = vmatpush1.msra.mxu0 %v715
    %2003 = vmatprep.subr.mxu0 0.0
    %2004 = vmatpush1.msra.mxu0 %v712
    %2005 = vmatprep.subr.mxu0 0.0
    %2006 = vmatpush1.msra.mxu0 %v709
    %2007 = vmatprep.subr.mxu0 0.0
    %2008 = vmatpush2.msra.mxu0 0.0
    %2009 = vmatprep.subr.mxu0 0.0
    %2010 = vmatpush2.msra.mxu0 0.0
    %2011 = vmatprep.subr.mxu0 0.0
    %2012 = vmatpush2.msra.mxu0 0.0
    %2013 = vmatprep.subr.mxu0 0.0
    %2014 = vmatpush2.msra.mxu0 0.0
    %2015 = vmatprep.subr.mxu0 0.0
    %2016 = vmatpush2.msra.mxu0 0.0
    %2017 = vmatprep.subr.mxu0 0.0
    %2018 = vmatpush2.msra.mxu0 0.0
    %2019 = vmatprep.subr.mxu0 0.0
    %2020 = vmatpush2.msra.mxu0 0.0
    %2021 = vmatprep.subr.mxu0 0.0
    %2022 = vmatpush2.msra.mxu0 0.0
    %2023 = vmatprep.subr.mxu0 0.0
    %2024 = vmatpush2.msra.mxu0 0.0
    %2025 = vmatprep.subr.mxu0 0.0
    %2026 = vmatpush2.msra.mxu0 0.0
    %2027 = vmatprep.subr.mxu0 0.0
    %2028 = vmatpush2.msra.mxu0 0.0
    %2029 = vmatprep.subr.mxu0 0.0
    %2030 = vmatpush2.msra.mxu0 0.0
    %2031 = vmatprep.subr.mxu0 0.0
    %2032 = vmatpush2.msra.mxu0 0.0
    %2033 = vmatprep.subr.mxu0 0.0
    %2034 = vmatpush2.msra.mxu0 0.0
    %2035 = vmatprep.subr.mxu0 0.0
    %2036 = vmatpush2.msra.mxu0 0.0
    %2037 = vmatprep.subr.mxu0 0.0
    %2038 = vmatpush2.msra.mxu0 0.0
    %2039 = vmatprep.mubr.f32.mxu0 0.0
    %2040 = vmatmul.mubr.f32.gmra.mxu0 %v1902
    %v2041 = vpop.f32.mrf.mxu0
    %v2042 = vadd.f32 0.0, %v2041
    %v2043 = vpop.f32.mrf.mxu0
    %2044 = vdwg.mxu0
    %v2045 = vadd.f32 %v1751, %v1827
    %v2046 = vxor.u32 %v2045, 2147483648
    %v2047 = vmul.f32 %v2046, 1.442695
    %v2048 = vpow.pop %v2047
    %v2049 = vadd.f32 %v2048, 1.0
    %v2050 = vrcp.pop %v2049
    %v2051 = vmul.f32 1.0, %v2050
    %v2052 = vadd.f32 %v1752, %v1829
    %v2053 = vxor.u32 %v2052, 2147483648
    %v2054 = vmul.f32 %v2053, 1.442695
    %v2055 = vpow.pop %v2054
    %v2056 = vadd.f32 %v2055, 1.0
    %v2057 = vrcp.pop %v2056
    %v2058 = vmul.f32 1.0, %v2057
    %v2059 = vadd.f32 %v1898, %v724
    %v2060 = vmul.f32 %v2051, %v2059
    %v2061 = vadd.f32 %v1753, %v2060
    %v2062 = vtanh.pop %v2061
    %v2063 = vsub.f32 1.0, %v2058
    %v2064 = vmul.f32 %v2063, %v2062
    %v2065 = vmul.f32 %v2058, %v1726
    %v2066 = vadd.f32 %v2064, %v2065
    %v2067 = vadd.f32 %v1754, %v1971
    %v2068 = vxor.u32 %v2067, 2147483648
    %v2069 = vmul.f32 %v2068, 1.442695
    %v2070 = vpow.pop %v2069
    %v2071 = vadd.f32 %v2070, 1.0
    %v2072 = vrcp.pop %v2071
    %v2073 = vmul.f32 1.0, %v2072
    %v2074 = vadd.f32 %v1755, %v1973
    %v2075 = vxor.u32 %v2074, 2147483648
    %v2076 = vmul.f32 %v2075, 1.442695
    %v2077 = vpow.pop %v2076
    %v2078 = vadd.f32 %v2077, 1.0
    %v2079 = vrcp.pop %v2078
    %v2080 = vmul.f32 1.0, %v2079
    %v2081 = vadd.f32 %v2042, %v731
    %v2082 = vmul.f32 %v2073, %v2081
    %v2083 = vadd.f32 %v1756, %v2082
    %v2084 = vtanh.pop %v2083
    %v2085 = vsub.f32 1.0, %v2080
    %v2086 = vmul.f32 %v2085, %v2084
    %v2087 = vmul.f32 %v2080, %v1748
    %v2088 = vadd.f32 %v2086, %v2087
    %2089 = vst.msk [vmem:[#allocation3 + $0x18] sm:$0x3] %vm1068, %v2066
    %2090 = vst.msk [vmem:[#allocation4] sm:$0x3] %vm1068, %v2088
    %v2091 = vld [vmem:[#allocation3] sm:$0xff]
    %v2092 = vld [vmem:[#allocation3 + $0x8] sm:$0xff]
    %v2093 = vld [vmem:[#allocation3 + $0x10] sm:$0xff]
    %v2094 = vld [vmem:[#allocation3 + $0x18] sm:$0xff]
    %v2095 = vld [vmem:[#allocation4] sm:$0xff]
    %v2096 = vld [vmem:[#allocation4 + $0x8] sm:$0xff]
    %v2097 = vld [vmem:[#allocation4 + $0x10] sm:$0xff]
    %v2098 = vld [vmem:[#allocation4 + $0x18] sm:$0xff]
    %v2099 = vld [vmem:[%s9] sm:$0xff]
    %v2100 = vld [vmem:[%s9 + $0x8] sm:$0xff]
    %v2101 = vld [vmem:[%s9 + $0x10] sm:$0xff]
    %v2102 = vld [vmem:[%s9 + $0x18] sm:$0xff]
    %v2103 = vld [vmem:[%s9 + $0x20] sm:$0xff]
    %v2104 = vld [vmem:[%s9 + $0x28] sm:$0xff]
    %v2105 = vld [vmem:[%s9 + $0x30] sm:$0xff]
    %v2106 = vld [vmem:[%s9 + $0x38] sm:$0xff]
    %v2107 = vld [vmem:[%s9 + $0x40] sm:$0xff]
    %v2108 = vld [vmem:[%s9 + $0x48] sm:$0xff]
    %v2109 = vld [vmem:[%s9 + $0x50] sm:$0xff]
    %v2110 = vld [vmem:[%s9 + $0x58] sm:$0xff]
    %v2111 = vld [vmem:[%s9 + $0x60] sm:$0xff]
    %v2112 = vld [vmem:[%s9 + $0x68] sm:$0xff]
    %v2113 = vld [vmem:[%s9 + $0x70] sm:$0xff]
    %v2114 = vld [vmem:[%s9 + $0x78] sm:$0xff]
    %v2115 = vld [vmem:[%s9 + $0x80] sm:$0xff]
    %v2116 = vld [vmem:[%s9 + $0x88] sm:$0xff]
    %v2117 = vld [vmem:[%s9 + $0x90] sm:$0xff]
    %v2118 = vld [vmem:[%s9 + $0x98] sm:$0xff]
    %v2119 = vld [vmem:[%s9 + $0xa0] sm:$0xff]
    %v2120 = vld [vmem:[%s9 + $0xa8] sm:$0xff]
    %v2121 = vld [vmem:[%s9 + $0xb0] sm:$0xff]
    %v2122 = vld [vmem:[%s9 + $0xb8] sm:$0xff]
    %v2124 = vsel %vm686, %v2095, 0
    %v2127 = vsel %vm686, %v2096, 0
    %v2130 = vsel %vm686, %v2097, 0
    %v2133 = vsel %vm686, %v2098, 0
    %2135 = vmatprep.subr.mxu0 0.0
    %2136 = vmatpush1.msra.mxu0 0.0
    %2137 = vmatprep.subr.mxu0 0.0
    %2138 = vmatpush1.msra.mxu0 0.0
    %2139 = vmatprep.subr.mxu0 0.0
    %2140 = vmatpush1.msra.mxu0 0.0
    %2141 = vmatprep.subr.mxu0 0.0
    %2142 = vmatpush1.msra.mxu0 0.0
    %2143 = vmatprep.subr.mxu0 0.0
    %2144 = vmatpush1.msra.mxu0 0.0
    %2145 = vmatprep.subr.mxu0 0.0
    %2146 = vmatpush1.msra.mxu0 0.0
    %2147 = vmatprep.subr.mxu0 0.0
    %2148 = vmatpush1.msra.mxu0 0.0
    %2149 = vmatprep.subr.mxu0 0.0
    %2150 = vmatpush1.msra.mxu0 0.0
    %2151 = vmatprep.subr.mxu0 0.0
    %2152 = vmatpush1.msra.mxu0 0.0
    %2153 = vmatprep.subr.mxu0 0.0
    %2154 = vmatpush1.msra.mxu0 0.0
    %2155 = vmatprep.subr.mxu0 0.0
    %2156 = vmatpush1.msra.mxu0 0.0
    %2157 = vmatprep.subr.mxu0 0.0
    %2158 = vmatpush1.msra.mxu0 0.0
    %2159 = vmatprep.subr.mxu0 %v2121
    %2160 = vmatpush1.msra.mxu0 %v2120
    %2161 = vmatprep.subr.mxu0 %v2118
    %2162 = vmatpush1.msra.mxu0 %v2117
    %2163 = vmatprep.subr.mxu0 %v2115
    %2164 = vmatpush1.msra.mxu0 %v2114
    %2165 = vmatprep.subr.mxu0 %v2112
    %2166 = vmatpush1.msra.mxu0 %v2111
    %2167 = vmatprep.subr.mxu0 0.0
    %2168 = vmatpush2.msra.mxu0 0.0
    %2169 = vmatprep.subr.mxu0 0.0
    %2170 = vmatpush2.msra.mxu0 0.0
    %2171 = vmatprep.subr.mxu0 0.0
    %2172 = vmatpush2.msra.mxu0 0.0
    %2173 = vmatprep.subr.mxu0 0.0
    %2174 = vmatpush2.msra.mxu0 0.0
    %2175 = vmatprep.subr.mxu0 0.0
    %2176 = vmatpush2.msra.mxu0 0.0
    %2177 = vmatprep.subr.mxu0 0.0
    %2178 = vmatpush2.msra.mxu0 0.0
    %2179 = vmatprep.subr.mxu0 0.0
    %2180 = vmatpush2.msra.mxu0 0.0
    %2181 = vmatprep.subr.mxu0 0.0
    %2182 = vmatpush2.msra.mxu0 0.0
    %2183 = vmatprep.subr.mxu0 0.0
    %2184 = vmatpush2.msra.mxu0 0.0
    %2185 = vmatprep.subr.mxu0 0.0
    %2186 = vmatpush2.msra.mxu0 0.0
    %2187 = vmatprep.subr.mxu0 0.0
    %2188 = vmatpush2.msra.mxu0 0.0
    %2189 = vmatprep.subr.mxu0 0.0
    %2190 = vmatpush2.msra.mxu0 0.0
    %2191 = vmatprep.subr.mxu0 0.0
    %2192 = vmatpush2.msra.mxu0 0.0
    %2193 = vmatprep.subr.mxu0 0.0
    %2194 = vmatpush2.msra.mxu0 0.0
    %2195 = vmatprep.subr.mxu0 0.0
    %2196 = vmatpush2.msra.mxu0 0.0
    %2197 = vmatprep.subr.mxu0 0.0
    %2198 = vmatpush2.msra.mxu0 0.0
    %2199 = vmatprep.mubr.f32.mxu0 0.0
    %2200 = vmatmul.mubr.f32.gmra.mxu0 %v2124
    %v2201 = vpop.f32.mrf.mxu0
    %v2202 = vadd.f32 0.0, %v2201
    %v2203 = vpop.f32.mrf.mxu0
    %v2204 = vadd.f32 0.0, %v2203
    %2205 = vmatprep.mubr.f32.mxu0 0.0
    %2206 = vmatmul.mubr.f32.gmra.mxu0 %v2127
    %v2207 = vpop.f32.mrf.mxu0
    %v2208 = vadd.f32 0.0, %v2207
    %v2209 = vpop.f32.mrf.mxu0
    %v2210 = vadd.f32 0.0, %v2209
    %2211 = vmatprep.mubr.f32.mxu0 0.0
    %2212 = vmatmul.mubr.f32.gmra.mxu0 %v2130
    %v2213 = vpop.f32.mrf.mxu0
    %v2214 = vadd.f32 0.0, %v2213
    %v2215 = vpop.f32.mrf.mxu0
    %v2216 = vadd.f32 0.0, %v2215
    %2217 = vmatprep.mubr.f32.mxu0 0.0
    %2218 = vmatmul.mubr.f32.gmra.mxu0 %v2133
    %v2219 = vpop.f32.mrf.mxu0
    %v2220 = vadd.f32 0.0, %v2219
    %v2221 = vpop.f32.mrf.mxu0
    %v2222 = vadd.f32 0.0, %v2221
    %2223 = vdwg.mxu0
    %2224 = vmatprep.subr.mxu0 0.0
    %2225 = vmatpush1.msra.mxu0 0.0
    %2226 = vmatprep.subr.mxu0 0.0
    %2227 = vmatpush1.msra.mxu0 0.0
    %2228 = vmatprep.subr.mxu0 0.0
    %2229 = vmatpush1.msra.mxu0 0.0
    %2230 = vmatprep.subr.mxu0 0.0
    %2231 = vmatpush1.msra.mxu0 0.0
    %2232 = vmatprep.subr.mxu0 0.0
    %2233 = vmatpush1.msra.mxu0 0.0
    %2234 = vmatprep.subr.mxu0 0.0
    %2235 = vmatpush1.msra.mxu0 0.0
    %2236 = vmatprep.subr.mxu0 0.0
    %2237 = vmatpush1.msra.mxu0 0.0
    %2238 = vmatprep.subr.mxu0 0.0
    %2239 = vmatpush1.msra.mxu0 0.0
    %2240 = vmatprep.subr.mxu0 0.0
    %2241 = vmatpush1.msra.mxu0 0.0
    %2242 = vmatprep.subr.mxu0 0.0
    %2243 = vmatpush1.msra.mxu0 0.0
    %2244 = vmatprep.subr.mxu0 0.0
    %2245 = vmatpush1.msra.mxu0 0.0
    %2246 = vmatprep.subr.mxu0 0.0
    %2247 = vmatpush1.msra.mxu0 0.0
    %2248 = vmatprep.subr.mxu0 0.0
    %2249 = vmatpush1.msra.mxu0 %v2122
    %2250 = vmatprep.subr.mxu0 0.0
    %2251 = vmatpush1.msra.mxu0 %v2119
    %2252 = vmatprep.subr.mxu0 0.0
    %2253 = vmatpush1.msra.mxu0 %v2116
    %2254 = vmatprep.subr.mxu0 0.0
    %2255 = vmatpush1.msra.mxu0 %v2113
    %2256 = vmatprep.subr.mxu0 0.0
    %2257 = vmatpush2.msra.mxu0 0.0
    %2258 = vmatprep.subr.mxu0 0.0
    %2259 = vmatpush2.msra.mxu0 0.0
    %2260 = vmatprep.subr.mxu0 0.0
    %2261 = vmatpush2.msra.mxu0 0.0
    %2262 = vmatprep.subr.mxu0 0.0
    %2263 = vmatpush2.msra.mxu0 0.0
    %2264 = vmatprep.subr.mxu0 0.0
    %2265 = vmatpush2.msra.mxu0 0.0
    %2266 = vmatprep.subr.mxu0 0.0
    %2267 = vmatpush2.msra.mxu0 0.0
    %2268 = vmatprep.subr.mxu0 0.0
    %2269 = vmatpush2.msra.mxu0 0.0
    %2270 = vmatprep.subr.mxu0 0.0
    %2271 = vmatpush2.msra.mxu0 0.0
    %2272 = vmatprep.subr.mxu0 0.0
    %2273 = vmatpush2.msra.mxu0 0.0
    %2274 = vmatprep.subr.mxu0 0.0
    %2275 = vmatpush2.msra.mxu0 0.0
    %2276 = vmatprep.subr.mxu0 0.0
    %2277 = vmatpush2.msra.mxu0 0.0
    %2278 = vmatprep.subr.mxu0 0.0
    %2279 = vmatpush2.msra.mxu0 0.0
    %2280 = vmatprep.subr.mxu0 0.0
    %2281 = vmatpush2.msra.mxu0 0.0
    %2282 = vmatprep.subr.mxu0 0.0
    %2283 = vmatpush2.msra.mxu0 0.0
    %2284 = vmatprep.subr.mxu0 0.0
    %2285 = vmatpush2.msra.mxu0 0.0
    %2286 = vmatprep.subr.mxu0 0.0
    %2287 = vmatpush2.msra.mxu0 0.0
    %2288 = vmatprep.mubr.f32.mxu0 0.0
    %2289 = vmatmul.mubr.f32.gmra.mxu0 %v2124
    %v2290 = vpop.f32.mrf.mxu0
    %v2291 = vadd.f32 0.0, %v2290
    %v2292 = vpop.f32.mrf.mxu0
    %2293 = vmatprep.mubr.f32.mxu0 0.0
    %2294 = vmatmul.mubr.f32.gmra.mxu0 %v2127
    %v2295 = vpop.f32.mrf.mxu0
    %v2296 = vadd.f32 0.0, %v2295
    %v2297 = vpop.f32.mrf.mxu0
    %2298 = vmatprep.mubr.f32.mxu0 0.0
    %2299 = vmatmul.mubr.f32.gmra.mxu0 %v2130
    %v2300 = vpop.f32.mrf.mxu0
    %v2301 = vadd.f32 0.0, %v2300
    %v2302 = vpop.f32.mrf.mxu0
    %2303 = vmatprep.mubr.f32.mxu0 0.0
    %2304 = vmatmul.mubr.f32.gmra.mxu0 %v2133
    %v2305 = vpop.f32.mrf.mxu0
    %v2306 = vadd.f32 0.0, %v2305
    %v2307 = vpop.f32.mrf.mxu0
    %2308 = vdwg.mxu0
    %v2310 = vsel %vm686, %v2091, 0
    %v2313 = vsel %vm686, %v2092, 0
    %v2316 = vsel %vm686, %v2093, 0
    %v2319 = vsel %vm686, %v2094, 0
    %2321 = vmatprep.subr.mxu0 0.0
    %2322 = vmatpush1.msra.mxu0 0.0
    %2323 = vmatprep.subr.mxu0 0.0
    %2324 = vmatpush1.msra.mxu0 0.0
    %2325 = vmatprep.subr.mxu0 0.0
    %2326 = vmatpush1.msra.mxu0 0.0
    %2327 = vmatprep.subr.mxu0 0.0
    %2328 = vmatpush1.msra.mxu0 0.0
    %2329 = vmatprep.subr.mxu0 0.0
    %2330 = vmatpush1.msra.mxu0 0.0
    %2331 = vmatprep.subr.mxu0 0.0
    %2332 = vmatpush1.msra.mxu0 0.0
    %2333 = vmatprep.subr.mxu0 0.0
    %2334 = vmatpush1.msra.mxu0 0.0
    %2335 = vmatprep.subr.mxu0 0.0
    %2336 = vmatpush1.msra.mxu0 0.0
    %2337 = vmatprep.subr.mxu0 0.0
    %2338 = vmatpush1.msra.mxu0 0.0
    %2339 = vmatprep.subr.mxu0 0.0
    %2340 = vmatpush1.msra.mxu0 0.0
    %2341 = vmatprep.subr.mxu0 0.0
    %2342 = vmatpush1.msra.mxu0 0.0
    %2343 = vmatprep.subr.mxu0 0.0
    %2344 = vmatpush1.msra.mxu0 0.0
    %2345 = vmatprep.subr.mxu0 %v2109
    %2346 = vmatpush1.msra.mxu0 %v2108
    %2347 = vmatprep.subr.mxu0 %v2106
    %2348 = vmatpush1.msra.mxu0 %v2105
    %2349 = vmatprep.subr.mxu0 %v2103
    %2350 = vmatpush1.msra.mxu0 %v2102
    %2351 = vmatprep.subr.mxu0 %v2100
    %2352 = vmatpush1.msra.mxu0 %v2099
    %2353 = vmatprep.subr.mxu0 0.0
    %2354 = vmatpush2.msra.mxu0 0.0
    %2355 = vmatprep.subr.mxu0 0.0
    %2356 = vmatpush2.msra.mxu0 0.0
    %2357 = vmatprep.subr.mxu0 0.0
    %2358 = vmatpush2.msra.mxu0 0.0
    %2359 = vmatprep.subr.mxu0 0.0
    %2360 = vmatpush2.msra.mxu0 0.0
    %2361 = vmatprep.subr.mxu0 0.0
    %2362 = vmatpush2.msra.mxu0 0.0
    %2363 = vmatprep.subr.mxu0 0.0
    %2364 = vmatpush2.msra.mxu0 0.0
    %2365 = vmatprep.subr.mxu0 0.0
    %2366 = vmatpush2.msra.mxu0 0.0
    %2367 = vmatprep.subr.mxu0 0.0
    %2368 = vmatpush2.msra.mxu0 0.0
    %2369 = vmatprep.subr.mxu0 0.0
    %2370 = vmatpush2.msra.mxu0 0.0
    %2371 = vmatprep.subr.mxu0 0.0
    %2372 = vmatpush2.msra.mxu0 0.0
    %2373 = vmatprep.subr.mxu0 0.0
    %2374 = vmatpush2.msra.mxu0 0.0
    %2375 = vmatprep.subr.mxu0 0.0
    %2376 = vmatpush2.msra.mxu0 0.0
    %2377 = vmatprep.subr.mxu0 0.0
    %2378 = vmatpush2.msra.mxu0 0.0
    %2379 = vmatprep.subr.mxu0 0.0
    %2380 = vmatpush2.msra.mxu0 0.0
    %2381 = vmatprep.subr.mxu0 0.0
    %2382 = vmatpush2.msra.mxu0 0.0
    %2383 = vmatprep.subr.mxu0 0.0
    %2384 = vmatpush2.msra.mxu0 0.0
    %2385 = vmatprep.mubr.f32.mxu0 0.0
    %2386 = vmatmul.mubr.f32.gmra.mxu0 %v2310
    %v2387 = vpop.f32.mrf.mxu0
    %v2388 = vadd.f32 %v2202, %v2387
    %v2389 = vpop.f32.mrf.mxu0
    %v2390 = vadd.f32 %v2204, %v2389
    %2391 = vmatprep.mubr.f32.mxu0 0.0
    %2392 = vmatmul.mubr.f32.gmra.mxu0 %v2313
    %v2393 = vpop.f32.mrf.mxu0
    %v2394 = vadd.f32 %v2208, %v2393
    %v2395 = vpop.f32.mrf.mxu0
    %v2396 = vadd.f32 %v2210, %v2395
    %2397 = vmatprep.mubr.f32.mxu0 0.0
    %2398 = vmatmul.mubr.f32.gmra.mxu0 %v2316
    %v2399 = vpop.f32.mrf.mxu0
    %v2400 = vadd.f32 %v2214, %v2399
    %v2401 = vpop.f32.mrf.mxu0
    %v2402 = vadd.f32 %v2216, %v2401
    %2403 = vmatprep.mubr.f32.mxu0 0.0
    %2404 = vmatmul.mubr.f32.gmra.mxu0 %v2319
    %v2405 = vpop.f32.mrf.mxu0
    %v2406 = vadd.f32 %v2220, %v2405
    %v2407 = vpop.f32.mrf.mxu0
    %v2408 = vadd.f32 %v2222, %v2407
    %2409 = vdwg.mxu0
    %2410 = vmatprep.subr.mxu0 0.0
    %2411 = vmatpush1.msra.mxu0 0.0
    %2412 = vmatprep.subr.mxu0 0.0
    %2413 = vmatpush1.msra.mxu0 0.0
    %2414 = vmatprep.subr.mxu0 0.0
    %2415 = vmatpush1.msra.mxu0 0.0
    %2416 = vmatprep.subr.mxu0 0.0
    %2417 = vmatpush1.msra.mxu0 0.0
    %2418 = vmatprep.subr.mxu0 0.0
    %2419 = vmatpush1.msra.mxu0 0.0
    %2420 = vmatprep.subr.mxu0 0.0
    %2421 = vmatpush1.msra.mxu0 0.0
    %2422 = vmatprep.subr.mxu0 0.0
    %2423 = vmatpush1.msra.mxu0 0.0
    %2424 = vmatprep.subr.mxu0 0.0
    %2425 = vmatpush1.msra.mxu0 0.0
    %2426 = vmatprep.subr.mxu0 0.0
    %2427 = vmatpush1.msra.mxu0 0.0
    %2428 = vmatprep.subr.mxu0 0.0
    %2429 = vmatpush1.msra.mxu0 0.0
    %2430 = vmatprep.subr.mxu0 0.0
    %2431 = vmatpush1.msra.mxu0 0.0
    %2432 = vmatprep.subr.mxu0 0.0
    %2433 = vmatpush1.msra.mxu0 0.0
    %2434 = vmatprep.subr.mxu0 0.0
    %2435 = vmatpush1.msra.mxu0 %v2110
    %2436 = vmatprep.subr.mxu0 0.0
    %2437 = vmatpush1.msra.mxu0 %v2107
    %2438 = vmatprep.subr.mxu0 0.0
    %2439 = vmatpush1.msra.mxu0 %v2104
    %2440 = vmatprep.subr.mxu0 0.0
    %2441 = vmatpush1.msra.mxu0 %v2101
    %2442 = vmatprep.subr.mxu0 0.0
    %2443 = vmatpush2.msra.mxu0 0.0
    %2444 = vmatprep.subr.mxu0 0.0
    %2445 = vmatpush2.msra.mxu0 0.0
    %2446 = vmatprep.subr.mxu0 0.0
    %2447 = vmatpush2.msra.mxu0 0.0
    %2448 = vmatprep.subr.mxu0 0.0
    %2449 = vmatpush2.msra.mxu0 0.0
    %2450 = vmatprep.subr.mxu0 0.0
    %2451 = vmatpush2.msra.mxu0 0.0
    %2452 = vmatprep.subr.mxu0 0.0
    %2453 = vmatpush2.msra.mxu0 0.0
    %2454 = vmatprep.subr.mxu0 0.0
    %2455 = vmatpush2.msra.mxu0 0.0
    %2456 = vmatprep.subr.mxu0 0.0
    %2457 = vmatpush2.msra.mxu0 0.0
    %2458 = vmatprep.subr.mxu0 0.0
    %2459 = vmatpush2.msra.mxu0 0.0
    %2460 = vmatprep.subr.mxu0 0.0
    %2461 = vmatpush2.msra.mxu0 0.0
    %2462 = vmatprep.subr.mxu0 0.0
    %2463 = vmatpush2.msra.mxu0 0.0
    %2464 = vmatprep.subr.mxu0 0.0
    %2465 = vmatpush2.msra.mxu0 0.0
    %2466 = vmatprep.subr.mxu0 0.0
    %2467 = vmatpush2.msra.mxu0 0.0
    %2468 = vmatprep.subr.mxu0 0.0
    %2469 = vmatpush2.msra.mxu0 0.0
    %2470 = vmatprep.subr.mxu0 0.0
    %2471 = vmatpush2.msra.mxu0 0.0
    %2472 = vmatprep.subr.mxu0 0.0
    %2473 = vmatpush2.msra.mxu0 0.0
    %2474 = vmatprep.mubr.f32.mxu0 0.0
    %2475 = vmatmul.mubr.f32.gmra.mxu0 %v2310
    %v2476 = vpop.f32.mrf.mxu0
    %v2477 = vadd.f32 %v2291, %v2476
    %v2478 = vpop.f32.mrf.mxu0
    %2479 = vmatprep.mubr.f32.mxu0 0.0
    %2480 = vmatmul.mubr.f32.gmra.mxu0 %v2313
    %v2481 = vpop.f32.mrf.mxu0
    %v2482 = vadd.f32 %v2296, %v2481
    %v2483 = vpop.f32.mrf.mxu0
    %2484 = vmatprep.mubr.f32.mxu0 0.0
    %2485 = vmatmul.mubr.f32.gmra.mxu0 %v2316
    %v2486 = vpop.f32.mrf.mxu0
    %v2487 = vadd.f32 %v2301, %v2486
    %v2488 = vpop.f32.mrf.mxu0
    %2489 = vmatprep.mubr.f32.mxu0 0.0
    %2490 = vmatmul.mubr.f32.gmra.mxu0 %v2319
    %v2491 = vpop.f32.mrf.mxu0
    %v2492 = vadd.f32 %v2306, %v2491
    %v2493 = vpop.f32.mrf.mxu0
    %2494 = vdwg.mxu0
    %v2495 = vld [vmem:[#allocation17] sm:$0x7]
    %v2497 = vlaneseq
    %v2498 = vshrl.u32 %v2497, 7
    %v2499 = vsub.s32 0, %v2498
    %v2500 = vrot.slane %v2495, %v2499
    %v2501 = vlaneseq
    %v2502 = vshrl.u32 %v2501, 7
    %v2503 = vsub.s32 1, %v2502
    %v2504 = vrot.slane %v2495, %v2503
    %v2505 = vlaneseq
    %v2506 = vshrl.u32 %v2505, 7
    %v2507 = vsub.s32 2, %v2506
    %v2508 = vrot.slane %v2495, %v2507
    %v2512 = vadd.f32 %v2388, %v2500
    %v2513 = vadd.f32 %v2390, %v2504
    %v2514 = vadd.f32 %v2477, %v2508
    %v2515 = vadd.f32 %v2394, %v2500
    %v2516 = vadd.f32 %v2396, %v2504
    %v2517 = vadd.f32 %v2482, %v2508
    %v2518 = vadd.f32 %v2400, %v2500
    %v2519 = vadd.f32 %v2402, %v2504
    %v2520 = vadd.f32 %v2487, %v2508
    %v2521 = vadd.f32 %v2406, %v2500
    %v2522 = vadd.f32 %v2408, %v2504
    %v2523 = vadd.f32 %v2492, %v2508
    %2524 = vst [vmem:[#allocation2] sm:$0xff] %v2512
    %2525 = vst [vmem:[#allocation2 + $0x8] sm:$0xff] %v2513
    %2526 = vst [vmem:[#allocation2 + $0x10] sm:$0xff] %v2514
    %2527 = vst [vmem:[#allocation2 + $0x30] sm:$0xff] %v2515
    %2528 = vst [vmem:[#allocation2 + $0x38] sm:$0xff] %v2516
    %2529 = vst [vmem:[#allocation2 + $0x40] sm:$0xff] %v2517
    %2530 = vst [vmem:[#allocation2 + $0x60] sm:$0xff] %v2518
    %2531 = vst [vmem:[#allocation2 + $0x68] sm:$0xff] %v2519
    %2532 = vst [vmem:[#allocation2 + $0x70] sm:$0xff] %v2520
    %2533 = vst [vmem:[#allocation2 + $0x90] sm:$0xff] %v2521
    %2534 = vst [vmem:[#allocation2 + $0x98] sm:$0xff] %v2522
    %2535 = vst [vmem:[#allocation2 + $0xa0] sm:$0xff] %v2523
    %v2536 = vld [vmem:[#allocation16] sm:$0xff]
    %v2537 = vld [vmem:[#allocation16 + $0x8] sm:$0xff]
    %v2538 = vld [vmem:[#allocation16 + $0x10] sm:$0xff]
    %v2539 = vld [vmem:[#allocation16 + $0x18] sm:$0xff]
    %v2540 = vld [vmem:[#allocation16 + $0x20] sm:$0xff]
    %v2541 = vld [vmem:[#allocation16 + $0x28] sm:$0xff]
    %v2542 = vld [vmem:[#allocation16 + $0x30] sm:$0xff]
    %v2543 = vld [vmem:[#allocation16 + $0x38] sm:$0xff]
    %v2544 = vld [vmem:[#allocation16 + $0x40] sm:$0xff]
    %v2545 = vld [vmem:[#allocation16 + $0x48] sm:$0xff]
    %v2546 = vld [vmem:[#allocation16 + $0x50] sm:$0xff]
    %v2547 = vld [vmem:[#allocation16 + $0x58] sm:$0xff]
    %v2548 = vld [vmem:[#allocation16 + $0x60] sm:$0xff]
    %v2549 = vld [vmem:[#allocation16 + $0x68] sm:$0xff]
    %v2550 = vld [vmem:[#allocation16 + $0x70] sm:$0xff]
    %v2551 = vld [vmem:[#allocation16 + $0x78] sm:$0xff]
    %v2552 = vld [vmem:[#allocation16 + $0x80] sm:$0xff]
    %v2553 = vld [vmem:[#allocation16 + $0x88] sm:$0xff]
    %v2554 = vld [vmem:[#allocation16 + $0x90] sm:$0xff]
    %v2555 = vld [vmem:[#allocation16 + $0x98] sm:$0xff]
    %v2556 = vld [vmem:[#allocation16 + $0xa0] sm:$0xff]
    %v2557 = vld [vmem:[#allocation16 + $0xa8] sm:$0xff]
    %v2558 = vld [vmem:[#allocation16 + $0xb0] sm:$0xff]
    %v2559 = vld [vmem:[#allocation16 + $0xb8] sm:$0xff]
    %2560 = vmatprep.subr.mxu0 0.0
    %2561 = vmatpush1.msra.mxu0 0.0
    %2562 = vmatprep.subr.mxu0 0.0
    %2563 = vmatpush1.msra.mxu0 0.0
    %2564 = vmatprep.subr.mxu0 0.0
    %2565 = vmatpush1.msra.mxu0 0.0
    %2566 = vmatprep.subr.mxu0 0.0
    %2567 = vmatpush1.msra.mxu0 0.0
    %2568 = vmatprep.subr.mxu0 0.0
    %2569 = vmatpush1.msra.mxu0 0.0
    %2570 = vmatprep.subr.mxu0 0.0
    %2571 = vmatpush1.msra.mxu0 0.0
    %2572 = vmatprep.subr.mxu0 0.0
    %2573 = vmatpush1.msra.mxu0 0.0
    %2574 = vmatprep.subr.mxu0 0.0
    %2575 = vmatpush1.msra.mxu0 0.0
    %2576 = vmatprep.subr.mxu0 0.0
    %2577 = vmatpush1.msra.mxu0 0.0
    %2578 = vmatprep.subr.mxu0 0.0
    %2579 = vmatpush1.msra.mxu0 0.0
    %2580 = vmatprep.subr.mxu0 0.0
    %2581 = vmatpush1.msra.mxu0 0.0
    %2582 = vmatprep.subr.mxu0 0.0
    %2583 = vmatpush1.msra.mxu0 0.0
    %2584 = vmatprep.subr.mxu0 %v2558
    %2585 = vmatpush1.msra.mxu0 %v2557
    %2586 = vmatprep.subr.mxu0 %v2555
    %2587 = vmatpush1.msra.mxu0 %v2554
    %2588 = vmatprep.subr.mxu0 %v2552
    %2589 = vmatpush1.msra.mxu0 %v2551
    %2590 = vmatprep.subr.mxu0 %v2549
    %2591 = vmatpush1.msra.mxu0 %v2548
    %2592 = vmatprep.subr.mxu0 0.0
    %2593 = vmatpush2.msra.mxu0 0.0
    %2594 = vmatprep.subr.mxu0 0.0
    %2595 = vmatpush2.msra.mxu0 0.0
    %2596 = vmatprep.subr.mxu0 0.0
    %2597 = vmatpush2.msra.mxu0 0.0
    %2598 = vmatprep.subr.mxu0 0.0
    %2599 = vmatpush2.msra.mxu0 0.0
    %2600 = vmatprep.subr.mxu0 0.0
    %2601 = vmatpush2.msra.mxu0 0.0
    %2602 = vmatprep.subr.mxu0 0.0
    %2603 = vmatpush2.msra.mxu0 0.0
    %2604 = vmatprep.subr.mxu0 0.0
    %2605 = vmatpush2.msra.mxu0 0.0
    %2606 = vmatprep.subr.mxu0 0.0
    %2607 = vmatpush2.msra.mxu0 0.0
    %2608 = vmatprep.subr.mxu0 0.0
    %2609 = vmatpush2.msra.mxu0 0.0
    %2610 = vmatprep.subr.mxu0 0.0
    %2611 = vmatpush2.msra.mxu0 0.0
    %2612 = vmatprep.subr.mxu0 0.0
    %2613 = vmatpush2.msra.mxu0 0.0
    %2614 = vmatprep.subr.mxu0 0.0
    %2615 = vmatpush2.msra.mxu0 0.0
    %2616 = vmatprep.subr.mxu0 0.0
    %2617 = vmatpush2.msra.mxu0 0.0
    %2618 = vmatprep.subr.mxu0 0.0
    %2619 = vmatpush2.msra.mxu0 0.0
    %2620 = vmatprep.subr.mxu0 0.0
    %2621 = vmatpush2.msra.mxu0 0.0
    %2622 = vmatprep.subr.mxu0 0.0
    %2623 = vmatpush2.msra.mxu0 0.0
    %2624 = vmatprep.mubr.f32.mxu0 0.0
    %2625 = vmatmul.mubr.f32.gmra.mxu0 %v2124
    %v2626 = vpop.f32.mrf.mxu0
    %v2627 = vadd.f32 0.0, %v2626
    %v2628 = vpop.f32.mrf.mxu0
    %v2629 = vadd.f32 0.0, %v2628
    %2630 = vmatprep.mubr.f32.mxu0 0.0
    %2631 = vmatmul.mubr.f32.gmra.mxu0 %v2127
    %v2632 = vpop.f32.mrf.mxu0
    %v2633 = vadd.f32 0.0, %v2632
    %v2634 = vpop.f32.mrf.mxu0
    %v2635 = vadd.f32 0.0, %v2634
    %2636 = vmatprep.mubr.f32.mxu0 0.0
    %2637 = vmatmul.mubr.f32.gmra.mxu0 %v2130
    %v2638 = vpop.f32.mrf.mxu0
    %v2639 = vadd.f32 0.0, %v2638
    %v2640 = vpop.f32.mrf.mxu0
    %v2641 = vadd.f32 0.0, %v2640
    %2642 = vmatprep.mubr.f32.mxu0 0.0
    %2643 = vmatmul.mubr.f32.gmra.mxu0 %v2133
    %v2644 = vpop.f32.mrf.mxu0
    %v2645 = vadd.f32 0.0, %v2644
    %v2646 = vpop.f32.mrf.mxu0
    %v2647 = vadd.f32 0.0, %v2646
    %2648 = vdwg.mxu0
    %2649 = vmatprep.subr.mxu0 0.0
    %2650 = vmatpush1.msra.mxu0 0.0
    %2651 = vmatprep.subr.mxu0 0.0
    %2652 = vmatpush1.msra.mxu0 0.0
    %2653 = vmatprep.subr.mxu0 0.0
    %2654 = vmatpush1.msra.mxu0 0.0
    %2655 = vmatprep.subr.mxu0 0.0
    %2656 = vmatpush1.msra.mxu0 0.0
    %2657 = vmatprep.subr.mxu0 0.0
    %2658 = vmatpush1.msra.mxu0 0.0
    %2659 = vmatprep.subr.mxu0 0.0
    %2660 = vmatpush1.msra.mxu0 0.0
    %2661 = vmatprep.subr.mxu0 0.0
    %2662 = vmatpush1.msra.mxu0 0.0
    %2663 = vmatprep.subr.mxu0 0.0
    %2664 = vmatpush1.msra.mxu0 0.0
    %2665 = vmatprep.subr.mxu0 0.0
    %2666 = vmatpush1.msra.mxu0 0.0
    %2667 = vmatprep.subr.mxu0 0.0
    %2668 = vmatpush1.msra.mxu0 0.0
    %2669 = vmatprep.subr.mxu0 0.0
    %2670 = vmatpush1.msra.mxu0 0.0
    %2671 = vmatprep.subr.mxu0 0.0
    %2672 = vmatpush1.msra.mxu0 0.0
    %2673 = vmatprep.subr.mxu0 0.0
    %2674 = vmatpush1.msra.mxu0 %v2559
    %2675 = vmatprep.subr.mxu0 0.0
    %2676 = vmatpush1.msra.mxu0 %v2556
    %2677 = vmatprep.subr.mxu0 0.0
    %2678 = vmatpush1.msra.mxu0 %v2553
    %2679 = vmatprep.subr.mxu0 0.0
    %2680 = vmatpush1.msra.mxu0 %v2550
    %2681 = vmatprep.subr.mxu0 0.0
    %2682 = vmatpush2.msra.mxu0 0.0
    %2683 = vmatprep.subr.mxu0 0.0
    %2684 = vmatpush2.msra.mxu0 0.0
    %2685 = vmatprep.subr.mxu0 0.0
    %2686 = vmatpush2.msra.mxu0 0.0
    %2687 = vmatprep.subr.mxu0 0.0
    %2688 = vmatpush2.msra.mxu0 0.0
    %2689 = vmatprep.subr.mxu0 0.0
    %2690 = vmatpush2.msra.mxu0 0.0
    %2691 = vmatprep.subr.mxu0 0.0
    %2692 = vmatpush2.msra.mxu0 0.0
    %2693 = vmatprep.subr.mxu0 0.0
    %2694 = vmatpush2.msra.mxu0 0.0
    %2695 = vmatprep.subr.mxu0 0.0
    %2696 = vmatpush2.msra.mxu0 0.0
    %2697 = vmatprep.subr.mxu0 0.0
    %2698 = vmatpush2.msra.mxu0 0.0
    %2699 = vmatprep.subr.mxu0 0.0
    %2700 = vmatpush2.msra.mxu0 0.0
    %2701 = vmatprep.subr.mxu0 0.0
    %2702 = vmatpush2.msra.mxu0 0.0
    %2703 = vmatprep.subr.mxu0 0.0
    %2704 = vmatpush2.msra.mxu0 0.0
    %2705 = vmatprep.subr.mxu0 0.0
    %2706 = vmatpush2.msra.mxu0 0.0
    %2707 = vmatprep.subr.mxu0 0.0
    %2708 = vmatpush2.msra.mxu0 0.0
    %2709 = vmatprep.subr.mxu0 0.0
    %2710 = vmatpush2.msra.mxu0 0.0
    %2711 = vmatprep.subr.mxu0 0.0
    %2712 = vmatpush2.msra.mxu0 0.0
    %2713 = vmatprep.mubr.f32.mxu0 0.0
    %2714 = vmatmul.mubr.f32.gmra.mxu0 %v2124
    %v2715 = vpop.f32.mrf.mxu0
    %v2716 = vadd.f32 0.0, %v2715
    %v2717 = vpop.f32.mrf.mxu0
    %2718 = vmatprep.mubr.f32.mxu0 0.0
    %2719 = vmatmul.mubr.f32.gmra.mxu0 %v2127
    %v2720 = vpop.f32.mrf.mxu0
    %v2721 = vadd.f32 0.0, %v2720
    %v2722 = vpop.f32.mrf.mxu0
    %2723 = vmatprep.mubr.f32.mxu0 0.0
    %2724 = vmatmul.mubr.f32.gmra.mxu0 %v2130
    %v2725 = vpop.f32.mrf.mxu0
    %v2726 = vadd.f32 0.0, %v2725
    %v2727 = vpop.f32.mrf.mxu0
    %2728 = vmatprep.mubr.f32.mxu0 0.0
    %2729 = vmatmul.mubr.f32.gmra.mxu0 %v2133
    %v2730 = vpop.f32.mrf.mxu0
    %v2731 = vadd.f32 0.0, %v2730
    %v2732 = vpop.f32.mrf.mxu0
    %2733 = vdwg.mxu0
    %2734 = vmatprep.subr.mxu0 0.0
    %2735 = vmatpush1.msra.mxu0 0.0
    %2736 = vmatprep.subr.mxu0 0.0
    %2737 = vmatpush1.msra.mxu0 0.0
    %2738 = vmatprep.subr.mxu0 0.0
    %2739 = vmatpush1.msra.mxu0 0.0
    %2740 = vmatprep.subr.mxu0 0.0
    %2741 = vmatpush1.msra.mxu0 0.0
    %2742 = vmatprep.subr.mxu0 0.0
    %2743 = vmatpush1.msra.mxu0 0.0
    %2744 = vmatprep.subr.mxu0 0.0
    %2745 = vmatpush1.msra.mxu0 0.0
    %2746 = vmatprep.subr.mxu0 0.0
    %2747 = vmatpush1.msra.mxu0 0.0
    %2748 = vmatprep.subr.mxu0 0.0
    %2749 = vmatpush1.msra.mxu0 0.0
    %2750 = vmatprep.subr.mxu0 0.0
    %2751 = vmatpush1.msra.mxu0 0.0
    %2752 = vmatprep.subr.mxu0 0.0
    %2753 = vmatpush1.msra.mxu0 0.0
    %2754 = vmatprep.subr.mxu0 0.0
    %2755 = vmatpush1.msra.mxu0 0.0
    %2756 = vmatprep.subr.mxu0 0.0
    %2757 = vmatpush1.msra.mxu0 0.0
    %2758 = vmatprep.subr.mxu0 %v2546
    %2759 = vmatpush1.msra.mxu0 %v2545
    %2760 = vmatprep.subr.mxu0 %v2543
    %2761 = vmatpush1.msra.mxu0 %v2542
    %2762 = vmatprep.subr.mxu0 %v2540
    %2763 = vmatpush1.msra.mxu0 %v2539
    %2764 = vmatprep.subr.mxu0 %v2537
    %2765 = vmatpush1.msra.mxu0 %v2536
    %2766 = vmatprep.subr.mxu0 0.0
    %2767 = vmatpush2.msra.mxu0 0.0
    %2768 = vmatprep.subr.mxu0 0.0
    %2769 = vmatpush2.msra.mxu0 0.0
    %2770 = vmatprep.subr.mxu0 0.0
    %2771 = vmatpush2.msra.mxu0 0.0
    %2772 = vmatprep.subr.mxu0 0.0
    %2773 = vmatpush2.msra.mxu0 0.0
    %2774 = vmatprep.subr.mxu0 0.0
    %2775 = vmatpush2.msra.mxu0 0.0
    %2776 = vmatprep.subr.mxu0 0.0
    %2777 = vmatpush2.msra.mxu0 0.0
    %2778 = vmatprep.subr.mxu0 0.0
    %2779 = vmatpush2.msra.mxu0 0.0
    %2780 = vmatprep.subr.mxu0 0.0
    %2781 = vmatpush2.msra.mxu0 0.0
    %2782 = vmatprep.subr.mxu0 0.0
    %2783 = vmatpush2.msra.mxu0 0.0
    %2784 = vmatprep.subr.mxu0 0.0
    %2785 = vmatpush2.msra.mxu0 0.0
    %2786 = vmatprep.subr.mxu0 0.0
    %2787 = vmatpush2.msra.mxu0 0.0
    %2788 = vmatprep.subr.mxu0 0.0
    %2789 = vmatpush2.msra.mxu0 0.0
    %2790 = vmatprep.subr.mxu0 0.0
    %2791 = vmatpush2.msra.mxu0 0.0
    %2792 = vmatprep.subr.mxu0 0.0
    %2793 = vmatpush2.msra.mxu0 0.0
    %2794 = vmatprep.subr.mxu0 0.0
    %2795 = vmatpush2.msra.mxu0 0.0
    %2796 = vmatprep.subr.mxu0 0.0
    %2797 = vmatpush2.msra.mxu0 0.0
    %2798 = vmatprep.mubr.f32.mxu0 0.0
    %2799 = vmatmul.mubr.f32.gmra.mxu0 %v2310
    %v2800 = vpop.f32.mrf.mxu0
    %v2801 = vadd.f32 %v2627, %v2800
    %v2802 = vpop.f32.mrf.mxu0
    %v2803 = vadd.f32 %v2629, %v2802
    %2804 = vmatprep.mubr.f32.mxu0 0.0
    %2805 = vmatmul.mubr.f32.gmra.mxu0 %v2313
    %v2806 = vpop.f32.mrf.mxu0
    %v2807 = vadd.f32 %v2633, %v2806
    %v2808 = vpop.f32.mrf.mxu0
    %v2809 = vadd.f32 %v2635, %v2808
    %2810 = vmatprep.mubr.f32.mxu0 0.0
    %2811 = vmatmul.mubr.f32.gmra.mxu0 %v2316
    %v2812 = vpop.f32.mrf.mxu0
    %v2813 = vadd.f32 %v2639, %v2812
    %v2814 = vpop.f32.mrf.mxu0
    %v2815 = vadd.f32 %v2641, %v2814
    %2816 = vmatprep.mubr.f32.mxu0 0.0
    %2817 = vmatmul.mubr.f32.gmra.mxu0 %v2319
    %v2818 = vpop.f32.mrf.mxu0
    %v2819 = vadd.f32 %v2645, %v2818
    %v2820 = vpop.f32.mrf.mxu0
    %v2821 = vadd.f32 %v2647, %v2820
    %2822 = vdwg.mxu0
    %2823 = vmatprep.subr.mxu0 0.0
    %2824 = vmatpush1.msra.mxu0 0.0
    %2825 = vmatprep.subr.mxu0 0.0
    %2826 = vmatpush1.msra.mxu0 0.0
    %2827 = vmatprep.subr.mxu0 0.0
    %2828 = vmatpush1.msra.mxu0 0.0
    %2829 = vmatprep.subr.mxu0 0.0
    %2830 = vmatpush1.msra.mxu0 0.0
    %2831 = vmatprep.subr.mxu0 0.0
    %2832 = vmatpush1.msra.mxu0 0.0
    %2833 = vmatprep.subr.mxu0 0.0
    %2834 = vmatpush1.msra.mxu0 0.0
    %2835 = vmatprep.subr.mxu0 0.0
    %2836 = vmatpush1.msra.mxu0 0.0
    %2837 = vmatprep.subr.mxu0 0.0
    %2838 = vmatpush1.msra.mxu0 0.0
    %2839 = vmatprep.subr.mxu0 0.0
    %2840 = vmatpush1.msra.mxu0 0.0
    %2841 = vmatprep.subr.mxu0 0.0
    %2842 = vmatpush1.msra.mxu0 0.0
    %2843 = vmatprep.subr.mxu0 0.0
    %2844 = vmatpush1.msra.mxu0 0.0
    %2845 = vmatprep.subr.mxu0 0.0
    %2846 = vmatpush1.msra.mxu0 0.0
    %2847 = vmatprep.subr.mxu0 0.0
    %2848 = vmatpush1.msra.mxu0 %v2547
    %2849 = vmatprep.subr.mxu0 0.0
    %2850 = vmatpush1.msra.mxu0 %v2544
    %2851 = vmatprep.subr.mxu0 0.0
    %2852 = vmatpush1.msra.mxu0 %v2541
    %2853 = vmatprep.subr.mxu0 0.0
    %2854 = vmatpush1.msra.mxu0 %v2538
    %2855 = vmatprep.subr.mxu0 0.0
    %2856 = vmatpush2.msra.mxu0 0.0
    %2857 = vmatprep.subr.mxu0 0.0
    %2858 = vmatpush2.msra.mxu0 0.0
    %2859 = vmatprep.subr.mxu0 0.0
    %2860 = vmatpush2.msra.mxu0 0.0
    %2861 = vmatprep.subr.mxu0 0.0
    %2862 = vmatpush2.msra.mxu0 0.0
    %2863 = vmatprep.subr.mxu0 0.0
    %2864 = vmatpush2.msra.mxu0 0.0
    %2865 = vmatprep.subr.mxu0 0.0
    %2866 = vmatpush2.msra.mxu0 0.0
    %2867 = vmatprep.subr.mxu0 0.0
    %2868 = vmatpush2.msra.mxu0 0.0
    %2869 = vmatprep.subr.mxu0 0.0
    %2870 = vmatpush2.msra.mxu0 0.0
    %2871 = vmatprep.subr.mxu0 0.0
    %2872 = vmatpush2.msra.mxu0 0.0
    %2873 = vmatprep.subr.mxu0 0.0
    %2874 = vmatpush2.msra.mxu0 0.0
    %2875 = vmatprep.subr.mxu0 0.0
    %2876 = vmatpush2.msra.mxu0 0.0
    %2877 = vmatprep.subr.mxu0 0.0
    %2878 = vmatpush2.msra.mxu0 0.0
    %2879 = vmatprep.subr.mxu0 0.0
    %2880 = vmatpush2.msra.mxu0 0.0
    %2881 = vmatprep.subr.mxu0 0.0
    %2882 = vmatpush2.msra.mxu0 0.0
    %2883 = vmatprep.subr.mxu0 0.0
    %2884 = vmatpush2.msra.mxu0 0.0
    %2885 = vmatprep.subr.mxu0 0.0
    %2886 = vmatpush2.msra.mxu0 0.0
    %2887 = vmatprep.mubr.f32.mxu0 0.0
    %2888 = vmatmul.mubr.f32.gmra.mxu0 %v2310
    %v2889 = vpop.f32.mrf.mxu0
    %v2890 = vadd.f32 %v2716, %v2889
    %v2891 = vpop.f32.mrf.mxu0
    %2892 = vmatprep.mubr.f32.mxu0 0.0
    %2893 = vmatmul.mubr.f32.gmra.mxu0 %v2313
    %v2894 = vpop.f32.mrf.mxu0
    %v2895 = vadd.f32 %v2721, %v2894
    %v2896 = vpop.f32.mrf.mxu0
    %2897 = vmatprep.mubr.f32.mxu0 0.0
    %2898 = vmatmul.mubr.f32.gmra.mxu0 %v2316
    %v2899 = vpop.f32.mrf.mxu0
    %v2900 = vadd.f32 %v2726, %v2899
    %v2901 = vpop.f32.mrf.mxu0
    %2902 = vmatprep.mubr.f32.mxu0 0.0
    %2903 = vmatmul.mubr.f32.gmra.mxu0 %v2319
    %v2904 = vpop.f32.mrf.mxu0
    %v2905 = vadd.f32 %v2731, %v2904
    %v2906 = vpop.f32.mrf.mxu0
    %2907 = vdwg.mxu0
    %v2908 = vld [vmem:[#allocation19] sm:$0x7]
    %v2910 = vlaneseq
    %v2911 = vshrl.u32 %v2910, 7
    %v2912 = vsub.s32 0, %v2911
    %v2913 = vrot.slane %v2908, %v2912
    %v2914 = vlaneseq
    %v2915 = vshrl.u32 %v2914, 7
    %v2916 = vsub.s32 1, %v2915
    %v2917 = vrot.slane %v2908, %v2916
    %v2918 = vlaneseq
    %v2919 = vshrl.u32 %v2918, 7
    %v2920 = vsub.s32 2, %v2919
    %v2921 = vrot.slane %v2908, %v2920
    %v2925 = vadd.f32 %v2801, %v2913
    %v2926 = vadd.f32 %v2803, %v2917
    %v2927 = vadd.f32 %v2890, %v2921
    %v2928 = vadd.f32 %v2807, %v2913
    %v2929 = vadd.f32 %v2809, %v2917
    %v2930 = vadd.f32 %v2895, %v2921
    %v2931 = vadd.f32 %v2813, %v2913
    %v2932 = vadd.f32 %v2815, %v2917
    %v2933 = vadd.f32 %v2900, %v2921
    %v2934 = vadd.f32 %v2819, %v2913
    %v2935 = vadd.f32 %v2821, %v2917
    %v2936 = vadd.f32 %v2905, %v2921
    %2937 = vst [vmem:[#allocation2 + $0x18] sm:$0xff] %v2925
    %2938 = vst [vmem:[#allocation2 + $0x20] sm:$0xff] %v2926
    %2939 = vst [vmem:[#allocation2 + $0x28] sm:$0xff] %v2927
    %2940 = vst [vmem:[#allocation2 + $0x48] sm:$0xff] %v2928
    %2941 = vst [vmem:[#allocation2 + $0x50] sm:$0xff] %v2929
    %2942 = vst [vmem:[#allocation2 + $0x58] sm:$0xff] %v2930
    %2943 = vst [vmem:[#allocation2 + $0x78] sm:$0xff] %v2931
    %2944 = vst [vmem:[#allocation2 + $0x80] sm:$0xff] %v2932
    %2945 = vst [vmem:[#allocation2 + $0x88] sm:$0xff] %v2933
    %2946 = vst [vmem:[#allocation2 + $0xa8] sm:$0xff] %v2934
    %2947 = vst [vmem:[#allocation2 + $0xb0] sm:$0xff] %v2935
    %2948 = vst [vmem:[#allocation2 + $0xb8] sm:$0xff] %v2936
    %v2949 = vld [vmem:[%s13] sm:$0xff]
    %v2950 = vld [vmem:[%s13 + $0x8] sm:$0xff]
    %v2951 = vld [vmem:[%s13 + $0x10] sm:$0xff]
    %v2952 = vld [vmem:[%s13 + $0x18] sm:$0xff]
    %v2953 = vld [vmem:[%s13 + $0x20] sm:$0xff]
    %v2954 = vld [vmem:[%s13 + $0x28] sm:$0xff]
    %v2955 = vld [vmem:[%s13 + $0x30] sm:$0xff]
    %v2956 = vld [vmem:[%s13 + $0x38] sm:$0xff]
    %v2957 = vld [vmem:[%s13 + $0x40] sm:$0xff]
    %v2958 = vld [vmem:[%s13 + $0x48] sm:$0xff]
    %v2959 = vld [vmem:[%s13 + $0x50] sm:$0xff]
    %v2960 = vld [vmem:[%s13 + $0x58] sm:$0xff]
    %v2961 = vld [vmem:[#allocation20] sm:$0xff]
    %v2962 = vld [vmem:[#allocation20 + $0x8] sm:$0xff]
    %v2963 = vld [vmem:[#allocation20 + $0x10] sm:$0xff]
    %v2964 = vld [vmem:[#allocation20 + $0x18] sm:$0xff]
    %v2965 = vld [vmem:[#allocation20 + $0x20] sm:$0xff]
    %v2966 = vld [vmem:[#allocation20 + $0x28] sm:$0xff]
    %v2967 = vld [vmem:[#allocation20 + $0x30] sm:$0xff]
    %v2968 = vld [vmem:[#allocation20 + $0x38] sm:$0xff]
    %v2969 = vld [vmem:[#allocation20 + $0x40] sm:$0xff]
    %v2970 = vld [vmem:[#allocation20 + $0x48] sm:$0xff]
    %v2971 = vld [vmem:[#allocation20 + $0x50] sm:$0xff]
    %v2972 = vld [vmem:[#allocation20 + $0x58] sm:$0xff]
    %v2973 = vld [vmem:[#allocation22] sm:$0x1]
    %v2975 = vlaneseq
    %v2976 = vshrl.u32 %v2975, 7
    %v2977 = vsub.s32 0, %v2976
    %v2978 = vrot.slane %v2973, %v2977
    %v2980 = vld [vmem:[#allocation23] sm:$0x1]
    %v2982 = vlaneseq
    %v2983 = vshrl.u32 %v2982, 7
    %v2984 = vsub.s32 0, %v2983
    %v2985 = vrot.slane %v2980, %v2984
    %v2987 = vld [vmem:[#allocation2] sm:$0x3]
    %v2988 = vld [vmem:[#allocation2 + $0x8] sm:$0x3]
    %v2989 = vld [vmem:[#allocation2 + $0x10] sm:$0x3]
    %v2990 = vld [vmem:[#allocation2 + $0xa8] sm:$0x3]
    %v2991 = vld [vmem:[#allocation2 + $0xb0] sm:$0x3]
    %v2992 = vld [vmem:[#allocation2 + $0xb8] sm:$0x3]
    %2993 = vmatprep.subr.mxu0 0.0
    %2994 = vmatpush1.msra.mxu0 0.0
    %2995 = vmatprep.subr.mxu0 0.0
    %2996 = vmatpush1.msra.mxu0 0.0
    %2997 = vmatprep.subr.mxu0 0.0
    %2998 = vmatpush1.msra.mxu0 0.0
    %2999 = vmatprep.subr.mxu0 0.0
    %3000 = vmatpush1.msra.mxu0 0.0
    %3001 = vmatprep.subr.mxu0 0.0
    %3002 = vmatpush1.msra.mxu0 0.0
    %3003 = vmatprep.subr.mxu0 0.0
    %3004 = vmatpush1.msra.mxu0 0.0
    %3005 = vmatprep.subr.mxu0 0.0
    %3006 = vmatpush1.msra.mxu0 0.0
    %3007 = vmatprep.subr.mxu0 0.0
    %3008 = vmatpush1.msra.mxu0 0.0
    %3009 = vmatprep.subr.mxu0 0.0
    %3010 = vmatpush1.msra.mxu0 0.0
    %3011 = vmatprep.subr.mxu0 0.0
    %3012 = vmatpush1.msra.mxu0 0.0
    %3013 = vmatprep.subr.mxu0 0.0
    %3014 = vmatpush1.msra.mxu0 0.0
    %3015 = vmatprep.subr.mxu0 0.0
    %3016 = vmatpush1.msra.mxu0 0.0
    %3017 = vmatprep.subr.mxu0 %v2959
    %3018 = vmatpush1.msra.mxu0 %v2958
    %3019 = vmatprep.subr.mxu0 %v2956
    %3020 = vmatpush1.msra.mxu0 %v2955
    %3021 = vmatprep.subr.mxu0 %v2953
    %3022 = vmatpush1.msra.mxu0 %v2952
    %3023 = vmatprep.subr.mxu0 %v2950
    %3024 = vmatpush1.msra.mxu0 %v2949
    %3025 = vmatprep.subr.mxu0 0.0
    %3026 = vmatpush2.msra.mxu0 0.0
    %3027 = vmatprep.subr.mxu0 0.0
    %3028 = vmatpush2.msra.mxu0 0.0
    %3029 = vmatprep.subr.mxu0 0.0
    %3030 = vmatpush2.msra.mxu0 0.0
    %3031 = vmatprep.subr.mxu0 0.0
    %3032 = vmatpush2.msra.mxu0 0.0
    %3033 = vmatprep.subr.mxu0 0.0
    %3034 = vmatpush2.msra.mxu0 0.0
    %3035 = vmatprep.subr.mxu0 0.0
    %3036 = vmatpush2.msra.mxu0 0.0
    %3037 = vmatprep.subr.mxu0 0.0
    %3038 = vmatpush2.msra.mxu0 0.0
    %3039 = vmatprep.subr.mxu0 0.0
    %3040 = vmatpush2.msra.mxu0 0.0
    %3041 = vmatprep.subr.mxu0 0.0
    %3042 = vmatpush2.msra.mxu0 0.0
    %3043 = vmatprep.subr.mxu0 0.0
    %3044 = vmatpush2.msra.mxu0 0.0
    %3045 = vmatprep.subr.mxu0 0.0
    %3046 = vmatpush2.msra.mxu0 0.0
    %3047 = vmatprep.subr.mxu0 0.0
    %3048 = vmatpush2.msra.mxu0 0.0
    %3049 = vmatprep.subr.mxu0 0.0
    %3050 = vmatpush2.msra.mxu0 0.0
    %3051 = vmatprep.subr.mxu0 0.0
    %3052 = vmatpush2.msra.mxu0 0.0
    %3053 = vmatprep.subr.mxu0 0.0
    %3054 = vmatpush2.msra.mxu0 0.0
    %3055 = vmatprep.subr.mxu0 0.0
    %3056 = vmatpush2.msra.mxu0 0.0
    %3057 = vmatprep.mubr.f32.mxu0 0.0
    %3058 = vmatmul.mubr.f32.gmra.mxu0 %v740
    %v3059 = vpop.f32.mrf.mxu0
    %v3060 = vadd.f32 0.0, %v3059
    %v3061 = vpop.f32.mrf.mxu0
    %v3062 = vadd.f32 0.0, %v3061
    %3063 = vdwg.mxu0
    %3064 = vmatprep.subr.mxu0 0.0
    %3065 = vmatpush1.msra.mxu0 0.0
    %3066 = vmatprep.subr.mxu0 0.0
    %3067 = vmatpush1.msra.mxu0 0.0
    %3068 = vmatprep.subr.mxu0 0.0
    %3069 = vmatpush1.msra.mxu0 0.0
    %3070 = vmatprep.subr.mxu0 0.0
    %3071 = vmatpush1.msra.mxu0 0.0
    %3072 = vmatprep.subr.mxu0 0.0
    %3073 = vmatpush1.msra.mxu0 0.0
    %3074 = vmatprep.subr.mxu0 0.0
    %3075 = vmatpush1.msra.mxu0 0.0
    %3076 = vmatprep.subr.mxu0 0.0
    %3077 = vmatpush1.msra.mxu0 0.0
    %3078 = vmatprep.subr.mxu0 0.0
    %3079 = vmatpush1.msra.mxu0 0.0
    %3080 = vmatprep.subr.mxu0 0.0
    %3081 = vmatpush1.msra.mxu0 0.0
    %3082 = vmatprep.subr.mxu0 0.0
    %3083 = vmatpush1.msra.mxu0 0.0
    %3084 = vmatprep.subr.mxu0 0.0
    %3085 = vmatpush1.msra.mxu0 0.0
    %3086 = vmatprep.subr.mxu0 0.0
    %3087 = vmatpush1.msra.mxu0 0.0
    %3088 = vmatprep.subr.mxu0 0.0
    %3089 = vmatpush1.msra.mxu0 %v2960
    %3090 = vmatprep.subr.mxu0 0.0
    %3091 = vmatpush1.msra.mxu0 %v2957
    %3092 = vmatprep.subr.mxu0 0.0
    %3093 = vmatpush1.msra.mxu0 %v2954
    %3094 = vmatprep.subr.mxu0 0.0
    %3095 = vmatpush1.msra.mxu0 %v2951
    %3096 = vmatprep.subr.mxu0 0.0
    %3097 = vmatpush2.msra.mxu0 0.0
    %3098 = vmatprep.subr.mxu0 0.0
    %3099 = vmatpush2.msra.mxu0 0.0
    %3100 = vmatprep.subr.mxu0 0.0
    %3101 = vmatpush2.msra.mxu0 0.0
    %3102 = vmatprep.subr.mxu0 0.0
    %3103 = vmatpush2.msra.mxu0 0.0
    %3104 = vmatprep.subr.mxu0 0.0
    %3105 = vmatpush2.msra.mxu0 0.0
    %3106 = vmatprep.subr.mxu0 0.0
    %3107 = vmatpush2.msra.mxu0 0.0
    %3108 = vmatprep.subr.mxu0 0.0
    %3109 = vmatpush2.msra.mxu0 0.0
    %3110 = vmatprep.subr.mxu0 0.0
    %3111 = vmatpush2.msra.mxu0 0.0
    %3112 = vmatprep.subr.mxu0 0.0
    %3113 = vmatpush2.msra.mxu0 0.0
    %3114 = vmatprep.subr.mxu0 0.0
    %3115 = vmatpush2.msra.mxu0 0.0
    %3116 = vmatprep.subr.mxu0 0.0
    %3117 = vmatpush2.msra.mxu0 0.0
    %3118 = vmatprep.subr.mxu0 0.0
    %3119 = vmatpush2.msra.mxu0 0.0
    %3120 = vmatprep.subr.mxu0 0.0
    %3121 = vmatpush2.msra.mxu0 0.0
    %3122 = vmatprep.subr.mxu0 0.0
    %3123 = vmatpush2.msra.mxu0 0.0
    %3124 = vmatprep.subr.mxu0 0.0
    %3125 = vmatpush2.msra.mxu0 0.0
    %3126 = vmatprep.subr.mxu0 0.0
    %3127 = vmatpush2.msra.mxu0 0.0
    %3128 = vmatprep.mubr.f32.mxu0 0.0
    %3129 = vmatmul.mubr.f32.gmra.mxu0 %v740
    %v3130 = vpop.f32.mrf.mxu0
    %v3131 = vadd.f32 0.0, %v3130
    %v3132 = vpop.f32.mrf.mxu0
    %3133 = vdwg.mxu0
    %3134 = vmatprep.subr.mxu0 0.0
    %3135 = vmatpush1.msra.mxu0 0.0
    %3136 = vmatprep.subr.mxu0 0.0
    %3137 = vmatpush1.msra.mxu0 0.0
    %3138 = vmatprep.subr.mxu0 0.0
    %3139 = vmatpush1.msra.mxu0 0.0
    %3140 = vmatprep.subr.mxu0 0.0
    %3141 = vmatpush1.msra.mxu0 0.0
    %3142 = vmatprep.subr.mxu0 0.0
    %3143 = vmatpush1.msra.mxu0 0.0
    %3144 = vmatprep.subr.mxu0 0.0
    %3145 = vmatpush1.msra.mxu0 0.0
    %3146 = vmatprep.subr.mxu0 0.0
    %3147 = vmatpush1.msra.mxu0 0.0
    %3148 = vmatprep.subr.mxu0 0.0
    %3149 = vmatpush1.msra.mxu0 0.0
    %3150 = vmatprep.subr.mxu0 0.0
    %3151 = vmatpush1.msra.mxu0 0.0
    %3152 = vmatprep.subr.mxu0 0.0
    %3153 = vmatpush1.msra.mxu0 0.0
    %3154 = vmatprep.subr.mxu0 0.0
    %3155 = vmatpush1.msra.mxu0 0.0
    %3156 = vmatprep.subr.mxu0 0.0
    %3157 = vmatpush1.msra.mxu0 0.0
    %3158 = vmatprep.subr.mxu0 %v2971
    %3159 = vmatpush1.msra.mxu0 %v2970
    %3160 = vmatprep.subr.mxu0 %v2968
    %3161 = vmatpush1.msra.mxu0 %v2967
    %3162 = vmatprep.subr.mxu0 %v2965
    %3163 = vmatpush1.msra.mxu0 %v2964
    %3164 = vmatprep.subr.mxu0 %v2962
    %3165 = vmatpush1.msra.mxu0 %v2961
    %3166 = vmatprep.subr.mxu0 0.0
    %3167 = vmatpush2.msra.mxu0 0.0
    %3168 = vmatprep.subr.mxu0 0.0
    %3169 = vmatpush2.msra.mxu0 0.0
    %3170 = vmatprep.subr.mxu0 0.0
    %3171 = vmatpush2.msra.mxu0 0.0
    %3172 = vmatprep.subr.mxu0 0.0
    %3173 = vmatpush2.msra.mxu0 0.0
    %3174 = vmatprep.subr.mxu0 0.0
    %3175 = vmatpush2.msra.mxu0 0.0
    %3176 = vmatprep.subr.mxu0 0.0
    %3177 = vmatpush2.msra.mxu0 0.0
    %3178 = vmatprep.subr.mxu0 0.0
    %3179 = vmatpush2.msra.mxu0 0.0
    %3180 = vmatprep.subr.mxu0 0.0
    %3181 = vmatpush2.msra.mxu0 0.0
    %3182 = vmatprep.subr.mxu0 0.0
    %3183 = vmatpush2.msra.mxu0 0.0
    %3184 = vmatprep.subr.mxu0 0.0
    %3185 = vmatpush2.msra.mxu0 0.0
    %3186 = vmatprep.subr.mxu0 0.0
    %3187 = vmatpush2.msra.mxu0 0.0
    %3188 = vmatprep.subr.mxu0 0.0
    %3189 = vmatpush2.msra.mxu0 0.0
    %3190 = vmatprep.subr.mxu0 0.0
    %3191 = vmatpush2.msra.mxu0 0.0
    %3192 = vmatprep.subr.mxu0 0.0
    %3193 = vmatpush2.msra.mxu0 0.0
    %3194 = vmatprep.subr.mxu0 0.0
    %3195 = vmatpush2.msra.mxu0 0.0
    %3196 = vmatprep.subr.mxu0 0.0
    %3197 = vmatpush2.msra.mxu0 0.0
    %3198 = vmatprep.mubr.f32.mxu0 0.0
    %3199 = vmatmul.mubr.f32.gmra.mxu0 %v740
    %v3200 = vpop.f32.mrf.mxu0
    %v3201 = vadd.f32 0.0, %v3200
    %v3202 = vpop.f32.mrf.mxu0
    %v3203 = vadd.f32 0.0, %v3202
    %3204 = vdwg.mxu0
    %3205 = vmatprep.subr.mxu0 0.0
    %3206 = vmatpush1.msra.mxu0 0.0
    %3207 = vmatprep.subr.mxu0 0.0
    %3208 = vmatpush1.msra.mxu0 0.0
    %3209 = vmatprep.subr.mxu0 0.0
    %3210 = vmatpush1.msra.mxu0 0.0
    %3211 = vmatprep.subr.mxu0 0.0
    %3212 = vmatpush1.msra.mxu0 0.0
    %3213 = vmatprep.subr.mxu0 0.0
    %3214 = vmatpush1.msra.mxu0 0.0
    %3215 = vmatprep.subr.mxu0 0.0
    %3216 = vmatpush1.msra.mxu0 0.0
    %3217 = vmatprep.subr.mxu0 0.0
    %3218 = vmatpush1.msra.mxu0 0.0
    %3219 = vmatprep.subr.mxu0 0.0
    %3220 = vmatpush1.msra.mxu0 0.0
    %3221 = vmatprep.subr.mxu0 0.0
    %3222 = vmatpush1.msra.mxu0 0.0
    %3223 = vmatprep.subr.mxu0 0.0
    %3224 = vmatpush1.msra.mxu0 0.0
    %3225 = vmatprep.subr.mxu0 0.0
    %3226 = vmatpush1.msra.mxu0 0.0
    %3227 = vmatprep.subr.mxu0 0.0
    %3228 = vmatpush1.msra.mxu0 0.0
    %3229 = vmatprep.subr.mxu0 0.0
    %3230 = vmatpush1.msra.mxu0 %v2972
    %3231 = vmatprep.subr.mxu0 0.0
    %3232 = vmatpush1.msra.mxu0 %v2969
    %3233 = vmatprep.subr.mxu0 0.0
    %3234 = vmatpush1.msra.mxu0 %v2966
    %3235 = vmatprep.subr.mxu0 0.0
    %3236 = vmatpush1.msra.mxu0 %v2963
    %3237 = vmatprep.subr.mxu0 0.0
    %3238 = vmatpush2.msra.mxu0 0.0
    %3239 = vmatprep.subr.mxu0 0.0
    %3240 = vmatpush2.msra.mxu0 0.0
    %3241 = vmatprep.subr.mxu0 0.0
    %3242 = vmatpush2.msra.mxu0 0.0
    %3243 = vmatprep.subr.mxu0 0.0
    %3244 = vmatpush2.msra.mxu0 0.0
    %3245 = vmatprep.subr.mxu0 0.0
    %3246 = vmatpush2.msra.mxu0 0.0
    %3247 = vmatprep.subr.mxu0 0.0
    %3248 = vmatpush2.msra.mxu0 0.0
    %3249 = vmatprep.subr.mxu0 0.0
    %3250 = vmatpush2.msra.mxu0 0.0
    %3251 = vmatprep.subr.mxu0 0.0
    %3252 = vmatpush2.msra.mxu0 0.0
    %3253 = vmatprep.subr.mxu0 0.0
    %3254 = vmatpush2.msra.mxu0 0.0
    %3255 = vmatprep.subr.mxu0 0.0
    %3256 = vmatpush2.msra.mxu0 0.0
    %3257 = vmatprep.subr.mxu0 0.0
    %3258 = vmatpush2.msra.mxu0 0.0
    %3259 = vmatprep.subr.mxu0 0.0
    %3260 = vmatpush2.msra.mxu0 0.0
    %3261 = vmatprep.subr.mxu0 0.0
    %3262 = vmatpush2.msra.mxu0 0.0
    %3263 = vmatprep.subr.mxu0 0.0
    %3264 = vmatpush2.msra.mxu0 0.0
    %3265 = vmatprep.subr.mxu0 0.0
    %3266 = vmatpush2.msra.mxu0 0.0
    %3267 = vmatprep.subr.mxu0 0.0
    %3268 = vmatpush2.msra.mxu0 0.0
    %3269 = vmatprep.mubr.f32.mxu0 0.0
    %3270 = vmatmul.mubr.f32.gmra.mxu0 %v740
    %v3271 = vpop.f32.mrf.mxu0
    %v3272 = vadd.f32 0.0, %v3271
    %v3273 = vpop.f32.mrf.mxu0
    %3274 = vdwg.mxu0
    %v3275 = vadd.f32 %v2987, %v3060
    %v3276 = vxor.u32 %v3275, 2147483648
    %v3277 = vmul.f32 %v3276, 1.442695
    %v3278 = vpow.pop %v3277
    %v3279 = vadd.f32 %v3278, 1.0
    %v3280 = vrcp.pop %v3279
    %v3281 = vmul.f32 1.0, %v3280
    %v3282 = vadd.f32 %v2988, %v3062
    %v3283 = vxor.u32 %v3282, 2147483648
    %v3284 = vmul.f32 %v3283, 1.442695
    %v3285 = vpow.pop %v3284
    %v3286 = vadd.f32 %v3285, 1.0
    %v3287 = vrcp.pop %v3286
    %v3288 = vmul.f32 1.0, %v3287
    %v3289 = vadd.f32 %v3131, %v2978
    %v3290 = vmul.f32 %v3281, %v3289
    %v3291 = vadd.f32 %v2989, %v3290
    %v3292 = vtanh.pop %v3291
    %v3293 = vsub.f32 1.0, %v3288
    %v3294 = vmul.f32 %v3293, %v3292
    %v3295 = vmul.f32 %v3288, 0.0
    %v3296 = vadd.f32 %v3294, %v3295
    %v3297 = vadd.f32 %v2990, %v3201
    %v3298 = vxor.u32 %v3297, 2147483648
    %v3299 = vmul.f32 %v3298, 1.442695
    %v3300 = vpow.pop %v3299
    %v3301 = vadd.f32 %v3300, 1.0
    %v3302 = vrcp.pop %v3301
    %v3303 = vmul.f32 1.0, %v3302
    %v3304 = vadd.f32 %v2991, %v3203
    %v3305 = vxor.u32 %v3304, 2147483648
    %v3306 = vmul.f32 %v3305, 1.442695
    %v3307 = vpow.pop %v3306
    %v3308 = vadd.f32 %v3307, 1.0
    %v3309 = vrcp.pop %v3308
    %v3310 = vmul.f32 1.0, %v3309
    %v3311 = vadd.f32 %v3272, %v2985
    %v3312 = vmul.f32 %v3303, %v3311
    %v3313 = vadd.f32 %v2992, %v3312
    %v3314 = vtanh.pop %v3313
    %v3315 = vsub.f32 1.0, %v3310
    %v3316 = vmul.f32 %v3315, %v3314
    %v3317 = vmul.f32 %v3310, 0.0
    %v3318 = vadd.f32 %v3316, %v3317
    %v3319 = vld [vmem:[#allocation2 + $0x30] sm:$0x3]
    %v3320 = vld [vmem:[#allocation2 + $0x38] sm:$0x3]
    %v3321 = vld [vmem:[#allocation2 + $0x40] sm:$0x3]
    %v3322 = vld [vmem:[#allocation2 + $0x78] sm:$0x3]
    %v3323 = vld [vmem:[#allocation2 + $0x80] sm:$0x3]
    %v3324 = vld [vmem:[#allocation2 + $0x88] sm:$0x3]
    %v3326 = vsel %vm686, %v3296, 0
    %3328 = vmatprep.subr.mxu0 0.0
    %3329 = vmatpush1.msra.mxu0 0.0
    %3330 = vmatprep.subr.mxu0 0.0
    %3331 = vmatpush1.msra.mxu0 0.0
    %3332 = vmatprep.subr.mxu0 0.0
    %3333 = vmatpush1.msra.mxu0 0.0
    %3334 = vmatprep.subr.mxu0 0.0
    %3335 = vmatpush1.msra.mxu0 0.0
    %3336 = vmatprep.subr.mxu0 0.0
    %3337 = vmatpush1.msra.mxu0 0.0
    %3338 = vmatprep.subr.mxu0 0.0
    %3339 = vmatpush1.msra.mxu0 0.0
    %3340 = vmatprep.subr.mxu0 0.0
    %3341 = vmatpush1.msra.mxu0 0.0
    %3342 = vmatprep.subr.mxu0 0.0
    %3343 = vmatpush1.msra.mxu0 0.0
    %3344 = vmatprep.subr.mxu0 0.0
    %3345 = vmatpush1.msra.mxu0 0.0
    %3346 = vmatprep.subr.mxu0 0.0
    %3347 = vmatpush1.msra.mxu0 0.0
    %3348 = vmatprep.subr.mxu0 0.0
    %3349 = vmatpush1.msra.mxu0 0.0
    %3350 = vmatprep.subr.mxu0 0.0
    %3351 = vmatpush1.msra.mxu0 0.0
    %3352 = vmatprep.subr.mxu0 %v2959
    %3353 = vmatpush1.msra.mxu0 %v2958
    %3354 = vmatprep.subr.mxu0 %v2956
    %3355 = vmatpush1.msra.mxu0 %v2955
    %3356 = vmatprep.subr.mxu0 %v2953
    %3357 = vmatpush1.msra.mxu0 %v2952
    %3358 = vmatprep.subr.mxu0 %v2950
    %3359 = vmatpush1.msra.mxu0 %v2949
    %3360 = vmatprep.subr.mxu0 0.0
    %3361 = vmatpush2.msra.mxu0 0.0
    %3362 = vmatprep.subr.mxu0 0.0
    %3363 = vmatpush2.msra.mxu0 0.0
    %3364 = vmatprep.subr.mxu0 0.0
    %3365 = vmatpush2.msra.mxu0 0.0
    %3366 = vmatprep.subr.mxu0 0.0
    %3367 = vmatpush2.msra.mxu0 0.0
    %3368 = vmatprep.subr.mxu0 0.0
    %3369 = vmatpush2.msra.mxu0 0.0
    %3370 = vmatprep.subr.mxu0 0.0
    %3371 = vmatpush2.msra.mxu0 0.0
    %3372 = vmatprep.subr.mxu0 0.0
    %3373 = vmatpush2.msra.mxu0 0.0
    %3374 = vmatprep.subr.mxu0 0.0
    %3375 = vmatpush2.msra.mxu0 0.0
    %3376 = vmatprep.subr.mxu0 0.0
    %3377 = vmatpush2.msra.mxu0 0.0
    %3378 = vmatprep.subr.mxu0 0.0
    %3379 = vmatpush2.msra.mxu0 0.0
    %3380 = vmatprep.subr.mxu0 0.0
    %3381 = vmatpush2.msra.mxu0 0.0
    %3382 = vmatprep.subr.mxu0 0.0
    %3383 = vmatpush2.msra.mxu0 0.0
    %3384 = vmatprep.subr.mxu0 0.0
    %3385 = vmatpush2.msra.mxu0 0.0
    %3386 = vmatprep.subr.mxu0 0.0
    %3387 = vmatpush2.msra.mxu0 0.0
    %3388 = vmatprep.subr.mxu0 0.0
    %3389 = vmatpush2.msra.mxu0 0.0
    %3390 = vmatprep.subr.mxu0 0.0
    %3391 = vmatpush2.msra.mxu0 0.0
    %3392 = vmatprep.mubr.f32.mxu0 0.0
    %3393 = vmatmul.mubr.f32.gmra.mxu0 %v3326
    %v3394 = vpop.f32.mrf.mxu0
    %v3395 = vadd.f32 0.0, %v3394
    %v3396 = vpop.f32.mrf.mxu0
    %v3397 = vadd.f32 0.0, %v3396
    %3398 = vdwg.mxu0
    %3399 = vmatprep.subr.mxu0 0.0
    %3400 = vmatpush1.msra.mxu0 0.0
    %3401 = vmatprep.subr.mxu0 0.0
    %3402 = vmatpush1.msra.mxu0 0.0
    %3403 = vmatprep.subr.mxu0 0.0
    %3404 = vmatpush1.msra.mxu0 0.0
    %3405 = vmatprep.subr.mxu0 0.0
    %3406 = vmatpush1.msra.mxu0 0.0
    %3407 = vmatprep.subr.mxu0 0.0
    %3408 = vmatpush1.msra.mxu0 0.0
    %3409 = vmatprep.subr.mxu0 0.0
    %3410 = vmatpush1.msra.mxu0 0.0
    %3411 = vmatprep.subr.mxu0 0.0
    %3412 = vmatpush1.msra.mxu0 0.0
    %3413 = vmatprep.subr.mxu0 0.0
    %3414 = vmatpush1.msra.mxu0 0.0
    %3415 = vmatprep.subr.mxu0 0.0
    %3416 = vmatpush1.msra.mxu0 0.0
    %3417 = vmatprep.subr.mxu0 0.0
    %3418 = vmatpush1.msra.mxu0 0.0
    %3419 = vmatprep.subr.mxu0 0.0
    %3420 = vmatpush1.msra.mxu0 0.0
    %3421 = vmatprep.subr.mxu0 0.0
    %3422 = vmatpush1.msra.mxu0 0.0
    %3423 = vmatprep.subr.mxu0 0.0
    %3424 = vmatpush1.msra.mxu0 %v2960
    %3425 = vmatprep.subr.mxu0 0.0
    %3426 = vmatpush1.msra.mxu0 %v2957
    %3427 = vmatprep.subr.mxu0 0.0
    %3428 = vmatpush1.msra.mxu0 %v2954
    %3429 = vmatprep.subr.mxu0 0.0
    %3430 = vmatpush1.msra.mxu0 %v2951
    %3431 = vmatprep.subr.mxu0 0.0
    %3432 = vmatpush2.msra.mxu0 0.0
    %3433 = vmatprep.subr.mxu0 0.0
    %3434 = vmatpush2.msra.mxu0 0.0
    %3435 = vmatprep.subr.mxu0 0.0
    %3436 = vmatpush2.msra.mxu0 0.0
    %3437 = vmatprep.subr.mxu0 0.0
    %3438 = vmatpush2.msra.mxu0 0.0
    %3439 = vmatprep.subr.mxu0 0.0
    %3440 = vmatpush2.msra.mxu0 0.0
    %3441 = vmatprep.subr.mxu0 0.0
    %3442 = vmatpush2.msra.mxu0 0.0
    %3443 = vmatprep.subr.mxu0 0.0
    %3444 = vmatpush2.msra.mxu0 0.0
    %3445 = vmatprep.subr.mxu0 0.0
    %3446 = vmatpush2.msra.mxu0 0.0
    %3447 = vmatprep.subr.mxu0 0.0
    %3448 = vmatpush2.msra.mxu0 0.0
    %3449 = vmatprep.subr.mxu0 0.0
    %3450 = vmatpush2.msra.mxu0 0.0
    %3451 = vmatprep.subr.mxu0 0.0
    %3452 = vmatpush2.msra.mxu0 0.0
    %3453 = vmatprep.subr.mxu0 0.0
    %3454 = vmatpush2.msra.mxu0 0.0
    %3455 = vmatprep.subr.mxu0 0.0
    %3456 = vmatpush2.msra.mxu0 0.0
    %3457 = vmatprep.subr.mxu0 0.0
    %3458 = vmatpush2.msra.mxu0 0.0
    %3459 = vmatprep.subr.mxu0 0.0
    %3460 = vmatpush2.msra.mxu0 0.0
    %3461 = vmatprep.subr.mxu0 0.0
    %3462 = vmatpush2.msra.mxu0 0.0
    %3463 = vmatprep.mubr.f32.mxu0 0.0
    %3464 = vmatmul.mubr.f32.gmra.mxu0 %v3326
    %v3465 = vpop.f32.mrf.mxu0
    %v3466 = vadd.f32 0.0, %v3465
    %v3467 = vpop.f32.mrf.mxu0
    %3468 = vdwg.mxu0
    %v3470 = vsel %vm686, %v3318, 0
    %3472 = vmatprep.subr.mxu0 0.0
    %3473 = vmatpush1.msra.mxu0 0.0
    %3474 = vmatprep.subr.mxu0 0.0
    %3475 = vmatpush1.msra.mxu0 0.0
    %3476 = vmatprep.subr.mxu0 0.0
    %3477 = vmatpush1.msra.mxu0 0.0
    %3478 = vmatprep.subr.mxu0 0.0
    %3479 = vmatpush1.msra.mxu0 0.0
    %3480 = vmatprep.subr.mxu0 0.0
    %3481 = vmatpush1.msra.mxu0 0.0
    %3482 = vmatprep.subr.mxu0 0.0
    %3483 = vmatpush1.msra.mxu0 0.0
    %3484 = vmatprep.subr.mxu0 0.0
    %3485 = vmatpush1.msra.mxu0 0.0
    %3486 = vmatprep.subr.mxu0 0.0
    %3487 = vmatpush1.msra.mxu0 0.0
    %3488 = vmatprep.subr.mxu0 0.0
    %3489 = vmatpush1.msra.mxu0 0.0
    %3490 = vmatprep.subr.mxu0 0.0
    %3491 = vmatpush1.msra.mxu0 0.0
    %3492 = vmatprep.subr.mxu0 0.0
    %3493 = vmatpush1.msra.mxu0 0.0
    %3494 = vmatprep.subr.mxu0 0.0
    %3495 = vmatpush1.msra.mxu0 0.0
    %3496 = vmatprep.subr.mxu0 %v2971
    %3497 = vmatpush1.msra.mxu0 %v2970
    %3498 = vmatprep.subr.mxu0 %v2968
    %3499 = vmatpush1.msra.mxu0 %v2967
    %3500 = vmatprep.subr.mxu0 %v2965
    %3501 = vmatpush1.msra.mxu0 %v2964
    %3502 = vmatprep.subr.mxu0 %v2962
    %3503 = vmatpush1.msra.mxu0 %v2961
    %3504 = vmatprep.subr.mxu0 0.0
    %3505 = vmatpush2.msra.mxu0 0.0
    %3506 = vmatprep.subr.mxu0 0.0
    %3507 = vmatpush2.msra.mxu0 0.0
    %3508 = vmatprep.subr.mxu0 0.0
    %3509 = vmatpush2.msra.mxu0 0.0
    %3510 = vmatprep.subr.mxu0 0.0
    %3511 = vmatpush2.msra.mxu0 0.0
    %3512 = vmatprep.subr.mxu0 0.0
    %3513 = vmatpush2.msra.mxu0 0.0
    %3514 = vmatprep.subr.mxu0 0.0
    %3515 = vmatpush2.msra.mxu0 0.0
    %3516 = vmatprep.subr.mxu0 0.0
    %3517 = vmatpush2.msra.mxu0 0.0
    %3518 = vmatprep.subr.mxu0 0.0
    %3519 = vmatpush2.msra.mxu0 0.0
    %3520 = vmatprep.subr.mxu0 0.0
    %3521 = vmatpush2.msra.mxu0 0.0
    %3522 = vmatprep.subr.mxu0 0.0
    %3523 = vmatpush2.msra.mxu0 0.0
    %3524 = vmatprep.subr.mxu0 0.0
    %3525 = vmatpush2.msra.mxu0 0.0
    %3526 = vmatprep.subr.mxu0 0.0
    %3527 = vmatpush2.msra.mxu0 0.0
    %3528 = vmatprep.subr.mxu0 0.0
    %3529 = vmatpush2.msra.mxu0 0.0
    %3530 = vmatprep.subr.mxu0 0.0
    %3531 = vmatpush2.msra.mxu0 0.0
    %3532 = vmatprep.subr.mxu0 0.0
    %3533 = vmatpush2.msra.mxu0 0.0
    %3534 = vmatprep.subr.mxu0 0.0
    %3535 = vmatpush2.msra.mxu0 0.0
    %3536 = vmatprep.mubr.f32.mxu0 0.0
    %3537 = vmatmul.mubr.f32.gmra.mxu0 %v3470
    %v3538 = vpop.f32.mrf.mxu0
    %v3539 = vadd.f32 0.0, %v3538
    %v3540 = vpop.f32.mrf.mxu0
    %v3541 = vadd.f32 0.0, %v3540
    %3542 = vdwg.mxu0
    %3543 = vmatprep.subr.mxu0 0.0
    %3544 = vmatpush1.msra.mxu0 0.0
    %3545 = vmatprep.subr.mxu0 0.0
    %3546 = vmatpush1.msra.mxu0 0.0
    %3547 = vmatprep.subr.mxu0 0.0
    %3548 = vmatpush1.msra.mxu0 0.0
    %3549 = vmatprep.subr.mxu0 0.0
    %3550 = vmatpush1.msra.mxu0 0.0
    %3551 = vmatprep.subr.mxu0 0.0
    %3552 = vmatpush1.msra.mxu0 0.0
    %3553 = vmatprep.subr.mxu0 0.0
    %3554 = vmatpush1.msra.mxu0 0.0
    %3555 = vmatprep.subr.mxu0 0.0
    %3556 = vmatpush1.msra.mxu0 0.0
    %3557 = vmatprep.subr.mxu0 0.0
    %3558 = vmatpush1.msra.mxu0 0.0
    %3559 = vmatprep.subr.mxu0 0.0
    %3560 = vmatpush1.msra.mxu0 0.0
    %3561 = vmatprep.subr.mxu0 0.0
    %3562 = vmatpush1.msra.mxu0 0.0
    %3563 = vmatprep.subr.mxu0 0.0
    %3564 = vmatpush1.msra.mxu0 0.0
    %3565 = vmatprep.subr.mxu0 0.0
    %3566 = vmatpush1.msra.mxu0 0.0
    %3567 = vmatprep.subr.mxu0 0.0
    %3568 = vmatpush1.msra.mxu0 %v2972
    %3569 = vmatprep.subr.mxu0 0.0
    %3570 = vmatpush1.msra.mxu0 %v2969
    %3571 = vmatprep.subr.mxu0 0.0
    %3572 = vmatpush1.msra.mxu0 %v2966
    %3573 = vmatprep.subr.mxu0 0.0
    %3574 = vmatpush1.msra.mxu0 %v2963
    %3575 = vmatprep.subr.mxu0 0.0
    %3576 = vmatpush2.msra.mxu0 0.0
    %3577 = vmatprep.subr.mxu0 0.0
    %3578 = vmatpush2.msra.mxu0 0.0
    %3579 = vmatprep.subr.mxu0 0.0
    %3580 = vmatpush2.msra.mxu0 0.0
    %3581 = vmatprep.subr.mxu0 0.0
    %3582 = vmatpush2.msra.mxu0 0.0
    %3583 = vmatprep.subr.mxu0 0.0
    %3584 = vmatpush2.msra.mxu0 0.0
    %3585 = vmatprep.subr.mxu0 0.0
    %3586 = vmatpush2.msra.mxu0 0.0
    %3587 = vmatprep.subr.mxu0 0.0
    %3588 = vmatpush2.msra.mxu0 0.0
    %3589 = vmatprep.subr.mxu0 0.0
    %3590 = vmatpush2.msra.mxu0 0.0
    %3591 = vmatprep.subr.mxu0 0.0
    %3592 = vmatpush2.msra.mxu0 0.0
    %3593 = vmatprep.subr.mxu0 0.0
    %3594 = vmatpush2.msra.mxu0 0.0
    %3595 = vmatprep.subr.mxu0 0.0
    %3596 = vmatpush2.msra.mxu0 0.0
    %3597 = vmatprep.subr.mxu0 0.0
    %3598 = vmatpush2.msra.mxu0 0.0
    %3599 = vmatprep.subr.mxu0 0.0
    %3600 = vmatpush2.msra.mxu0 0.0
    %3601 = vmatprep.subr.mxu0 0.0
    %3602 = vmatpush2.msra.mxu0 0.0
    %3603 = vmatprep.subr.mxu0 0.0
    %3604 = vmatpush2.msra.mxu0 0.0
    %3605 = vmatprep.subr.mxu0 0.0
    %3606 = vmatpush2.msra.mxu0 0.0
    %3607 = vmatprep.mubr.f32.mxu0 0.0
    %3608 = vmatmul.mubr.f32.gmra.mxu0 %v3470
    %v3609 = vpop.f32.mrf.mxu0
    %v3610 = vadd.f32 0.0, %v3609
    %v3611 = vpop.f32.mrf.mxu0
    %3612 = vdwg.mxu0
    %v3613 = vadd.f32 %v3319, %v3395
    %v3614 = vxor.u32 %v3613, 2147483648
    %v3615 = vmul.f32 %v3614, 1.442695
    %v3616 = vpow.pop %v3615
    %v3617 = vadd.f32 %v3616, 1.0
    %v3618 = vrcp.pop %v3617
    %v3619 = vmul.f32 1.0, %v3618
    %v3620 = vadd.f32 %v3320, %v3397
    %v3621 = vxor.u32 %v3620, 2147483648
    %v3622 = vmul.f32 %v3621, 1.442695
    %v3623 = vpow.pop %v3622
    %v3624 = vadd.f32 %v3623, 1.0
    %v3625 = vrcp.pop %v3624
    %v3626 = vmul.f32 1.0, %v3625
    %v3627 = vadd.f32 %v3466, %v2978
    %v3628 = vmul.f32 %v3619, %v3627
    %v3629 = vadd.f32 %v3321, %v3628
    %v3630 = vtanh.pop %v3629
    %v3631 = vsub.f32 1.0, %v3626
    %v3632 = vmul.f32 %v3631, %v3630
    %v3633 = vmul.f32 %v3626, %v3296
    %v3634 = vadd.f32 %v3632, %v3633
    %v3635 = vadd.f32 %v3322, %v3539
    %v3636 = vxor.u32 %v3635, 2147483648
    %v3637 = vmul.f32 %v3636, 1.442695
    %v3638 = vpow.pop %v3637
    %v3639 = vadd.f32 %v3638, 1.0
    %v3640 = vrcp.pop %v3639
    %v3641 = vmul.f32 1.0, %v3640
    %v3642 = vadd.f32 %v3323, %v3541
    %v3643 = vxor.u32 %v3642, 2147483648
    %v3644 = vmul.f32 %v3643, 1.442695
    %v3645 = vpow.pop %v3644
    %v3646 = vadd.f32 %v3645, 1.0
    %v3647 = vrcp.pop %v3646
    %v3648 = vmul.f32 1.0, %v3647
    %v3649 = vadd.f32 %v3610, %v2985
    %v3650 = vmul.f32 %v3641, %v3649
    %v3651 = vadd.f32 %v3324, %v3650
    %v3652 = vtanh.pop %v3651
    %v3653 = vsub.f32 1.0, %v3648
    %v3654 = vmul.f32 %v3653, %v3652
    %v3655 = vmul.f32 %v3648, %v3318
    %v3656 = vadd.f32 %v3654, %v3655
    %v3657 = vld [vmem:[#allocation2 + $0x60] sm:$0x3]
    %v3658 = vld [vmem:[#allocation2 + $0x68] sm:$0x3]
    %v3659 = vld [vmem:[#allocation2 + $0x70] sm:$0x3]
    %v3660 = vld [vmem:[#allocation2 + $0x48] sm:$0x3]
    %v3661 = vld [vmem:[#allocation2 + $0x50] sm:$0x3]
    %v3662 = vld [vmem:[#allocation2 + $0x58] sm:$0x3]
    %v3664 = vsel %vm686, %v3634, 0
    %3666 = vmatprep.subr.mxu0 0.0
    %3667 = vmatpush1.msra.mxu0 0.0
    %3668 = vmatprep.subr.mxu0 0.0
    %3669 = vmatpush1.msra.mxu0 0.0
    %3670 = vmatprep.subr.mxu0 0.0
    %3671 = vmatpush1.msra.mxu0 0.0
    %3672 = vmatprep.subr.mxu0 0.0
    %3673 = vmatpush1.msra.mxu0 0.0
    %3674 = vmatprep.subr.mxu0 0.0
    %3675 = vmatpush1.msra.mxu0 0.0
    %3676 = vmatprep.subr.mxu0 0.0
    %3677 = vmatpush1.msra.mxu0 0.0
    %3678 = vmatprep.subr.mxu0 0.0
    %3679 = vmatpush1.msra.mxu0 0.0
    %3680 = vmatprep.subr.mxu0 0.0
    %3681 = vmatpush1.msra.mxu0 0.0
    %3682 = vmatprep.subr.mxu0 0.0
    %3683 = vmatpush1.msra.mxu0 0.0
    %3684 = vmatprep.subr.mxu0 0.0
    %3685 = vmatpush1.msra.mxu0 0.0
    %3686 = vmatprep.subr.mxu0 0.0
    %3687 = vmatpush1.msra.mxu0 0.0
    %3688 = vmatprep.subr.mxu0 0.0
    %3689 = vmatpush1.msra.mxu0 0.0
    %3690 = vmatprep.subr.mxu0 %v2959
    %3691 = vmatpush1.msra.mxu0 %v2958
    %3692 = vmatprep.subr.mxu0 %v2956
    %3693 = vmatpush1.msra.mxu0 %v2955
    %3694 = vmatprep.subr.mxu0 %v2953
    %3695 = vmatpush1.msra.mxu0 %v2952
    %3696 = vmatprep.subr.mxu0 %v2950
    %3697 = vmatpush1.msra.mxu0 %v2949
    %3698 = vmatprep.subr.mxu0 0.0
    %3699 = vmatpush2.msra.mxu0 0.0
    %3700 = vmatprep.subr.mxu0 0.0
    %3701 = vmatpush2.msra.mxu0 0.0
    %3702 = vmatprep.subr.mxu0 0.0
    %3703 = vmatpush2.msra.mxu0 0.0
    %3704 = vmatprep.subr.mxu0 0.0
    %3705 = vmatpush2.msra.mxu0 0.0
    %3706 = vmatprep.subr.mxu0 0.0
    %3707 = vmatpush2.msra.mxu0 0.0
    %3708 = vmatprep.subr.mxu0 0.0
    %3709 = vmatpush2.msra.mxu0 0.0
    %3710 = vmatprep.subr.mxu0 0.0
    %3711 = vmatpush2.msra.mxu0 0.0
    %3712 = vmatprep.subr.mxu0 0.0
    %3713 = vmatpush2.msra.mxu0 0.0
    %3714 = vmatprep.subr.mxu0 0.0
    %3715 = vmatpush2.msra.mxu0 0.0
    %3716 = vmatprep.subr.mxu0 0.0
    %3717 = vmatpush2.msra.mxu0 0.0
    %3718 = vmatprep.subr.mxu0 0.0
    %3719 = vmatpush2.msra.mxu0 0.0
    %3720 = vmatprep.subr.mxu0 0.0
    %3721 = vmatpush2.msra.mxu0 0.0
    %3722 = vmatprep.subr.mxu0 0.0
    %3723 = vmatpush2.msra.mxu0 0.0
    %3724 = vmatprep.subr.mxu0 0.0
    %3725 = vmatpush2.msra.mxu0 0.0
    %3726 = vmatprep.subr.mxu0 0.0
    %3727 = vmatpush2.msra.mxu0 0.0
    %3728 = vmatprep.subr.mxu0 0.0
    %3729 = vmatpush2.msra.mxu0 0.0
    %3730 = vmatprep.mubr.f32.mxu0 0.0
    %3731 = vmatmul.mubr.f32.gmra.mxu0 %v3664
    %v3732 = vpop.f32.mrf.mxu0
    %v3733 = vadd.f32 0.0, %v3732
    %v3734 = vpop.f32.mrf.mxu0
    %v3735 = vadd.f32 0.0, %v3734
    %3736 = vdwg.mxu0
    %3737 = vmatprep.subr.mxu0 0.0
    %3738 = vmatpush1.msra.mxu0 0.0
    %3739 = vmatprep.subr.mxu0 0.0
    %3740 = vmatpush1.msra.mxu0 0.0
    %3741 = vmatprep.subr.mxu0 0.0
    %3742 = vmatpush1.msra.mxu0 0.0
    %3743 = vmatprep.subr.mxu0 0.0
    %3744 = vmatpush1.msra.mxu0 0.0
    %3745 = vmatprep.subr.mxu0 0.0
    %3746 = vmatpush1.msra.mxu0 0.0
    %3747 = vmatprep.subr.mxu0 0.0
    %3748 = vmatpush1.msra.mxu0 0.0
    %3749 = vmatprep.subr.mxu0 0.0
    %3750 = vmatpush1.msra.mxu0 0.0
    %3751 = vmatprep.subr.mxu0 0.0
    %3752 = vmatpush1.msra.mxu0 0.0
    %3753 = vmatprep.subr.mxu0 0.0
    %3754 = vmatpush1.msra.mxu0 0.0
    %3755 = vmatprep.subr.mxu0 0.0
    %3756 = vmatpush1.msra.mxu0 0.0
    %3757 = vmatprep.subr.mxu0 0.0
    %3758 = vmatpush1.msra.mxu0 0.0
    %3759 = vmatprep.subr.mxu0 0.0
    %3760 = vmatpush1.msra.mxu0 0.0
    %3761 = vmatprep.subr.mxu0 0.0
    %3762 = vmatpush1.msra.mxu0 %v2960
    %3763 = vmatprep.subr.mxu0 0.0
    %3764 = vmatpush1.msra.mxu0 %v2957
    %3765 = vmatprep.subr.mxu0 0.0
    %3766 = vmatpush1.msra.mxu0 %v2954
    %3767 = vmatprep.subr.mxu0 0.0
    %3768 = vmatpush1.msra.mxu0 %v2951
    %3769 = vmatprep.subr.mxu0 0.0
    %3770 = vmatpush2.msra.mxu0 0.0
    %3771 = vmatprep.subr.mxu0 0.0
    %3772 = vmatpush2.msra.mxu0 0.0
    %3773 = vmatprep.subr.mxu0 0.0
    %3774 = vmatpush2.msra.mxu0 0.0
    %3775 = vmatprep.subr.mxu0 0.0
    %3776 = vmatpush2.msra.mxu0 0.0
    %3777 = vmatprep.subr.mxu0 0.0
    %3778 = vmatpush2.msra.mxu0 0.0
    %3779 = vmatprep.subr.mxu0 0.0
    %3780 = vmatpush2.msra.mxu0 0.0
    %3781 = vmatprep.subr.mxu0 0.0
    %3782 = vmatpush2.msra.mxu0 0.0
    %3783 = vmatprep.subr.mxu0 0.0
    %3784 = vmatpush2.msra.mxu0 0.0
    %3785 = vmatprep.subr.mxu0 0.0
    %3786 = vmatpush2.msra.mxu0 0.0
    %3787 = vmatprep.subr.mxu0 0.0
    %3788 = vmatpush2.msra.mxu0 0.0
    %3789 = vmatprep.subr.mxu0 0.0
    %3790 = vmatpush2.msra.mxu0 0.0
    %3791 = vmatprep.subr.mxu0 0.0
    %3792 = vmatpush2.msra.mxu0 0.0
    %3793 = vmatprep.subr.mxu0 0.0
    %3794 = vmatpush2.msra.mxu0 0.0
    %3795 = vmatprep.subr.mxu0 0.0
    %3796 = vmatpush2.msra.mxu0 0.0
    %3797 = vmatprep.subr.mxu0 0.0
    %3798 = vmatpush2.msra.mxu0 0.0
    %3799 = vmatprep.subr.mxu0 0.0
    %3800 = vmatpush2.msra.mxu0 0.0
    %3801 = vmatprep.mubr.f32.mxu0 0.0
    %3802 = vmatmul.mubr.f32.gmra.mxu0 %v3664
    %v3803 = vpop.f32.mrf.mxu0
    %v3804 = vadd.f32 0.0, %v3803
    %v3805 = vpop.f32.mrf.mxu0
    %3806 = vdwg.mxu0
    %v3808 = vsel %vm686, %v3656, 0
    %3810 = vmatprep.subr.mxu0 0.0
    %3811 = vmatpush1.msra.mxu0 0.0
    %3812 = vmatprep.subr.mxu0 0.0
    %3813 = vmatpush1.msra.mxu0 0.0
    %3814 = vmatprep.subr.mxu0 0.0
    %3815 = vmatpush1.msra.mxu0 0.0
    %3816 = vmatprep.subr.mxu0 0.0
    %3817 = vmatpush1.msra.mxu0 0.0
    %3818 = vmatprep.subr.mxu0 0.0
    %3819 = vmatpush1.msra.mxu0 0.0
    %3820 = vmatprep.subr.mxu0 0.0
    %3821 = vmatpush1.msra.mxu0 0.0
    %3822 = vmatprep.subr.mxu0 0.0
    %3823 = vmatpush1.msra.mxu0 0.0
    %3824 = vmatprep.subr.mxu0 0.0
    %3825 = vmatpush1.msra.mxu0 0.0
    %3826 = vmatprep.subr.mxu0 0.0
    %3827 = vmatpush1.msra.mxu0 0.0
    %3828 = vmatprep.subr.mxu0 0.0
    %3829 = vmatpush1.msra.mxu0 0.0
    %3830 = vmatprep.subr.mxu0 0.0
    %3831 = vmatpush1.msra.mxu0 0.0
    %3832 = vmatprep.subr.mxu0 0.0
    %3833 = vmatpush1.msra.mxu0 0.0
    %3834 = vmatprep.subr.mxu0 %v2971
    %3835 = vmatpush1.msra.mxu0 %v2970
    %3836 = vmatprep.subr.mxu0 %v2968
    %3837 = vmatpush1.msra.mxu0 %v2967
    %3838 = vmatprep.subr.mxu0 %v2965
    %3839 = vmatpush1.msra.mxu0 %v2964
    %3840 = vmatprep.subr.mxu0 %v2962
    %3841 = vmatpush1.msra.mxu0 %v2961
    %3842 = vmatprep.subr.mxu0 0.0
    %3843 = vmatpush2.msra.mxu0 0.0
    %3844 = vmatprep.subr.mxu0 0.0
    %3845 = vmatpush2.msra.mxu0 0.0
    %3846 = vmatprep.subr.mxu0 0.0
    %3847 = vmatpush2.msra.mxu0 0.0
    %3848 = vmatprep.subr.mxu0 0.0
    %3849 = vmatpush2.msra.mxu0 0.0
    %3850 = vmatprep.subr.mxu0 0.0
    %3851 = vmatpush2.msra.mxu0 0.0
    %3852 = vmatprep.subr.mxu0 0.0
    %3853 = vmatpush2.msra.mxu0 0.0
    %3854 = vmatprep.subr.mxu0 0.0
    %3855 = vmatpush2.msra.mxu0 0.0
    %3856 = vmatprep.subr.mxu0 0.0
    %3857 = vmatpush2.msra.mxu0 0.0
    %3858 = vmatprep.subr.mxu0 0.0
    %3859 = vmatpush2.msra.mxu0 0.0
    %3860 = vmatprep.subr.mxu0 0.0
    %3861 = vmatpush2.msra.mxu0 0.0
    %3862 = vmatprep.subr.mxu0 0.0
    %3863 = vmatpush2.msra.mxu0 0.0
    %3864 = vmatprep.subr.mxu0 0.0
    %3865 = vmatpush2.msra.mxu0 0.0
    %3866 = vmatprep.subr.mxu0 0.0
    %3867 = vmatpush2.msra.mxu0 0.0
    %3868 = vmatprep.subr.mxu0 0.0
    %3869 = vmatpush2.msra.mxu0 0.0
    %3870 = vmatprep.subr.mxu0 0.0
    %3871 = vmatpush2.msra.mxu0 0.0
    %3872 = vmatprep.subr.mxu0 0.0
    %3873 = vmatpush2.msra.mxu0 0.0
    %3874 = vmatprep.mubr.f32.mxu0 0.0
    %3875 = vmatmul.mubr.f32.gmra.mxu0 %v3808
    %v3876 = vpop.f32.mrf.mxu0
    %v3877 = vadd.f32 0.0, %v3876
    %v3878 = vpop.f32.mrf.mxu0
    %v3879 = vadd.f32 0.0, %v3878
    %3880 = vdwg.mxu0
    %3881 = vmatprep.subr.mxu0 0.0
    %3882 = vmatpush1.msra.mxu0 0.0
    %3883 = vmatprep.subr.mxu0 0.0
    %3884 = vmatpush1.msra.mxu0 0.0
    %3885 = vmatprep.subr.mxu0 0.0
    %3886 = vmatpush1.msra.mxu0 0.0
    %3887 = vmatprep.subr.mxu0 0.0
    %3888 = vmatpush1.msra.mxu0 0.0
    %3889 = vmatprep.subr.mxu0 0.0
    %3890 = vmatpush1.msra.mxu0 0.0
    %3891 = vmatprep.subr.mxu0 0.0
    %3892 = vmatpush1.msra.mxu0 0.0
    %3893 = vmatprep.subr.mxu0 0.0
    %3894 = vmatpush1.msra.mxu0 0.0
    %3895 = vmatprep.subr.mxu0 0.0
    %3896 = vmatpush1.msra.mxu0 0.0
    %3897 = vmatprep.subr.mxu0 0.0
    %3898 = vmatpush1.msra.mxu0 0.0
    %3899 = vmatprep.subr.mxu0 0.0
    %3900 = vmatpush1.msra.mxu0 0.0
    %3901 = vmatprep.subr.mxu0 0.0
    %3902 = vmatpush1.msra.mxu0 0.0
    %3903 = vmatprep.subr.mxu0 0.0
    %3904 = vmatpush1.msra.mxu0 0.0
    %3905 = vmatprep.subr.mxu0 0.0
    %3906 = vmatpush1.msra.mxu0 %v2972
    %3907 = vmatprep.subr.mxu0 0.0
    %3908 = vmatpush1.msra.mxu0 %v2969
    %3909 = vmatprep.subr.mxu0 0.0
    %3910 = vmatpush1.msra.mxu0 %v2966
    %3911 = vmatprep.subr.mxu0 0.0
    %3912 = vmatpush1.msra.mxu0 %v2963
    %3913 = vmatprep.subr.mxu0 0.0
    %3914 = vmatpush2.msra.mxu0 0.0
    %3915 = vmatprep.subr.mxu0 0.0
    %3916 = vmatpush2.msra.mxu0 0.0
    %3917 = vmatprep.subr.mxu0 0.0
    %3918 = vmatpush2.msra.mxu0 0.0
    %3919 = vmatprep.subr.mxu0 0.0
    %3920 = vmatpush2.msra.mxu0 0.0
    %3921 = vmatprep.subr.mxu0 0.0
    %3922 = vmatpush2.msra.mxu0 0.0
    %3923 = vmatprep.subr.mxu0 0.0
    %3924 = vmatpush2.msra.mxu0 0.0
    %3925 = vmatprep.subr.mxu0 0.0
    %3926 = vmatpush2.msra.mxu0 0.0
    %3927 = vmatprep.subr.mxu0 0.0
    %3928 = vmatpush2.msra.mxu0 0.0
    %3929 = vmatprep.subr.mxu0 0.0
    %3930 = vmatpush2.msra.mxu0 0.0
    %3931 = vmatprep.subr.mxu0 0.0
    %3932 = vmatpush2.msra.mxu0 0.0
    %3933 = vmatprep.subr.mxu0 0.0
    %3934 = vmatpush2.msra.mxu0 0.0
    %3935 = vmatprep.subr.mxu0 0.0
    %3936 = vmatpush2.msra.mxu0 0.0
    %3937 = vmatprep.subr.mxu0 0.0
    %3938 = vmatpush2.msra.mxu0 0.0
    %3939 = vmatprep.subr.mxu0 0.0
    %3940 = vmatpush2.msra.mxu0 0.0
    %3941 = vmatprep.subr.mxu0 0.0
    %3942 = vmatpush2.msra.mxu0 0.0
    %3943 = vmatprep.subr.mxu0 0.0
    %3944 = vmatpush2.msra.mxu0 0.0
    %3945 = vmatprep.mubr.f32.mxu0 0.0
    %3946 = vmatmul.mubr.f32.gmra.mxu0 %v3808
    %v3947 = vpop.f32.mrf.mxu0
    %v3948 = vadd.f32 0.0, %v3947
    %v3949 = vpop.f32.mrf.mxu0
    %3950 = vdwg.mxu0
    %v3951 = vadd.f32 %v3657, %v3733
    %v3952 = vxor.u32 %v3951, 2147483648
    %v3953 = vmul.f32 %v3952, 1.442695
    %v3954 = vpow.pop %v3953
    %v3955 = vadd.f32 %v3954, 1.0
    %v3956 = vrcp.pop %v3955
    %v3957 = vmul.f32 1.0, %v3956
    %v3958 = vadd.f32 %v3658, %v3735
    %v3959 = vxor.u32 %v3958, 2147483648
    %v3960 = vmul.f32 %v3959, 1.442695
    %v3961 = vpow.pop %v3960
    %v3962 = vadd.f32 %v3961, 1.0
    %v3963 = vrcp.pop %v3962
    %v3964 = vmul.f32 1.0, %v3963
    %v3965 = vadd.f32 %v3804, %v2978
    %v3966 = vmul.f32 %v3957, %v3965
    %v3967 = vadd.f32 %v3659, %v3966
    %v3968 = vtanh.pop %v3967
    %v3969 = vsub.f32 1.0, %v3964
    %v3970 = vmul.f32 %v3969, %v3968
    %v3971 = vmul.f32 %v3964, %v3634
    %v3972 = vadd.f32 %v3970, %v3971
    %v3973 = vadd.f32 %v3660, %v3877
    %v3974 = vxor.u32 %v3973, 2147483648
    %v3975 = vmul.f32 %v3974, 1.442695
    %v3976 = vpow.pop %v3975
    %v3977 = vadd.f32 %v3976, 1.0
    %v3978 = vrcp.pop %v3977
    %v3979 = vmul.f32 1.0, %v3978
    %v3980 = vadd.f32 %v3661, %v3879
    %v3981 = vxor.u32 %v3980, 2147483648
    %v3982 = vmul.f32 %v3981, 1.442695
    %v3983 = vpow.pop %v3982
    %v3984 = vadd.f32 %v3983, 1.0
    %v3985 = vrcp.pop %v3984
    %v3986 = vmul.f32 1.0, %v3985
    %v3987 = vadd.f32 %v3948, %v2985
    %v3988 = vmul.f32 %v3979, %v3987
    %v3989 = vadd.f32 %v3662, %v3988
    %v3990 = vtanh.pop %v3989
    %v3991 = vsub.f32 1.0, %v3986
    %v3992 = vmul.f32 %v3991, %v3990
    %v3993 = vmul.f32 %v3986, %v3656
    %v3994 = vadd.f32 %v3992, %v3993
    %v3995 = vld [vmem:[#allocation2 + $0x90] sm:$0x3]
    %v3996 = vld [vmem:[#allocation2 + $0x98] sm:$0x3]
    %v3997 = vld [vmem:[#allocation2 + $0xa0] sm:$0x3]
    %v3998 = vld [vmem:[#allocation2 + $0x18] sm:$0x3]
    %v3999 = vld [vmem:[#allocation2 + $0x20] sm:$0x3]
    %v4000 = vld [vmem:[#allocation2 + $0x28] sm:$0x3]
    %v4002 = vsel %vm686, %v3972, 0
    %4004 = vmatprep.subr.mxu0 0.0
    %4005 = vmatpush1.msra.mxu0 0.0
    %4006 = vmatprep.subr.mxu0 0.0
    %4007 = vmatpush1.msra.mxu0 0.0
    %4008 = vmatprep.subr.mxu0 0.0
    %4009 = vmatpush1.msra.mxu0 0.0
    %4010 = vmatprep.subr.mxu0 0.0
    %4011 = vmatpush1.msra.mxu0 0.0
    %4012 = vmatprep.subr.mxu0 0.0
    %4013 = vmatpush1.msra.mxu0 0.0
    %4014 = vmatprep.subr.mxu0 0.0
    %4015 = vmatpush1.msra.mxu0 0.0
    %4016 = vmatprep.subr.mxu0 0.0
    %4017 = vmatpush1.msra.mxu0 0.0
    %4018 = vmatprep.subr.mxu0 0.0
    %4019 = vmatpush1.msra.mxu0 0.0
    %4020 = vmatprep.subr.mxu0 0.0
    %4021 = vmatpush1.msra.mxu0 0.0
    %4022 = vmatprep.subr.mxu0 0.0
    %4023 = vmatpush1.msra.mxu0 0.0
    %4024 = vmatprep.subr.mxu0 0.0
    %4025 = vmatpush1.msra.mxu0 0.0
    %4026 = vmatprep.subr.mxu0 0.0
    %4027 = vmatpush1.msra.mxu0 0.0
    %4028 = vmatprep.subr.mxu0 %v2959
    %4029 = vmatpush1.msra.mxu0 %v2958
    %4030 = vmatprep.subr.mxu0 %v2956
    %4031 = vmatpush1.msra.mxu0 %v2955
    %4032 = vmatprep.subr.mxu0 %v2953
    %4033 = vmatpush1.msra.mxu0 %v2952
    %4034 = vmatprep.subr.mxu0 %v2950
    %4035 = vmatpush1.msra.mxu0 %v2949
    %4036 = vmatprep.subr.mxu0 0.0
    %4037 = vmatpush2.msra.mxu0 0.0
    %4038 = vmatprep.subr.mxu0 0.0
    %4039 = vmatpush2.msra.mxu0 0.0
    %4040 = vmatprep.subr.mxu0 0.0
    %4041 = vmatpush2.msra.mxu0 0.0
    %4042 = vmatprep.subr.mxu0 0.0
    %4043 = vmatpush2.msra.mxu0 0.0
    %4044 = vmatprep.subr.mxu0 0.0
    %4045 = vmatpush2.msra.mxu0 0.0
    %4046 = vmatprep.subr.mxu0 0.0
    %4047 = vmatpush2.msra.mxu0 0.0
    %4048 = vmatprep.subr.mxu0 0.0
    %4049 = vmatpush2.msra.mxu0 0.0
    %4050 = vmatprep.subr.mxu0 0.0
    %4051 = vmatpush2.msra.mxu0 0.0
    %4052 = vmatprep.subr.mxu0 0.0
    %4053 = vmatpush2.msra.mxu0 0.0
    %4054 = vmatprep.subr.mxu0 0.0
    %4055 = vmatpush2.msra.mxu0 0.0
    %4056 = vmatprep.subr.mxu0 0.0
    %4057 = vmatpush2.msra.mxu0 0.0
    %4058 = vmatprep.subr.mxu0 0.0
    %4059 = vmatpush2.msra.mxu0 0.0
    %4060 = vmatprep.subr.mxu0 0.0
    %4061 = vmatpush2.msra.mxu0 0.0
    %4062 = vmatprep.subr.mxu0 0.0
    %4063 = vmatpush2.msra.mxu0 0.0
    %4064 = vmatprep.subr.mxu0 0.0
    %4065 = vmatpush2.msra.mxu0 0.0
    %4066 = vmatprep.subr.mxu0 0.0
    %4067 = vmatpush2.msra.mxu0 0.0
    %4068 = vmatprep.mubr.f32.mxu0 0.0
    %4069 = vmatmul.mubr.f32.gmra.mxu0 %v4002
    %v4070 = vpop.f32.mrf.mxu0
    %v4071 = vadd.f32 0.0, %v4070
    %v4072 = vpop.f32.mrf.mxu0
    %v4073 = vadd.f32 0.0, %v4072
    %4074 = vdwg.mxu0
    %4075 = vmatprep.subr.mxu0 0.0
    %4076 = vmatpush1.msra.mxu0 0.0
    %4077 = vmatprep.subr.mxu0 0.0
    %4078 = vmatpush1.msra.mxu0 0.0
    %4079 = vmatprep.subr.mxu0 0.0
    %4080 = vmatpush1.msra.mxu0 0.0
    %4081 = vmatprep.subr.mxu0 0.0
    %4082 = vmatpush1.msra.mxu0 0.0
    %4083 = vmatprep.subr.mxu0 0.0
    %4084 = vmatpush1.msra.mxu0 0.0
    %4085 = vmatprep.subr.mxu0 0.0
    %4086 = vmatpush1.msra.mxu0 0.0
    %4087 = vmatprep.subr.mxu0 0.0
    %4088 = vmatpush1.msra.mxu0 0.0
    %4089 = vmatprep.subr.mxu0 0.0
    %4090 = vmatpush1.msra.mxu0 0.0
    %4091 = vmatprep.subr.mxu0 0.0
    %4092 = vmatpush1.msra.mxu0 0.0
    %4093 = vmatprep.subr.mxu0 0.0
    %4094 = vmatpush1.msra.mxu0 0.0
    %4095 = vmatprep.subr.mxu0 0.0
    %4096 = vmatpush1.msra.mxu0 0.0
    %4097 = vmatprep.subr.mxu0 0.0
    %4098 = vmatpush1.msra.mxu0 0.0
    %4099 = vmatprep.subr.mxu0 0.0
    %4100 = vmatpush1.msra.mxu0 %v2960
    %4101 = vmatprep.subr.mxu0 0.0
    %4102 = vmatpush1.msra.mxu0 %v2957
    %4103 = vmatprep.subr.mxu0 0.0
    %4104 = vmatpush1.msra.mxu0 %v2954
    %4105 = vmatprep.subr.mxu0 0.0
    %4106 = vmatpush1.msra.mxu0 %v2951
    %4107 = vmatprep.subr.mxu0 0.0
    %4108 = vmatpush2.msra.mxu0 0.0
    %4109 = vmatprep.subr.mxu0 0.0
    %4110 = vmatpush2.msra.mxu0 0.0
    %4111 = vmatprep.subr.mxu0 0.0
    %4112 = vmatpush2.msra.mxu0 0.0
    %4113 = vmatprep.subr.mxu0 0.0
    %4114 = vmatpush2.msra.mxu0 0.0
    %4115 = vmatprep.subr.mxu0 0.0
    %4116 = vmatpush2.msra.mxu0 0.0
    %4117 = vmatprep.subr.mxu0 0.0
    %4118 = vmatpush2.msra.mxu0 0.0
    %4119 = vmatprep.subr.mxu0 0.0
    %4120 = vmatpush2.msra.mxu0 0.0
    %4121 = vmatprep.subr.mxu0 0.0
    %4122 = vmatpush2.msra.mxu0 0.0
    %4123 = vmatprep.subr.mxu0 0.0
    %4124 = vmatpush2.msra.mxu0 0.0
    %4125 = vmatprep.subr.mxu0 0.0
    %4126 = vmatpush2.msra.mxu0 0.0
    %4127 = vmatprep.subr.mxu0 0.0
    %4128 = vmatpush2.msra.mxu0 0.0
    %4129 = vmatprep.subr.mxu0 0.0
    %4130 = vmatpush2.msra.mxu0 0.0
    %4131 = vmatprep.subr.mxu0 0.0
    %4132 = vmatpush2.msra.mxu0 0.0
    %4133 = vmatprep.subr.mxu0 0.0
    %4134 = vmatpush2.msra.mxu0 0.0
    %4135 = vmatprep.subr.mxu0 0.0
    %4136 = vmatpush2.msra.mxu0 0.0
    %4137 = vmatprep.subr.mxu0 0.0
    %4138 = vmatpush2.msra.mxu0 0.0
    %4139 = vmatprep.mubr.f32.mxu0 0.0
    %4140 = vmatmul.mubr.f32.gmra.mxu0 %v4002
    %v4141 = vpop.f32.mrf.mxu0
    %v4142 = vadd.f32 0.0, %v4141
    %v4143 = vpop.f32.mrf.mxu0
    %4144 = vdwg.mxu0
    %v4146 = vsel %vm686, %v3994, 0
    %4148 = vmatprep.subr.mxu0 0.0
    %4149 = vmatpush1.msra.mxu0 0.0
    %4150 = vmatprep.subr.mxu0 0.0
    %4151 = vmatpush1.msra.mxu0 0.0
    %4152 = vmatprep.subr.mxu0 0.0
    %4153 = vmatpush1.msra.mxu0 0.0
    %4154 = vmatprep.subr.mxu0 0.0
    %4155 = vmatpush1.msra.mxu0 0.0
    %4156 = vmatprep.subr.mxu0 0.0
    %4157 = vmatpush1.msra.mxu0 0.0
    %4158 = vmatprep.subr.mxu0 0.0
    %4159 = vmatpush1.msra.mxu0 0.0
    %4160 = vmatprep.subr.mxu0 0.0
    %4161 = vmatpush1.msra.mxu0 0.0
    %4162 = vmatprep.subr.mxu0 0.0
    %4163 = vmatpush1.msra.mxu0 0.0
    %4164 = vmatprep.subr.mxu0 0.0
    %4165 = vmatpush1.msra.mxu0 0.0
    %4166 = vmatprep.subr.mxu0 0.0
    %4167 = vmatpush1.msra.mxu0 0.0
    %4168 = vmatprep.subr.mxu0 0.0
    %4169 = vmatpush1.msra.mxu0 0.0
    %4170 = vmatprep.subr.mxu0 0.0
    %4171 = vmatpush1.msra.mxu0 0.0
    %4172 = vmatprep.subr.mxu0 %v2971
    %4173 = vmatpush1.msra.mxu0 %v2970
    %4174 = vmatprep.subr.mxu0 %v2968
    %4175 = vmatpush1.msra.mxu0 %v2967
    %4176 = vmatprep.subr.mxu0 %v2965
    %4177 = vmatpush1.msra.mxu0 %v2964
    %4178 = vmatprep.subr.mxu0 %v2962
    %4179 = vmatpush1.msra.mxu0 %v2961
    %4180 = vmatprep.subr.mxu0 0.0
    %4181 = vmatpush2.msra.mxu0 0.0
    %4182 = vmatprep.subr.mxu0 0.0
    %4183 = vmatpush2.msra.mxu0 0.0
    %4184 = vmatprep.subr.mxu0 0.0
    %4185 = vmatpush2.msra.mxu0 0.0
    %4186 = vmatprep.subr.mxu0 0.0
    %4187 = vmatpush2.msra.mxu0 0.0
    %4188 = vmatprep.subr.mxu0 0.0
    %4189 = vmatpush2.msra.mxu0 0.0
    %4190 = vmatprep.subr.mxu0 0.0
    %4191 = vmatpush2.msra.mxu0 0.0
    %4192 = vmatprep.subr.mxu0 0.0
    %4193 = vmatpush2.msra.mxu0 0.0
    %4194 = vmatprep.subr.mxu0 0.0
    %4195 = vmatpush2.msra.mxu0 0.0
    %4196 = vmatprep.subr.mxu0 0.0
    %4197 = vmatpush2.msra.mxu0 0.0
    %4198 = vmatprep.subr.mxu0 0.0
    %4199 = vmatpush2.msra.mxu0 0.0
    %4200 = vmatprep.subr.mxu0 0.0
    %4201 = vmatpush2.msra.mxu0 0.0
    %4202 = vmatprep.subr.mxu0 0.0
    %4203 = vmatpush2.msra.mxu0 0.0
    %4204 = vmatprep.subr.mxu0 0.0
    %4205 = vmatpush2.msra.mxu0 0.0
    %4206 = vmatprep.subr.mxu0 0.0
    %4207 = vmatpush2.msra.mxu0 0.0
    %4208 = vmatprep.subr.mxu0 0.0
    %4209 = vmatpush2.msra.mxu0 0.0
    %4210 = vmatprep.subr.mxu0 0.0
    %4211 = vmatpush2.msra.mxu0 0.0
    %4212 = vmatprep.mubr.f32.mxu0 0.0
    %4213 = vmatmul.mubr.f32.gmra.mxu0 %v4146
    %v4214 = vpop.f32.mrf.mxu0
    %v4215 = vadd.f32 0.0, %v4214
    %v4216 = vpop.f32.mrf.mxu0
    %v4217 = vadd.f32 0.0, %v4216
    %4218 = vdwg.mxu0
    %4219 = vmatprep.subr.mxu0 0.0
    %4220 = vmatpush1.msra.mxu0 0.0
    %4221 = vmatprep.subr.mxu0 0.0
    %4222 = vmatpush1.msra.mxu0 0.0
    %4223 = vmatprep.subr.mxu0 0.0
    %4224 = vmatpush1.msra.mxu0 0.0
    %4225 = vmatprep.subr.mxu0 0.0
    %4226 = vmatpush1.msra.mxu0 0.0
    %4227 = vmatprep.subr.mxu0 0.0
    %4228 = vmatpush1.msra.mxu0 0.0
    %4229 = vmatprep.subr.mxu0 0.0
    %4230 = vmatpush1.msra.mxu0 0.0
    %4231 = vmatprep.subr.mxu0 0.0
    %4232 = vmatpush1.msra.mxu0 0.0
    %4233 = vmatprep.subr.mxu0 0.0
    %4234 = vmatpush1.msra.mxu0 0.0
    %4235 = vmatprep.subr.mxu0 0.0
    %4236 = vmatpush1.msra.mxu0 0.0
    %4237 = vmatprep.subr.mxu0 0.0
    %4238 = vmatpush1.msra.mxu0 0.0
    %4239 = vmatprep.subr.mxu0 0.0
    %4240 = vmatpush1.msra.mxu0 0.0
    %4241 = vmatprep.subr.mxu0 0.0
    %4242 = vmatpush1.msra.mxu0 0.0
    %4243 = vmatprep.subr.mxu0 0.0
    %4244 = vmatpush1.msra.mxu0 %v2972
    %4245 = vmatprep.subr.mxu0 0.0
    %4246 = vmatpush1.msra.mxu0 %v2969
    %4247 = vmatprep.subr.mxu0 0.0
    %4248 = vmatpush1.msra.mxu0 %v2966
    %4249 = vmatprep.subr.mxu0 0.0
    %4250 = vmatpush1.msra.mxu0 %v2963
    %4251 = vmatprep.subr.mxu0 0.0
    %4252 = vmatpush2.msra.mxu0 0.0
    %4253 = vmatprep.subr.mxu0 0.0
    %4254 = vmatpush2.msra.mxu0 0.0
    %4255 = vmatprep.subr.mxu0 0.0
    %4256 = vmatpush2.msra.mxu0 0.0
    %4257 = vmatprep.subr.mxu0 0.0
    %4258 = vmatpush2.msra.mxu0 0.0
    %4259 = vmatprep.subr.mxu0 0.0
    %4260 = vmatpush2.msra.mxu0 0.0
    %4261 = vmatprep.subr.mxu0 0.0
    %4262 = vmatpush2.msra.mxu0 0.0
    %4263 = vmatprep.subr.mxu0 0.0
    %4264 = vmatpush2.msra.mxu0 0.0
    %4265 = vmatprep.subr.mxu0 0.0
    %4266 = vmatpush2.msra.mxu0 0.0
    %4267 = vmatprep.subr.mxu0 0.0
    %4268 = vmatpush2.msra.mxu0 0.0
    %4269 = vmatprep.subr.mxu0 0.0
    %4270 = vmatpush2.msra.mxu0 0.0
    %4271 = vmatprep.subr.mxu0 0.0
    %4272 = vmatpush2.msra.mxu0 0.0
    %4273 = vmatprep.subr.mxu0 0.0
    %4274 = vmatpush2.msra.mxu0 0.0
    %4275 = vmatprep.subr.mxu0 0.0
    %4276 = vmatpush2.msra.mxu0 0.0
    %4277 = vmatprep.subr.mxu0 0.0
    %4278 = vmatpush2.msra.mxu0 0.0
    %4279 = vmatprep.subr.mxu0 0.0
    %4280 = vmatpush2.msra.mxu0 0.0
    %4281 = vmatprep.subr.mxu0 0.0
    %4282 = vmatpush2.msra.mxu0 0.0
    %4283 = vmatprep.mubr.f32.mxu0 0.0
    %4284 = vmatmul.mubr.f32.gmra.mxu0 %v4146
    %v4285 = vpop.f32.mrf.mxu0
    %v4286 = vadd.f32 0.0, %v4285
    %v4287 = vpop.f32.mrf.mxu0
    %4288 = vdwg.mxu0
    %v4289 = vadd.f32 %v3995, %v4071
    %v4290 = vxor.u32 %v4289, 2147483648
    %v4291 = vmul.f32 %v4290, 1.442695
    %v4292 = vpow.pop %v4291
    %v4293 = vadd.f32 %v4292, 1.0
    %v4294 = vrcp.pop %v4293
    %v4295 = vmul.f32 1.0, %v4294
    %v4296 = vadd.f32 %v3996, %v4073
    %v4297 = vxor.u32 %v4296, 2147483648
    %v4298 = vmul.f32 %v4297, 1.442695
    %v4299 = vpow.pop %v4298
    %v4300 = vadd.f32 %v4299, 1.0
    %v4301 = vrcp.pop %v4300
    %v4302 = vmul.f32 1.0, %v4301
    %v4303 = vadd.f32 %v4142, %v2978
    %v4304 = vmul.f32 %v4295, %v4303
    %v4305 = vadd.f32 %v3997, %v4304
    %v4306 = vtanh.pop %v4305
    %v4307 = vsub.f32 1.0, %v4302
    %v4308 = vmul.f32 %v4307, %v4306
    %v4309 = vmul.f32 %v4302, %v3972
    %v4310 = vadd.f32 %v4308, %v4309
    %v4311 = vadd.f32 %v3998, %v4215
    %v4312 = vxor.u32 %v4311, 2147483648
    %v4313 = vmul.f32 %v4312, 1.442695
    %v4314 = vpow.pop %v4313
    %v4315 = vadd.f32 %v4314, 1.0
    %v4316 = vrcp.pop %v4315
    %v4317 = vmul.f32 1.0, %v4316
    %v4318 = vadd.f32 %v3999, %v4217
    %v4319 = vxor.u32 %v4318, 2147483648
    %v4320 = vmul.f32 %v4319, 1.442695
    %v4321 = vpow.pop %v4320
    %v4322 = vadd.f32 %v4321, 1.0
    %v4323 = vrcp.pop %v4322
    %v4324 = vmul.f32 1.0, %v4323
    %v4325 = vadd.f32 %v4286, %v2985
    %v4326 = vmul.f32 %v4317, %v4325
    %v4327 = vadd.f32 %v4000, %v4326
    %v4328 = vtanh.pop %v4327
    %v4329 = vsub.f32 1.0, %v4324
    %v4330 = vmul.f32 %v4329, %v4328
    %v4331 = vmul.f32 %v4324, %v3994
    %v4332 = vadd.f32 %v4330, %v4331
    %v4333 = vld [vmem:[%s17] sm:$0xff]
    %v4334 = vld [vmem:[%s17 + $0x8] sm:$0xff]
    %v4335 = vld [vmem:[%s17 + $0x10] sm:$0xff]
    %v4336 = vld [vmem:[%s17 + $0x18] sm:$0xff]
    %v4337 = vld [vmem:[%s18] sm:$0xff]
    %v4338 = vld [vmem:[%s18 + $0x8] sm:$0xff]
    %v4339 = vld [vmem:[%s18 + $0x10] sm:$0xff]
    %v4340 = vld [vmem:[%s18 + $0x18] sm:$0xff]
    %v4342 = vsel %vm686, %v4332, 0
    %4344 = vmatprep.subr.mxu0 0.0
    %4345 = vmatpush1.msra.mxu0 0.0
    %4346 = vmatprep.subr.mxu0 0.0
    %4347 = vmatpush1.msra.mxu0 0.0
    %4348 = vmatprep.subr.mxu0 0.0
    %4349 = vmatpush1.msra.mxu0 0.0
    %4350 = vmatprep.subr.mxu0 0.0
    %4351 = vmatpush1.msra.mxu0 0.0
    %4352 = vmatprep.subr.mxu0 0.0
    %4353 = vmatpush1.msra.mxu0 0.0
    %4354 = vmatprep.subr.mxu0 0.0
    %4355 = vmatpush1.msra.mxu0 0.0
    %4356 = vmatprep.subr.mxu0 0.0
    %4357 = vmatpush1.msra.mxu0 0.0
    %4358 = vmatprep.subr.mxu0 0.0
    %4359 = vmatpush1.msra.mxu0 0.0
    %4360 = vmatprep.subr.mxu0 0.0
    %4361 = vmatpush1.msra.mxu0 0.0
    %4362 = vmatprep.subr.mxu0 0.0
    %4363 = vmatpush1.msra.mxu0 0.0
    %4364 = vmatprep.subr.mxu0 0.0
    %4365 = vmatpush1.msra.mxu0 0.0
    %4366 = vmatprep.subr.mxu0 0.0
    %4367 = vmatpush1.msra.mxu0 0.0
    %4368 = vmatprep.subr.mxu0 0.0
    %4369 = vmatpush1.msra.mxu0 %v4340
    %4370 = vmatprep.subr.mxu0 0.0
    %4371 = vmatpush1.msra.mxu0 %v4339
    %4372 = vmatprep.subr.mxu0 0.0
    %4373 = vmatpush1.msra.mxu0 %v4338
    %4374 = vmatprep.subr.mxu0 0.0
    %4375 = vmatpush1.msra.mxu0 %v4337
    %4376 = vmatprep.subr.mxu0 0.0
    %4377 = vmatpush2.msra.mxu0 0.0
    %4378 = vmatprep.subr.mxu0 0.0
    %4379 = vmatpush2.msra.mxu0 0.0
    %4380 = vmatprep.subr.mxu0 0.0
    %4381 = vmatpush2.msra.mxu0 0.0
    %4382 = vmatprep.subr.mxu0 0.0
    %4383 = vmatpush2.msra.mxu0 0.0
    %4384 = vmatprep.subr.mxu0 0.0
    %4385 = vmatpush2.msra.mxu0 0.0
    %4386 = vmatprep.subr.mxu0 0.0
    %4387 = vmatpush2.msra.mxu0 0.0
    %4388 = vmatprep.subr.mxu0 0.0
    %4389 = vmatpush2.msra.mxu0 0.0
    %4390 = vmatprep.subr.mxu0 0.0
    %4391 = vmatpush2.msra.mxu0 0.0
    %4392 = vmatprep.subr.mxu0 0.0
    %4393 = vmatpush2.msra.mxu0 0.0
    %4394 = vmatprep.subr.mxu0 0.0
    %4395 = vmatpush2.msra.mxu0 0.0
    %4396 = vmatprep.subr.mxu0 0.0
    %4397 = vmatpush2.msra.mxu0 0.0
    %4398 = vmatprep.subr.mxu0 0.0
    %4399 = vmatpush2.msra.mxu0 0.0
    %4400 = vmatprep.subr.mxu0 0.0
    %4401 = vmatpush2.msra.mxu0 0.0
    %4402 = vmatprep.subr.mxu0 0.0
    %4403 = vmatpush2.msra.mxu0 0.0
    %4404 = vmatprep.subr.mxu0 0.0
    %4405 = vmatpush2.msra.mxu0 0.0
    %4406 = vmatprep.subr.mxu0 0.0
    %4407 = vmatpush2.msra.mxu0 0.0
    %4408 = vmatprep.mubr.f32.mxu0 0.0
    %4409 = vmatmul.mubr.f32.gmra.mxu0 %v4342
    %v4410 = vpop.f32.mrf.mxu0
    %v4411 = vadd.f32 0.0, %v4410
    %v4412 = vpop.f32.mrf.mxu0
    %4413 = vdwg.mxu0
    %v4415 = vsel %vm686, %v4310, 0
    %4417 = vmatprep.subr.mxu0 0.0
    %4418 = vmatpush1.msra.mxu0 0.0
    %4419 = vmatprep.subr.mxu0 0.0
    %4420 = vmatpush1.msra.mxu0 0.0
    %4421 = vmatprep.subr.mxu0 0.0
    %4422 = vmatpush1.msra.mxu0 0.0
    %4423 = vmatprep.subr.mxu0 0.0
    %4424 = vmatpush1.msra.mxu0 0.0
    %4425 = vmatprep.subr.mxu0 0.0
    %4426 = vmatpush1.msra.mxu0 0.0
    %4427 = vmatprep.subr.mxu0 0.0
    %4428 = vmatpush1.msra.mxu0 0.0
    %4429 = vmatprep.subr.mxu0 0.0
    %4430 = vmatpush1.msra.mxu0 0.0
    %4431 = vmatprep.subr.mxu0 0.0
    %4432 = vmatpush1.msra.mxu0 0.0
    %4433 = vmatprep.subr.mxu0 0.0
    %4434 = vmatpush1.msra.mxu0 0.0
    %4435 = vmatprep.subr.mxu0 0.0
    %4436 = vmatpush1.msra.mxu0 0.0
    %4437 = vmatprep.subr.mxu0 0.0
    %4438 = vmatpush1.msra.mxu0 0.0
    %4439 = vmatprep.subr.mxu0 0.0
    %4440 = vmatpush1.msra.mxu0 0.0
    %4441 = vmatprep.subr.mxu0 0.0
    %4442 = vmatpush1.msra.mxu0 %v4336
    %4443 = vmatprep.subr.mxu0 0.0
    %4444 = vmatpush1.msra.mxu0 %v4335
    %4445 = vmatprep.subr.mxu0 0.0
    %4446 = vmatpush1.msra.mxu0 %v4334
    %4447 = vmatprep.subr.mxu0 0.0
    %4448 = vmatpush1.msra.mxu0 %v4333
    %4449 = vmatprep.subr.mxu0 0.0
    %4450 = vmatpush2.msra.mxu0 0.0
    %4451 = vmatprep.subr.mxu0 0.0
    %4452 = vmatpush2.msra.mxu0 0.0
    %4453 = vmatprep.subr.mxu0 0.0
    %4454 = vmatpush2.msra.mxu0 0.0
    %4455 = vmatprep.subr.mxu0 0.0
    %4456 = vmatpush2.msra.mxu0 0.0
    %4457 = vmatprep.subr.mxu0 0.0
    %4458 = vmatpush2.msra.mxu0 0.0
    %4459 = vmatprep.subr.mxu0 0.0
    %4460 = vmatpush2.msra.mxu0 0.0
    %4461 = vmatprep.subr.mxu0 0.0
    %4462 = vmatpush2.msra.mxu0 0.0
    %4463 = vmatprep.subr.mxu0 0.0
    %4464 = vmatpush2.msra.mxu0 0.0
    %4465 = vmatprep.subr.mxu0 0.0
    %4466 = vmatpush2.msra.mxu0 0.0
    %4467 = vmatprep.subr.mxu0 0.0
    %4468 = vmatpush2.msra.mxu0 0.0
    %4469 = vmatprep.subr.mxu0 0.0
    %4470 = vmatpush2.msra.mxu0 0.0
    %4471 = vmatprep.subr.mxu0 0.0
    %4472 = vmatpush2.msra.mxu0 0.0
    %4473 = vmatprep.subr.mxu0 0.0
    %4474 = vmatpush2.msra.mxu0 0.0
    %4475 = vmatprep.subr.mxu0 0.0
    %4476 = vmatpush2.msra.mxu0 0.0
    %4477 = vmatprep.subr.mxu0 0.0
    %4478 = vmatpush2.msra.mxu0 0.0
    %4479 = vmatprep.subr.mxu0 0.0
    %4480 = vmatpush2.msra.mxu0 0.0
    %4481 = vmatprep.mubr.f32.mxu0 0.0
    %4482 = vmatmul.mubr.f32.gmra.mxu0 %v4415
    %v4483 = vpop.f32.mrf.mxu0
    %v4484 = vadd.f32 %v4411, %v4483
    %v4485 = vpop.f32.mrf.mxu0
    %4486 = vdwg.mxu0
    %v4487 = vld [vmem:[#allocation25] sm:$0x1]
    %v4489 = vlaneseq
    %v4490 = vshrl.u32 %v4489, 7
    %v4491 = vsub.s32 0, %v4490
    %v4492 = vrot.slane %v4487, %v4491
    %v4494 = vadd.f32 %v4484, %v4492
    %vm4495 = vcmask 17408
    %4496 = vst.msk [vmem:[#allocation26] sm:$0x3] %vm4495, %v4494
    // Predicated region
    $region134: #{torch_rnn_model_forward.1} parent=1 // pred_check
      _
    $region135: #{torch_rnn_model_forward.1} parent=1 // pred_check_branch
      %4498 = sbr.rel (0) target = $region137
    $region136: #{torch_rnn_model_forward.1} parent=1 // pred_region
      %s4500 = ssub.s32 32, 32
      %4501 = vsyncadd [#allocation7], %s4500
      %s4503 = sshll.u32 [#allocation26], 4
      %s4504 = int_to_ptr.vmem [resolvable:$true] %s4503
      %4506 = dma.vmem_to_hbm [thread:$0]  %s4504, 32, %s20, [#allocation7]
    $region137: #{torch_rnn_model_forward.1} parent=1 // pred_fallthru
      _
    // Predicated region
    $region138: #{torch_rnn_model_forward.1} parent=1 // pred_check
      _
    $region139: #{torch_rnn_model_forward.1} parent=1 // pred_check_branch
      %4508 = sbr.rel (0) target = $region141
    $region140: #{torch_rnn_model_forward.1} parent=1 // pred_region
      %4509 = dma.done [#allocation7], 32
    $region141: #{torch_rnn_model_forward.1} parent=1 // pred_fallthru
      _
    %4510 = vsyncpa [#allocation6], 1
    %4511 = vsyncpa [#allocation9], 1
    %4512 = vsyncpa [#allocation12], 1
    %4513 = vsyncpa [#allocation15], 1
    %4514 = vsyncpa [#allocation18], 1
    %4515 = vsyncpa [#allocation21], 1
    %4516 = vsyncpa [#allocation24], 1
    %4517 = vsyncpa [#allocation7], 1

</llo_original>
